<compile_context>
chip_gen: v7x
topology: tpu7x:2x2x1
jax: 0.10.0
libtpu: 0.0.40
codegen_flags: <defaults>
</compile_context>

<pallas_src>
import jax
import jax.numpy as jnp
from jax.experimental import pallas as pl
from jax.experimental.pallas import tpu as pltpu


# ---------------------------------------------------------------------------
# Pallas kernel: factored tri-plane sampling for one tile of TH h-values.
#   out[bc, t, w*Z + z] = xy[bc, t, w] + yz[bc, w*Z + z] + xz[bc, t, z]
# where each term is a bf16 MXU contraction against a precomputed,
# batch-invariant bilinear scatter matrix; the xy / xz terms are expanded to
# the lane-dense (W*Z) output layout via one-hot MXU matmuls.
# ---------------------------------------------------------------------------
def _make_sample_kernel(TH):
    def kernel(lxy_ref, lyz_ref, lxz_ref, wxy_ref, wyz_ref, wxz_ref,
               rw_ref, tz_ref, out_ref, yz_acc):
        # yz plane is h-invariant: compute once, keep resident in scratch.
        @pl.when(pl.program_id(0) == 0)
        def _():
            yz_acc[...] = jnp.dot(lyz_ref[...], wyz_ref[...],
                                  preferred_element_type=jnp.float32)

        yz = yz_acc[...]                        # (BC, W*Z) f32
        lxy = lxy_ref[...]                      # (BC, P)   bf16
        lxz = lxz_ref[...]                      # (BC, P)   bf16
        rw = rw_ref[...]                        # (W, W*Z)  f32 one-hot
        tz = tz_ref[...]                        # (Z, W*Z)  f32 one-hot

        for t in range(TH):                     # static unroll over h in tile
            xy_h = jnp.dot(lxy, wxy_ref[t],     # (BC, W)  f32
                           preferred_element_type=jnp.float32)
            xz_h = jnp.dot(lxz, wxz_ref[t],     # (BC, Z)  f32
                           preferred_element_type=jnp.float32)
            row = (yz
                   + jnp.dot(xy_h, rw, preferred_element_type=jnp.float32)
                   + jnp.dot(xz_h, tz, preferred_element_type=jnp.float32))
            out_ref[:, t, :] = row
    return kernel


def _pick_th(H):
    """h-tile size: keep the output block's sublane dim (8,128)-aligned."""
    return 8 if H % 8 == 0 else H


def sample_points_triplane_pallas(planes_bf16, wxy, wyz, wxz, rw, tz, volume):
    """planes_bf16: (3, B*C, P) bf16; wxy: (H,P,W), wyz: (P,W*Z), wxz: (H,P,Z)
    bf16; rw: (W,W*Z), tz: (Z,W*Z) f32  ->  (B*C, H, W*Z) f32."""
    H, W, Z = volume
    _, BC, P = planes_bf16.shape
    WZ = W * Z
    TH = _pick_th(H)
    grid = (H // TH,)

    lhs_xy, lhs_yz, lhs_xz = planes_bf16[0], planes_bf16[1], planes_bf16[2]

    cost = pl.CostEstimate(
        flops=2 * BC * P * (H * W + WZ + H * Z) + 2 * BC * H * (W + Z) * WZ,
        transcendentals=0,
        bytes_accessed=(2 * (3 * BC * P + H * P * W + P * WZ + H * P * Z)
                        + 4 * (W + Z) * WZ + 4 * BC * H * WZ),
    )

    out = pl.pallas_call(
        _make_sample_kernel(TH),
        out_shape=jax.ShapeDtypeStruct((BC, H, WZ), jnp.float32),
        grid_spec=pltpu.PrefetchScalarGridSpec(
            num_scalar_prefetch=0,
            grid=grid,
            in_specs=[
                pl.BlockSpec((BC, P), lambda i: (0, 0)),        # xy plane (resident)
                pl.BlockSpec((BC, P), lambda i: (0, 0)),        # yz plane (resident)
                pl.BlockSpec((BC, P), lambda i: (0, 0)),        # xz plane (resident)
                pl.BlockSpec((TH, P, W), lambda i: (i, 0, 0)),  # xy scatter (streams over h)
                pl.BlockSpec((P, WZ), lambda i: (0, 0)),        # yz scatter (resident)
                pl.BlockSpec((TH, P, Z), lambda i: (i, 0, 0)),  # xz scatter (streams over h)
                pl.BlockSpec((W, WZ), lambda i: (0, 0)),        # w -> w*Z+z one-hot (resident)
                pl.BlockSpec((Z, WZ), lambda i: (0, 0)),        # z -> w*Z+z one-hot (resident)
            ],
            out_specs=pl.BlockSpec((BC, TH, WZ), lambda i: (0, i, 0)),
            scratch_shapes=[pltpu.VMEM((BC, WZ), jnp.float32)],
        ),
        compiler_params=pltpu.CompilerParams(
            dimension_semantics=("arbitrary",)),  # scratch reused across h tiles
        cost_estimate=cost,
    )(lhs_xy, lhs_yz, lhs_xz, wxy, wyz, wxz, rw, tz)
    return out


# ---------------------------------------------------------------------------
# Geometry setup (matches TriplaneElev.get_reference_points + the coordinate
# transforms in forward / sample_points_triplane).  Batch-invariant; built
# once per geometry outside the kernel.
# ---------------------------------------------------------------------------
def make_reference_points(volume):
    H, W, Z = volume
    zs = jnp.linspace(0.5, Z - 0.5, Z, dtype=jnp.float32)
    xs = jnp.linspace(0.5, W - 0.5, W, dtype=jnp.float32)
    ys = jnp.linspace(0.5, H - 0.5, H, dtype=jnp.float32)
    zz = jnp.broadcast_to(zs[None, None, :], (H, W, Z))
    xx = jnp.broadcast_to(xs[None, :, None], (H, W, Z))
    yy = jnp.broadcast_to(ys[:, None, None], (H, W, Z))
    return jnp.stack((yy, xx, zz), axis=-1)            # (H, W, Z, 3)


def _axis_norm_coord(n, axis, voxel_size, pc_range, triplane_range, Wp):
    """Normalized grid_sample coordinate along one voxel axis (length n)."""
    ref = jnp.linspace(0.5, n - 0.5, n, dtype=jnp.float32)
    pts = ref * voxel_size[axis] + pc_range[axis]
    vc = (pts - triplane_range[axis]) / voxel_size[axis]
    # The torch module divides every coordinate by triplane.shape[-1] / 2.
    return vc / (Wp / 2.0) - 1.0


def _bilinear_corners(gx, gy, Hp, Wp):
    """F.grid_sample semantics: bilinear, zeros padding, align_corners=False."""
    ix = ((gx + 1.0) * Wp - 1.0) / 2.0
    iy = ((gy + 1.0) * Hp - 1.0) / 2.0
    x0 = jnp.floor(ix)
    y0 = jnp.floor(iy)
    idxs, ws = [], []
    for dy in (0, 1):
        for dx in (0, 1):
            xc = x0 + dx
            yc = y0 + dy
            w = (1.0 - jnp.abs(ix - xc)) * (1.0 - jnp.abs(iy - yc))
            valid = (xc >= 0) & (xc <= Wp - 1) & (yc >= 0) & (yc <= Hp - 1)
            w = jnp.where(valid, w, 0.0).astype(jnp.float32)
            xi = jnp.clip(xc, 0, Wp - 1).astype(jnp.int32)
            yi = jnp.clip(yc, 0, Hp - 1).astype(jnp.int32)
            idxs.append(yi * Wp + xi)
            ws.append(w)
    return jnp.stack(idxs), jnp.stack(ws)              # (4, Npts), (4, Npts)


def _plane_scatter(gx, gy, Hp, Wp):
    """Bilinear scatter matrix M (P, Npts): M[p, n] = weight of pixel p for
    sample point n.  Out-of-bounds corners carry weight 0 (zeros padding), so
    clipped duplicate indices contribute nothing."""
    idxs, ws = _bilinear_corners(gx, gy, Hp, Wp)
    npts = gx.shape[0]
    n_idx = jnp.broadcast_to(jnp.arange(npts)[None, :], idxs.shape)
    M = jnp.zeros((Hp * Wp, npts), jnp.float32)
    return M.at[idxs, n_idx].add(ws)


def build_factored_tables(volume, voxel_size, pc_range, triplane_range, Hp, Wp):
    """Per-plane scatter matrices over each plane's DISTINCT sample points:
    xy -> (h, w), yz -> (w, z), xz -> (h, z)."""
    H, W, Z = volume
    c_h = _axis_norm_coord(H, 0, voxel_size, pc_range, triplane_range, Wp)
    c_w = _axis_norm_coord(W, 1, voxel_size, pc_range, triplane_range, Wp)
    c_z = _axis_norm_coord(Z, 2, voxel_size, pc_range, triplane_range, Wp)
    P = Hp * Wp

    # xy plane: grid (gx, gy) = (c_h[h], c_w[w]); columns ordered h-major.
    wxy = _plane_scatter(jnp.repeat(c_h, W), jnp.tile(c_w, H), Hp, Wp)
    wxy = wxy.reshape(P, H, W).transpose(1, 0, 2)            # (H, P, W)
    # yz plane: (gx, gy) = (c_w[w], c_z[z]); columns ordered w*Z + z
    # (matches the kernel's lane-dense output layout).
    wyz = _plane_scatter(jnp.repeat(c_w, Z), jnp.tile(c_z, W), Hp, Wp)  # (P, W*Z)
    # xz plane: (gx, gy) = (c_h[h], c_z[z]); columns ordered h-major.
    wxz = _plane_scatter(jnp.repeat(c_h, Z), jnp.tile(c_z, H), Hp, Wp)
    wxz = wxz.reshape(P, H, Z).transpose(1, 0, 2)            # (H, P, Z)

    return (wxy.astype(jnp.bfloat16), wyz.astype(jnp.bfloat16),
            wxz.astype(jnp.bfloat16))


def build_expand_mats(W, Z):
    """One-hot MXU expansion matrices mapping a value indexed by w (resp. z)
    to the lane-dense output column w*Z + z (exact in f32)."""
    wz = jnp.arange(W * Z)
    rw = (wz[None, :] // Z == jnp.arange(W)[:, None]).astype(jnp.float32)
    tz = (wz[None, :] % Z == jnp.arange(Z)[:, None]).astype(jnp.float32)
    return rw, tz


# ---------------------------------------------------------------------------
# Pure-JAX f32 reference (direct gather) for validating the kernel.
# ---------------------------------------------------------------------------
def build_full_vc(volume, voxel_size, pc_range, triplane_range, Wp):
    ref = make_reference_points(volume)                    # (H, W, Z, 3)
    vs = jnp.asarray(voxel_size, jnp.float32)
    pc = jnp.asarray(pc_range, jnp.float32)
    tr = jnp.asarray(triplane_range, jnp.float32)
    pts = ref * vs + pc
    vc = (pts - tr) / vs
    vc = vc / (Wp / 2.0) - 1.0
    return vc.reshape(-1, 3)                               # (N, 3)


def sample_points_triplane_ref(triplane, vc, Hp, Wp):
    def sample_plane(plane, gx, gy):                       # plane (B, C, Hp, Wp)
        ix = ((gx + 1.0) * Wp - 1.0) / 2.0
        iy = ((gy + 1.0) * Hp - 1.0) / 2.0
        x0 = jnp.floor(ix)
        y0 = jnp.floor(iy)
        out = 0.0
        for dy in (0, 1):
            for dx in (0, 1):
                xc = x0 + dx
                yc = y0 + dy
                w = (1.0 - jnp.abs(ix - xc)) * (1.0 - jnp.abs(iy - yc))
                valid = (xc >= 0) & (xc <= Wp - 1) & (yc >= 0) & (yc <= Hp - 1)
                w = jnp.where(valid, w, 0.0)
                xi = jnp.clip(xc, 0, Wp - 1).astype(jnp.int32)
                yi = jnp.clip(yc, 0, Hp - 1).astype(jnp.int32)
                out = out + plane[:, :, yi, xi] * w[None, None, :]
        return out

    c0, c1, c2 = vc[:, 0], vc[:, 1], vc[:, 2]
    xy = sample_plane(triplane[:, 0], c0, c1)
    yz = sample_plane(triplane[:, 1], c1, c2)
    xz = sample_plane(triplane[:, 2], c0, c2)
    return xy + yz + xz                                    # (B, C, N)


# ---------------------------------------------------------------------------
# Forward wrapper: neck-output triplane (NCHW) -> voxel features
# ---------------------------------------------------------------------------
def triplane_elev_forward(triplane_nchw, volume, voxel_size, pc_range,
                          triplane_range):
    B, C3, Hp, Wp = triplane_nchw.shape
    C = C3 // 3
    P = Hp * Wp
    H, W, Z = volume

    triplane = triplane_nchw.reshape(B, 3, C, Hp, Wp)
    # (B, 3, C, P) -> (3, B*C, P): rows = batch*channel, cols = flat pixels.
    planes = (triplane.reshape(B, 3, C, P).transpose(1, 0, 2, 3)
              .reshape(3, B * C, P).astype(jnp.bfloat16))

    wxy, wyz, wxz = build_factored_tables(volume, voxel_size, pc_range,
                                          triplane_range, Hp, Wp)
    rw, tz = build_expand_mats(W, Z)

    sampled = sample_points_triplane_pallas(planes, wxy, wyz, wxz, rw, tz,
                                            volume)        # (B*C, H, W*Z)
    voxel_feat = sampled.reshape(B, C, H, W, Z)
    return voxel_feat, triplane


if __name__ == "__main__":
    key = jax.random.PRNGKey(0)

    # Small deterministic config consistent with the module's forward.
    B, C = 2, 8
    Hp = Wp = 16                       # triplane spatial resolution (neck output)
    volume = (16, 16, 8)               # (H, W, Z) voxel grid
    voxel_size = (0.5, 0.5, 0.5)
    pc_range = (-4.0, -4.0, -2.0)
    triplane_range = (-4.0, -4.0, -2.0)

    # Synthetic neck output (would normally come from encoder+neck), NCHW.
    triplane_nchw = jax.random.normal(key, (B, 3 * C, Hp, Wp), jnp.float32)

    voxel_feat, triplane = triplane_elev_forward(
        triplane_nchw, volume, voxel_size, pc_range, triplane_range)
    voxel_feat = jax.block_until_ready(voxel_feat)

    # Validate against a direct-gather f32 JAX reference of
    # sample_points_triplane (kernel operands are bf16 -> looser tolerance).
    H, W, Z = volume
    vc = build_full_vc(volume, voxel_size, pc_range, triplane_range, Wp)
    ref = sample_points_triplane_ref(triplane, vc, Hp, Wp).reshape(B, C, H, W, Z)
    max_err = float(jnp.max(jnp.abs(voxel_feat - ref)))
    assert max_err < 6e-2, f"mismatch vs reference: {max_err}"

    print("KERNEL_OK")
</pallas_src>

<mosaic_0001>
module attributes {stable_mosaic.version = 11 : i64} {
  func.func @kernel(%arg0: i32, %arg1: memref<16x256xbf16, #tpu.memory_space<vmem>>, %arg2: memref<16x256xbf16, #tpu.memory_space<vmem>>, %arg3: memref<16x256xbf16, #tpu.memory_space<vmem>>, %arg4: memref<8x256x16xbf16, #tpu.memory_space<vmem>>, %arg5: memref<256x128xbf16, #tpu.memory_space<vmem>>, %arg6: memref<8x256x8xbf16, #tpu.memory_space<vmem>>, %arg7: memref<16x128xf32, #tpu.memory_space<vmem>>, %arg8: memref<8x128xf32, #tpu.memory_space<vmem>>, %arg9: memref<16x8x128xf32, #tpu.memory_space<vmem>>, %arg10: memref<16x128xf32, #tpu.memory_space<vmem>>) attributes {dimension_semantics = [#tpu.dimension_semantics<arbitrary>], iteration_bounds = array<i64: 2>, scalar_prefetch = 0 : i64, scratch_operands = 1 : i64, tpu.core_type = #tpu.core_type<tc>, window_params = [{pipeline_mode = #tpu.pipeline_mode<synchronous>, transform_indices = @transform_0, window_bounds = array<i64: 16, 256>}, {pipeline_mode = #tpu.pipeline_mode<synchronous>, transform_indices = @transform_1, window_bounds = array<i64: 16, 256>}, {pipeline_mode = #tpu.pipeline_mode<synchronous>, transform_indices = @transform_2, window_bounds = array<i64: 16, 256>}, {transform_indices = @transform_3, window_bounds = array<i64: 8, 256, 16>}, {pipeline_mode = #tpu.pipeline_mode<synchronous>, transform_indices = @transform_4, window_bounds = array<i64: 256, 128>}, {transform_indices = @transform_5, window_bounds = array<i64: 8, 256, 8>}, {pipeline_mode = #tpu.pipeline_mode<synchronous>, transform_indices = @transform_6, window_bounds = array<i64: 16, 128>}, {pipeline_mode = #tpu.pipeline_mode<synchronous>, transform_indices = @transform_7, window_bounds = array<i64: 8, 128>}, {transform_indices = @transform_8, window_bounds = array<i64: 16, 8, 128>}]} {
    %c0_i32 = arith.constant 0 : i32
    %0 = arith.cmpi eq, %arg0, %c0_i32 : i32
    %1 = arith.extui %0 : i1 to i32
    %c0_i32_0 = arith.constant 0 : i32
    %2 = arith.cmpi ne, %1, %c0_i32_0 : i32
    scf.if %2 {
      %c0_106 = arith.constant 0 : index
      %c0_107 = arith.constant 0 : index
      %112 = vector.load %arg2[%c0_106, %c0_107] : memref<16x256xbf16, #tpu.memory_space<vmem>>, vector<16x256xbf16>
      %c0_108 = arith.constant 0 : index
      %c0_109 = arith.constant 0 : index
      %113 = vector.load %arg5[%c0_108, %c0_109] : memref<256x128xbf16, #tpu.memory_space<vmem>>, vector<256x128xbf16>
      %cst_110 = arith.constant dense<0.000000e+00> : vector<16x128xf32>
      %114 = tpu.matmul %112, %113, %cst_110 {dimension_numbers = #tpu.dot_dimension_numbers<[1], [0], [0], [1], [0, 0, 1, 1], [], []>} : vector<16x256xbf16>, vector<256x128xbf16>, vector<16x128xf32> -> vector<16x128xf32>
      %c0_111 = arith.constant 0 : index
      %c0_112 = arith.constant 0 : index
      %115 = vector.load %arg10[%c0_111, %c0_112] : memref<16x128xf32, #tpu.memory_space<vmem>>, vector<16x128xf32>
      tpu.vector_store %arg10[%c0_111, %c0_112], %114 {strides = array<i32>} : memref<16x128xf32, #tpu.memory_space<vmem>>, vector<16x128xf32>,
    } else {
    }
    %c0 = arith.constant 0 : index
    %c0_1 = arith.constant 0 : index
    %3 = vector.load %arg10[%c0, %c0_1] : memref<16x128xf32, #tpu.memory_space<vmem>>, vector<16x128xf32>
    %c0_2 = arith.constant 0 : index
    %c0_3 = arith.constant 0 : index
    %4 = vector.load %arg1[%c0_2, %c0_3] : memref<16x256xbf16, #tpu.memory_space<vmem>>, vector<16x256xbf16>
    %c0_4 = arith.constant 0 : index
    %c0_5 = arith.constant 0 : index
    %5 = vector.load %arg3[%c0_4, %c0_5] : memref<16x256xbf16, #tpu.memory_space<vmem>>, vector<16x256xbf16>
    %c0_6 = arith.constant 0 : index
    %c0_7 = arith.constant 0 : index
    %6 = vector.load %arg7[%c0_6, %c0_7] : memref<16x128xf32, #tpu.memory_space<vmem>>, vector<16x128xf32>
    %c0_8 = arith.constant 0 : index
    %c0_9 = arith.constant 0 : index
    %7 = vector.load %arg8[%c0_8, %c0_9] : memref<8x128xf32, #tpu.memory_space<vmem>>, vector<8x128xf32>
    %c0_10 = arith.constant 0 : index
    %c0_11 = arith.constant 0 : index
    %c0_12 = arith.constant 0 : index
    %8 = vector.load %arg4[%c0_10, %c0_11, %c0_12] : memref<8x256x16xbf16, #tpu.memory_space<vmem>>, vector<1x256x16xbf16>
    %9 = vector.shape_cast %8 : vector<1x256x16xbf16> to vector<256x16xbf16>
    %cst = arith.constant dense<0.000000e+00> : vector<16x16xf32>
    %10 = tpu.matmul %4, %9, %cst {dimension_numbers = #tpu.dot_dimension_numbers<[1], [0], [0], [1], [0, 0, 1, 1], [], []>} : vector<16x256xbf16>, vector<256x16xbf16>, vector<16x16xf32> -> vector<16x16xf32>
    %c0_13 = arith.constant 0 : index
    %c0_14 = arith.constant 0 : index
    %c0_15 = arith.constant 0 : index
    %11 = vector.load %arg6[%c0_13, %c0_14, %c0_15] : memref<8x256x8xbf16, #tpu.memory_space<vmem>>, vector<1x256x8xbf16>
    %12 = vector.shape_cast %11 : vector<1x256x8xbf16> to vector<256x8xbf16>
    %cst_16 = arith.constant dense<0.000000e+00> : vector<16x8xf32>
    %13 = tpu.matmul %5, %12, %cst_16 {dimension_numbers = #tpu.dot_dimension_numbers<[1], [0], [0], [1], [0, 0, 1, 1], [], []>} : vector<16x256xbf16>, vector<256x8xbf16>, vector<16x8xf32> -> vector<16x8xf32>
    %cst_17 = arith.constant dense<0.000000e+00> : vector<16x128xf32>
    %14 = tpu.matmul %10, %6, %cst_17 {dimension_numbers = #tpu.dot_dimension_numbers<[1], [0], [0], [1], [0, 0, 1, 1], [], []>} : vector<16x16xf32>, vector<16x128xf32>, vector<16x128xf32> -> vector<16x128xf32>
    %15 = arith.addf %3, %14 : vector<16x128xf32>
    %cst_18 = arith.constant dense<0.000000e+00> : vector<16x128xf32>
    %16 = tpu.matmul %13, %7, %cst_18 {dimension_numbers = #tpu.dot_dimension_numbers<[1], [0], [0], [1], [0, 0, 1, 1], [], []>} : vector<16x8xf32>, vector<8x128xf32>, vector<16x128xf32> -> vector<16x128xf32>
    %17 = arith.addf %15, %16 : vector<16x128xf32>
    %c0_19 = arith.constant 0 : index
    %c0_20 = arith.constant 0 : index
    %c0_21 = arith.constant 0 : index
    %18 = vector.load %arg9[%c0_19, %c0_20, %c0_21] : memref<16x8x128xf32, #tpu.memory_space<vmem>>, vector<16x1x128xf32>
    %19 = vector.shape_cast %18 : vector<16x1x128xf32> to vector<16x128xf32>
    %20 = vector.shape_cast %17 : vector<16x128xf32> to vector<16x1x128xf32>
    tpu.vector_store %arg9[%c0_19, %c0_20, %c0_21], %20 {strides = array<i32>} : memref<16x8x128xf32, #tpu.memory_space<vmem>>, vector<16x1x128xf32>,
    %c1 = arith.constant 1 : index
    %c0_22 = arith.constant 0 : index
    %c0_23 = arith.constant 0 : index
    %21 = vector.load %arg4[%c1, %c0_22, %c0_23] : memref<8x256x16xbf16, #tpu.memory_space<vmem>>, vector<1x256x16xbf16>
    %22 = vector.shape_cast %21 : vector<1x256x16xbf16> to vector<256x16xbf16>
    %cst_24 = arith.constant dense<0.000000e+00> : vector<16x16xf32>
    %23 = tpu.matmul %4, %22, %cst_24 {dimension_numbers = #tpu.dot_dimension_numbers<[1], [0], [0], [1], [0, 0, 1, 1], [], []>} : vector<16x256xbf16>, vector<256x16xbf16>, vector<16x16xf32> -> vector<16x16xf32>
    %c1_25 = arith.constant 1 : index
    %c0_26 = arith.constant 0 : index
    %c0_27 = arith.constant 0 : index
    %24 = vector.load %arg6[%c1_25, %c0_26, %c0_27] : memref<8x256x8xbf16, #tpu.memory_space<vmem>>, vector<1x256x8xbf16>
    %25 = vector.shape_cast %24 : vector<1x256x8xbf16> to vector<256x8xbf16>
    %cst_28 = arith.constant dense<0.000000e+00> : vector<16x8xf32>
    %26 = tpu.matmul %5, %25, %cst_28 {dimension_numbers = #tpu.dot_dimension_numbers<[1], [0], [0], [1], [0, 0, 1, 1], [], []>} : vector<16x256xbf16>, vector<256x8xbf16>, vector<16x8xf32> -> vector<16x8xf32>
    %cst_29 = arith.constant dense<0.000000e+00> : vector<16x128xf32>
    %27 = tpu.matmul %23, %6, %cst_29 {dimension_numbers = #tpu.dot_dimension_numbers<[1], [0], [0], [1], [0, 0, 1, 1], [], []>} : vector<16x16xf32>, vector<16x128xf32>, vector<16x128xf32> -> vector<16x128xf32>
    %28 = arith.addf %3, %27 : vector<16x128xf32>
    %cst_30 = arith.constant dense<0.000000e+00> : vector<16x128xf32>
    %29 = tpu.matmul %26, %7, %cst_30 {dimension_numbers = #tpu.dot_dimension_numbers<[1], [0], [0], [1], [0, 0, 1, 1], [], []>} : vector<16x8xf32>, vector<8x128xf32>, vector<16x128xf32> -> vector<16x128xf32>
    %30 = arith.addf %28, %29 : vector<16x128xf32>
    %c0_31 = arith.constant 0 : index
    %c1_32 = arith.constant 1 : index
    %c0_33 = arith.constant 0 : index
    %31 = vector.load %arg9[%c0_31, %c1_32, %c0_33] : memref<16x8x128xf32, #tpu.memory_space<vmem>>, vector<16x1x128xf32>
    %32 = vector.shape_cast %31 : vector<16x1x128xf32> to vector<16x128xf32>
    %33 = vector.shape_cast %30 : vector<16x128xf32> to vector<16x1x128xf32>
    tpu.vector_store %arg9[%c0_31, %c1_32, %c0_33], %33 {strides = array<i32>} : memref<16x8x128xf32, #tpu.memory_space<vmem>>, vector<16x1x128xf32>,
    %c2 = arith.constant 2 : index
    %c0_34 = arith.constant 0 : index
    %c0_35 = arith.constant 0 : index
    %34 = vector.load %arg4[%c2, %c0_34, %c0_35] : memref<8x256x16xbf16, #tpu.memory_space<vmem>>, vector<1x256x16xbf16>
    %35 = vector.shape_cast %34 : vector<1x256x16xbf16> to vector<256x16xbf16>
    %cst_36 = arith.constant dense<0.000000e+00> : vector<16x16xf32>
    %36 = tpu.matmul %4, %35, %cst_36 {dimension_numbers = #tpu.dot_dimension_numbers<[1], [0], [0], [1], [0, 0, 1, 1], [], []>} : vector<16x256xbf16>, vector<256x16xbf16>, vector<16x16xf32> -> vector<16x16xf32>
    %c2_37 = arith.constant 2 : index
    %c0_38 = arith.constant 0 : index
    %c0_39 = arith.constant 0 : index
    %37 = vector.load %arg6[%c2_37, %c0_38, %c0_39] : memref<8x256x8xbf16, #tpu.memory_space<vmem>>, vector<1x256x8xbf16>
    %38 = vector.shape_cast %37 : vector<1x256x8xbf16> to vector<256x8xbf16>
    %cst_40 = arith.constant dense<0.000000e+00> : vector<16x8xf32>
    %39 = tpu.matmul %5, %38, %cst_40 {dimension_numbers = #tpu.dot_dimension_numbers<[1], [0], [0], [1], [0, 0, 1, 1], [], []>} : vector<16x256xbf16>, vector<256x8xbf16>, vector<16x8xf32> -> vector<16x8xf32>
    %cst_41 = arith.constant dense<0.000000e+00> : vector<16x128xf32>
    %40 = tpu.matmul %36, %6, %cst_41 {dimension_numbers = #tpu.dot_dimension_numbers<[1], [0], [0], [1], [0, 0, 1, 1], [], []>} : vector<16x16xf32>, vector<16x128xf32>, vector<16x128xf32> -> vector<16x128xf32>
    %41 = arith.addf %3, %40 : vector<16x128xf32>
    %cst_42 = arith.constant dense<0.000000e+00> : vector<16x128xf32>
    %42 = tpu.matmul %39, %7, %cst_42 {dimension_numbers = #tpu.dot_dimension_numbers<[1], [0], [0], [1], [0, 0, 1, 1], [], []>} : vector<16x8xf32>, vector<8x128xf32>, vector<16x128xf32> -> vector<16x128xf32>
    %43 = arith.addf %41, %42 : vector<16x128xf32>
    %c0_43 = arith.constant 0 : index
    %c2_44 = arith.constant 2 : index
    %c0_45 = arith.constant 0 : index
    %44 = vector.load %arg9[%c0_43, %c2_44, %c0_45] : memref<16x8x128xf32, #tpu.memory_space<vmem>>, vector<16x1x128xf32>
    %45 = vector.shape_cast %44 : vector<16x1x128xf32> to vector<16x128xf32>
    %46 = vector.shape_cast %43 : vector<16x128xf32> to vector<16x1x128xf32>
    tpu.vector_store %arg9[%c0_43, %c2_44, %c0_45], %46 {strides = array<i32>} : memref<16x8x128xf32, #tpu.memory_space<vmem>>, vector<16x1x128xf32>,
    %c3 = arith.constant 3 : index
    %c0_46 = arith.constant 0 : index
    %c0_47 = arith.constant 0 : index
    %47 = vector.load %arg4[%c3, %c0_46, %c0_47] : memref<8x256x16xbf16, #tpu.memory_space<vmem>>, vector<1x256x16xbf16>
    %48 = vector.shape_cast %47 : vector<1x256x16xbf16> to vector<256x16xbf16>
    %cst_48 = arith.constant dense<0.000000e+00> : vector<16x16xf32>
    %49 = tpu.matmul %4, %48, %cst_48 {dimension_numbers = #tpu.dot_dimension_numbers<[1], [0], [0], [1], [0, 0, 1, 1], [], []>} : vector<16x256xbf16>, vector<256x16xbf16>, vector<16x16xf32> -> vector<16x16xf32>
    %c3_49 = arith.constant 3 : index
    %c0_50 = arith.constant 0 : index
    %c0_51 = arith.constant 0 : index
    %50 = vector.load %arg6[%c3_49, %c0_50, %c0_51] : memref<8x256x8xbf16, #tpu.memory_space<vmem>>, vector<1x256x8xbf16>
    %51 = vector.shape_cast %50 : vector<1x256x8xbf16> to vector<256x8xbf16>
    %cst_52 = arith.constant dense<0.000000e+00> : vector<16x8xf32>
    %52 = tpu.matmul %5, %51, %cst_52 {dimension_numbers = #tpu.dot_dimension_numbers<[1], [0], [0], [1], [0, 0, 1, 1], [], []>} : vector<16x256xbf16>, vector<256x8xbf16>, vector<16x8xf32> -> vector<16x8xf32>
    %cst_53 = arith.constant dense<0.000000e+00> : vector<16x128xf32>
    %53 = tpu.matmul %49, %6, %cst_53 {dimension_numbers = #tpu.dot_dimension_numbers<[1], [0], [0], [1], [0, 0, 1, 1], [], []>} : vector<16x16xf32>, vector<16x128xf32>, vector<16x128xf32> -> vector<16x128xf32>
    %54 = arith.addf %3, %53 : vector<16x128xf32>
    %cst_54 = arith.constant dense<0.000000e+00> : vector<16x128xf32>
    %55 = tpu.matmul %52, %7, %cst_54 {dimension_numbers = #tpu.dot_dimension_numbers<[1], [0], [0], [1], [0, 0, 1, 1], [], []>} : vector<16x8xf32>, vector<8x128xf32>, vector<16x128xf32> -> vector<16x128xf32>
    %56 = arith.addf %54, %55 : vector<16x128xf32>
    %c0_55 = arith.constant 0 : index
    %c3_56 = arith.constant 3 : index
    %c0_57 = arith.constant 0 : index
    %57 = vector.load %arg9[%c0_55, %c3_56, %c0_57] : memref<16x8x128xf32, #tpu.memory_space<vmem>>, vector<16x1x128xf32>
    %58 = vector.shape_cast %57 : vector<16x1x128xf32> to vector<16x128xf32>
    %59 = vector.shape_cast %56 : vector<16x128xf32> to vector<16x1x128xf32>
    tpu.vector_store %arg9[%c0_55, %c3_56, %c0_57], %59 {strides = array<i32>} : memref<16x8x128xf32, #tpu.memory_space<vmem>>, vector<16x1x128xf32>,
    %c4 = arith.constant 4 : index
    %c0_58 = arith.constant 0 : index
    %c0_59 = arith.constant 0 : index
    %60 = vector.load %arg4[%c4, %c0_58, %c0_59] : memref<8x256x16xbf16, #tpu.memory_space<vmem>>, vector<1x256x16xbf16>
    %61 = vector.shape_cast %60 : vector<1x256x16xbf16> to vector<256x16xbf16>
    %cst_60 = arith.constant dense<0.000000e+00> : vector<16x16xf32>
    %62 = tpu.matmul %4, %61, %cst_60 {dimension_numbers = #tpu.dot_dimension_numbers<[1], [0], [0], [1], [0, 0, 1, 1], [], []>} : vector<16x256xbf16>, vector<256x16xbf16>, vector<16x16xf32> -> vector<16x16xf32>
    %c4_61 = arith.constant 4 : index
    %c0_62 = arith.constant 0 : index
    %c0_63 = arith.constant 0 : index
    %63 = vector.load %arg6[%c4_61, %c0_62, %c0_63] : memref<8x256x8xbf16, #tpu.memory_space<vmem>>, vector<1x256x8xbf16>
    %64 = vector.shape_cast %63 : vector<1x256x8xbf16> to vector<256x8xbf16>
    %cst_64 = arith.constant dense<0.000000e+00> : vector<16x8xf32>
    %65 = tpu.matmul %5, %64, %cst_64 {dimension_numbers = #tpu.dot_dimension_numbers<[1], [0], [0], [1], [0, 0, 1, 1], [], []>} : vector<16x256xbf16>, vector<256x8xbf16>, vector<16x8xf32> -> vector<16x8xf32>
    %cst_65 = arith.constant dense<0.000000e+00> : vector<16x128xf32>
    %66 = tpu.matmul %62, %6, %cst_65 {dimension_numbers = #tpu.dot_dimension_numbers<[1], [0], [0], [1], [0, 0, 1, 1], [], []>} : vector<16x16xf32>, vector<16x128xf32>, vector<16x128xf32> -> vector<16x128xf32>
    %67 = arith.addf %3, %66 : vector<16x128xf32>
    %cst_66 = arith.constant dense<0.000000e+00> : vector<16x128xf32>
    %68 = tpu.matmul %65, %7, %cst_66 {dimension_numbers = #tpu.dot_dimension_numbers<[1], [0], [0], [1], [0, 0, 1, 1], [], []>} : vector<16x8xf32>, vector<8x128xf32>, vector<16x128xf32> -> vector<16x128xf32>
    %69 = arith.addf %67, %68 : vector<16x128xf32>
    %c0_67 = arith.constant 0 : index
    %c4_68 = arith.constant 4 : index
    %c0_69 = arith.constant 0 : index
    %70 = vector.load %arg9[%c0_67, %c4_68, %c0_69] : memref<16x8x128xf32, #tpu.memory_space<vmem>>, vector<16x1x128xf32>
    %71 = vector.shape_cast %70 : vector<16x1x128xf32> to vector<16x128xf32>
    %72 = vector.shape_cast %69 : vector<16x128xf32> to vector<16x1x128xf32>
    tpu.vector_store %arg9[%c0_67, %c4_68, %c0_69], %72 {strides = array<i32>} : memref<16x8x128xf32, #tpu.memory_space<vmem>>, vector<16x1x128xf32>,
    %c5 = arith.constant 5 : index
    %c0_70 = arith.constant 0 : index
    %c0_71 = arith.constant 0 : index
    %73 = vector.load %arg4[%c5, %c0_70, %c0_71] : memref<8x256x16xbf16, #tpu.memory_space<vmem>>, vector<1x256x16xbf16>
    %74 = vector.shape_cast %73 : vector<1x256x16xbf16> to vector<256x16xbf16>
    %cst_72 = arith.constant dense<0.000000e+00> : vector<16x16xf32>
    %75 = tpu.matmul %4, %74, %cst_72 {dimension_numbers = #tpu.dot_dimension_numbers<[1], [0], [0], [1], [0, 0, 1, 1], [], []>} : vector<16x256xbf16>, vector<256x16xbf16>, vector<16x16xf32> -> vector<16x16xf32>
    %c5_73 = arith.constant 5 : index
    %c0_74 = arith.constant 0 : index
    %c0_75 = arith.constant 0 : index
    %76 = vector.load %arg6[%c5_73, %c0_74, %c0_75] : memref<8x256x8xbf16, #tpu.memory_space<vmem>>, vector<1x256x8xbf16>
    %77 = vector.shape_cast %76 : vector<1x256x8xbf16> to vector<256x8xbf16>
    %cst_76 = arith.constant dense<0.000000e+00> : vector<16x8xf32>
    %78 = tpu.matmul %5, %77, %cst_76 {dimension_numbers = #tpu.dot_dimension_numbers<[1], [0], [0], [1], [0, 0, 1, 1], [], []>} : vector<16x256xbf16>, vector<256x8xbf16>, vector<16x8xf32> -> vector<16x8xf32>
    %cst_77 = arith.constant dense<0.000000e+00> : vector<16x128xf32>
    %79 = tpu.matmul %75, %6, %cst_77 {dimension_numbers = #tpu.dot_dimension_numbers<[1], [0], [0], [1], [0, 0, 1, 1], [], []>} : vector<16x16xf32>, vector<16x128xf32>, vector<16x128xf32> -> vector<16x128xf32>
    %80 = arith.addf %3, %79 : vector<16x128xf32>
    %cst_78 = arith.constant dense<0.000000e+00> : vector<16x128xf32>
    %81 = tpu.matmul %78, %7, %cst_78 {dimension_numbers = #tpu.dot_dimension_numbers<[1], [0], [0], [1], [0, 0, 1, 1], [], []>} : vector<16x8xf32>, vector<8x128xf32>, vector<16x128xf32> -> vector<16x128xf32>
    %82 = arith.addf %80, %81 : vector<16x128xf32>
    %c0_79 = arith.constant 0 : index
    %c5_80 = arith.constant 5 : index
    %c0_81 = arith.constant 0 : index
    %83 = vector.load %arg9[%c0_79, %c5_80, %c0_81] : memref<16x8x128xf32, #tpu.memory_space<vmem>>, vector<16x1x128xf32>
    %84 = vector.shape_cast %83 : vector<16x1x128xf32> to vector<16x128xf32>
    %85 = vector.shape_cast %82 : vector<16x128xf32> to vector<16x1x128xf32>
    tpu.vector_store %arg9[%c0_79, %c5_80, %c0_81], %85 {strides = array<i32>} : memref<16x8x128xf32, #tpu.memory_space<vmem>>, vector<16x1x128xf32>,
    %c6 = arith.constant 6 : index
    %c0_82 = arith.constant 0 : index
    %c0_83 = arith.constant 0 : index
    %86 = vector.load %arg4[%c6, %c0_82, %c0_83] : memref<8x256x16xbf16, #tpu.memory_space<vmem>>, vector<1x256x16xbf16>
    %87 = vector.shape_cast %86 : vector<1x256x16xbf16> to vector<256x16xbf16>
    %cst_84 = arith.constant dense<0.000000e+00> : vector<16x16xf32>
    %88 = tpu.matmul %4, %87, %cst_84 {dimension_numbers = #tpu.dot_dimension_numbers<[1], [0], [0], [1], [0, 0, 1, 1], [], []>} : vector<16x256xbf16>, vector<256x16xbf16>, vector<16x16xf32> -> vector<16x16xf32>
    %c6_85 = arith.constant 6 : index
    %c0_86 = arith.constant 0 : index
    %c0_87 = arith.constant 0 : index
    %89 = vector.load %arg6[%c6_85, %c0_86, %c0_87] : memref<8x256x8xbf16, #tpu.memory_space<vmem>>, vector<1x256x8xbf16>
    %90 = vector.shape_cast %89 : vector<1x256x8xbf16> to vector<256x8xbf16>
    %cst_88 = arith.constant dense<0.000000e+00> : vector<16x8xf32>
    %91 = tpu.matmul %5, %90, %cst_88 {dimension_numbers = #tpu.dot_dimension_numbers<[1], [0], [0], [1], [0, 0, 1, 1], [], []>} : vector<16x256xbf16>, vector<256x8xbf16>, vector<16x8xf32> -> vector<16x8xf32>
    %cst_89 = arith.constant dense<0.000000e+00> : vector<16x128xf32>
    %92 = tpu.matmul %88, %6, %cst_89 {dimension_numbers = #tpu.dot_dimension_numbers<[1], [0], [0], [1], [0, 0, 1, 1], [], []>} : vector<16x16xf32>, vector<16x128xf32>, vector<16x128xf32> -> vector<16x128xf32>
    %93 = arith.addf %3, %92 : vector<16x128xf32>
    %cst_90 = arith.constant dense<0.000000e+00> : vector<16x128xf32>
    %94 = tpu.matmul %91, %7, %cst_90 {dimension_numbers = #tpu.dot_dimension_numbers<[1], [0], [0], [1], [0, 0, 1, 1], [], []>} : vector<16x8xf32>, vector<8x128xf32>, vector<16x128xf32> -> vector<16x128xf32>
    %95 = arith.addf %93, %94 : vector<16x128xf32>
    %c0_91 = arith.constant 0 : index
    %c6_92 = arith.constant 6 : index
    %c0_93 = arith.constant 0 : index
    %96 = vector.load %arg9[%c0_91, %c6_92, %c0_93] : memref<16x8x128xf32, #tpu.memory_space<vmem>>, vector<16x1x128xf32>
    %97 = vector.shape_cast %96 : vector<16x1x128xf32> to vector<16x128xf32>
    %98 = vector.shape_cast %95 : vector<16x128xf32> to vector<16x1x128xf32>
    tpu.vector_store %arg9[%c0_91, %c6_92, %c0_93], %98 {strides = array<i32>} : memref<16x8x128xf32, #tpu.memory_space<vmem>>, vector<16x1x128xf32>,
    %c7 = arith.constant 7 : index
    %c0_94 = arith.constant 0 : index
    %c0_95 = arith.constant 0 : index
    %99 = vector.load %arg4[%c7, %c0_94, %c0_95] : memref<8x256x16xbf16, #tpu.memory_space<vmem>>, vector<1x256x16xbf16>
    %100 = vector.shape_cast %99 : vector<1x256x16xbf16> to vector<256x16xbf16>
    %cst_96 = arith.constant dense<0.000000e+00> : vector<16x16xf32>
    %101 = tpu.matmul %4, %100, %cst_96 {dimension_numbers = #tpu.dot_dimension_numbers<[1], [0], [0], [1], [0, 0, 1, 1], [], []>} : vector<16x256xbf16>, vector<256x16xbf16>, vector<16x16xf32> -> vector<16x16xf32>
    %c7_97 = arith.constant 7 : index
    %c0_98 = arith.constant 0 : index
    %c0_99 = arith.constant 0 : index
    %102 = vector.load %arg6[%c7_97, %c0_98, %c0_99] : memref<8x256x8xbf16, #tpu.memory_space<vmem>>, vector<1x256x8xbf16>
    %103 = vector.shape_cast %102 : vector<1x256x8xbf16> to vector<256x8xbf16>
    %cst_100 = arith.constant dense<0.000000e+00> : vector<16x8xf32>
    %104 = tpu.matmul %5, %103, %cst_100 {dimension_numbers = #tpu.dot_dimension_numbers<[1], [0], [0], [1], [0, 0, 1, 1], [], []>} : vector<16x256xbf16>, vector<256x8xbf16>, vector<16x8xf32> -> vector<16x8xf32>
    %cst_101 = arith.constant dense<0.000000e+00> : vector<16x128xf32>
    %105 = tpu.matmul %101, %6, %cst_101 {dimension_numbers = #tpu.dot_dimension_numbers<[1], [0], [0], [1], [0, 0, 1, 1], [], []>} : vector<16x16xf32>, vector<16x128xf32>, vector<16x128xf32> -> vector<16x128xf32>
    %106 = arith.addf %3, %105 : vector<16x128xf32>
    %cst_102 = arith.constant dense<0.000000e+00> : vector<16x128xf32>
    %107 = tpu.matmul %104, %7, %cst_102 {dimension_numbers = #tpu.dot_dimension_numbers<[1], [0], [0], [1], [0, 0, 1, 1], [], []>} : vector<16x8xf32>, vector<8x128xf32>, vector<16x128xf32> -> vector<16x128xf32>
    %108 = arith.addf %106, %107 : vector<16x128xf32>
    %c0_103 = arith.constant 0 : index
    %c7_104 = arith.constant 7 : index
    %c0_105 = arith.constant 0 : index
    %109 = vector.load %arg9[%c0_103, %c7_104, %c0_105] : memref<16x8x128xf32, #tpu.memory_space<vmem>>, vector<16x1x128xf32>
    %110 = vector.shape_cast %109 : vector<16x1x128xf32> to vector<16x128xf32>
    %111 = vector.shape_cast %108 : vector<16x128xf32> to vector<16x1x128xf32>
    tpu.vector_store %arg9[%c0_103, %c7_104, %c0_105], %111 {strides = array<i32>} : memref<16x8x128xf32, #tpu.memory_space<vmem>>, vector<16x1x128xf32>,
    return
  }
  func.func @transform_0(%arg0: i32) -> (i32, i32) {
    %c0_i32 = arith.constant 0 : i32
    %c0_i32_0 = arith.constant 0 : i32
    %c0_i32_1 = arith.constant 0 : i32
    return %c0_i32, %c0_i32_0 : i32, i32
  }
  func.func @transform_1(%arg0: i32) -> (i32, i32) {
    %c0_i32 = arith.constant 0 : i32
    %c0_i32_0 = arith.constant 0 : i32
    %c0_i32_1 = arith.constant 0 : i32
    return %c0_i32, %c0_i32_0 : i32, i32
  }
  func.func @transform_2(%arg0: i32) -> (i32, i32) {
    %c0_i32 = arith.constant 0 : i32
    %c0_i32_0 = arith.constant 0 : i32
    %c0_i32_1 = arith.constant 0 : i32
    return %c0_i32, %c0_i32_0 : i32, i32
  }
  func.func @transform_3(%arg0: i32) -> (i32, i32, i32) {
    %c0_i32 = arith.constant 0 : i32
    %c0_i32_0 = arith.constant 0 : i32
    %c0_i32_1 = arith.constant 0 : i32
    return %arg0, %c0_i32, %c0_i32_0 : i32, i32, i32
  }
  func.func @transform_4(%arg0: i32) -> (i32, i32) {
    %c0_i32 = arith.constant 0 : i32
    %c0_i32_0 = arith.constant 0 : i32
    %c0_i32_1 = arith.constant 0 : i32
    return %c0_i32, %c0_i32_0 : i32, i32
  }
  func.func @transform_5(%arg0: i32) -> (i32, i32, i32) {
    %c0_i32 = arith.constant 0 : i32
    %c0_i32_0 = arith.constant 0 : i32
    %c0_i32_1 = arith.constant 0 : i32
    return %arg0, %c0_i32, %c0_i32_0 : i32, i32, i32
  }
  func.func @transform_6(%arg0: i32) -> (i32, i32) {
    %c0_i32 = arith.constant 0 : i32
    %c0_i32_0 = arith.constant 0 : i32
    %c0_i32_1 = arith.constant 0 : i32
    return %c0_i32, %c0_i32_0 : i32, i32
  }
  func.func @transform_7(%arg0: i32) -> (i32, i32) {
    %c0_i32 = arith.constant 0 : i32
    %c0_i32_0 = arith.constant 0 : i32
    %c0_i32_1 = arith.constant 0 : i32
    return %c0_i32, %c0_i32_0 : i32, i32
  }
  func.func @transform_8(%arg0: i32) -> (i32, i32, i32) {
    %c0_i32 = arith.constant 0 : i32
    %c0_i32_0 = arith.constant 0 : i32
    %c0_i32_1 = arith.constant 0 : i32
    return %c0_i32, %arg0, %c0_i32_0 : i32, i32, i32
  }
}

</mosaic_0001>

<llo_original>
// kernel: tpu_custom_call.1
$region0: #{tpu_custom_call.1}
  #allocation0 [shape = 'u32[]', space=smem, size = 0x4, offset = 0x4, fixed_abs, tag = 'smem constant byte address 0x4 - core index']
  #allocation1 [shape = 'u32[144,128]{1,0:T(1,128)}', space=vmem, size = 0x12000, scoped, tag = 'internal scratch']
  #allocation2 [shape = 'f32[16,128]{1,0:T(8,128)}', space=vmem, size = 0x2000, scoped, tag = 'scratch operand']
  %s0 = inlined_call_operand.vmem [shape: bf16[16,256], index: 0, kind: input, shape index: {}]
  %s1 = inlined_call_operand.vmem [shape: bf16[16,256], index: 1, kind: input, shape index: {}]
  %s2 = inlined_call_operand.vmem [shape: bf16[16,256], index: 2, kind: input, shape index: {}]
  %s3 = inlined_call_operand.vmem [shape: bf16[16,256,16], index: 3, kind: input, shape index: {}]
  %s4 = inlined_call_operand.vmem [shape: bf16[256,128], index: 4, kind: input, shape index: {}]
  %s5 = inlined_call_operand.vmem [shape: bf16[16,256,8], index: 5, kind: input, shape index: {}]
  %s6 = inlined_call_operand.vmem [shape: f32[16,128], index: 6, kind: input, shape index: {}]
  %s7 = inlined_call_operand.vmem [shape: f32[8,128], index: 7, kind: input, shape index: {}]
  %s8 = inlined_call_operand.hbm [shape: f32[16,16,128], index: 8, kind: output, shape index: {}]
  %s9 = sld [smem:[#allocation0]]
  $region69: #{tpu_custom_call.1} parent=0
    _
  %s11 = ssub.s32 1, %s9
  %s12 = scalar_select 0, %s11, %s9
  $region1: #{tpu_custom_call.1} parent=0
    #allocation3 [shape = 'u8[131072]{0}', space=vmem, size = 0x20000, scoped, tag = 'output window, operand 0']
    #allocation4 [shape = 's32[2]{0}', space=sflag, size = 0x8, scoped, tag = 'scoped memory for tpu_custom_call.1']
    %13 = vsyncpa [#allocation4], 0
    %s14 = scalar_lea.sflag [#allocation4], 1
    %15 = vsyncpa %s14, 0
    loop: start=0, step=1, limit=4
    $region2: #{tpu_custom_call.1} parent=1 // loop_pre_header
      _
    $region3: #{tpu_custom_call.1} parent=1 // loop_header
      %s17 = sphi 0, %s21
      %p18 = scmp.ge.s32.totalorder %s17, 4
      %s25 = sphi 0, %s25
      %s27 = sphi 0, %s25
      %s28 = sphi 0, %s27
      %s42 = sphi 0, %s28
      %s46 = sphi 0, %s46
      %s48 = sphi 0, %s46
      %s49 = sphi 0, %s48
      %s63 = sphi 0, %s49
      %s67 = sphi 0, %s67
      %s69 = sphi 0, %s67
      %s70 = sphi 0, %s69
      %s84 = sphi 0, %s70
      %s90 = sphi 0, %s92
      %s93 = sphi 0, %s90
      %s94 = sphi 0, %s93
      %s110 = sphi 0, %s94
      %s114 = sphi 0, %s114
      %s116 = sphi 0, %s114
      %s117 = sphi 0, %s116
      %s131 = sphi 0, %s117
      %s137 = sphi 0, %s139
      %s140 = sphi 0, %s137
      %s141 = sphi 0, %s140
      %s157 = sphi 0, %s141
      %s161 = sphi 0, %s161
      %s163 = sphi 0, %s161
      %s164 = sphi 0, %s163
      %s178 = sphi 0, %s164
      %s182 = sphi 0, %s182
      %s184 = sphi 0, %s182
      %s185 = sphi 0, %s184
      %s199 = sphi 0, %s185
      %s205 = sphi 0, %s207
      %s208 = sphi 0, %s205
      %s209 = sphi 0, %s208
      %s225 = sphi 0, %s209
    $region4: #{tpu_custom_call.1} parent=1 // loop_header_branch
      %20 = sbr.rel (%p18) target = $region8
    $region5: #{tpu_custom_call.1} parent=1 // loop_body
      %s22 = ssub.s32 %s17, 1
      %s23 = ssub.s32 %s17, 2
      %s24 = sadd.s32 %s17, 1
      %s26 = sadd.s32 %s25, 1
      %p29 = scmp.eq.s32.totalorder %s17, 1
      %p30 = scmp.ne.s32.totalorder %s25, %s27
      %p31 = scmp.eq.s32.totalorder %s17, 0
      %p32 = por %p30, %p31
      %p33 = scmp.ne.s32.totalorder %s25, %s27
      %p34 = scmp.eq.s32.totalorder %s22, 1
      %p35 = por %p33, %p34
      %p36 = scmp.ne.s32.totalorder %s27, %s28
      %p37 = scmp.eq.s32.totalorder %s22, 0
      %p38 = por %p36, %p37
      %p39 = scmp.ne.s32.totalorder %s27, %s28
      %p40 = scmp.eq.s32.totalorder %s23, 1
      %p41 = por %p39, %p40
      %p43 = scmp.ne.s32.totalorder %s28, %s42
      %p44 = scmp.eq.s32.totalorder %s23, 0
      %p45 = por %p43, %p44
      %s47 = sadd.s32 %s46, 1
      %p50 = scmp.eq.s32.totalorder %s17, 1
      %p51 = scmp.ne.s32.totalorder %s46, %s48
      %p52 = scmp.eq.s32.totalorder %s17, 0
      %p53 = por %p51, %p52
      %p54 = scmp.ne.s32.totalorder %s46, %s48
      %p55 = scmp.eq.s32.totalorder %s22, 1
      %p56 = por %p54, %p55
      %p57 = scmp.ne.s32.totalorder %s48, %s49
      %p58 = scmp.eq.s32.totalorder %s22, 0
      %p59 = por %p57, %p58
      %p60 = scmp.ne.s32.totalorder %s48, %s49
      %p61 = scmp.eq.s32.totalorder %s23, 1
      %p62 = por %p60, %p61
      %p64 = scmp.ne.s32.totalorder %s49, %s63
      %p65 = scmp.eq.s32.totalorder %s23, 0
      %p66 = por %p64, %p65
      %s68 = sadd.s32 %s67, 1
      %p71 = scmp.eq.s32.totalorder %s17, 1
      %p72 = scmp.ne.s32.totalorder %s67, %s69
      %p73 = scmp.eq.s32.totalorder %s17, 0
      %p74 = por %p72, %p73
      %p75 = scmp.ne.s32.totalorder %s67, %s69
      %p76 = scmp.eq.s32.totalorder %s22, 1
      %p77 = por %p75, %p76
      %p78 = scmp.ne.s32.totalorder %s69, %s70
      %p79 = scmp.eq.s32.totalorder %s22, 0
      %p80 = por %p78, %p79
      %p81 = scmp.ne.s32.totalorder %s69, %s70
      %p82 = scmp.eq.s32.totalorder %s23, 1
      %p83 = por %p81, %p82
      %p85 = scmp.ne.s32.totalorder %s70, %s84
      %p86 = scmp.eq.s32.totalorder %s23, 0
      %p87 = por %p85, %p86
      %s88 = ssub.s32 %s17, %s24
      %p89 = scmp.eq.s32.totalorder %s88, 0
      %s91 = sadd.s32 %s90, 1
      %s92 = scalar_select %p89, %s90, %s91
      %p95 = pneg %p89
      %p96 = scmp.eq.s32.totalorder %s17, 1
      %p97 = por %p95, %p96
      %p98 = scmp.ne.s32.totalorder %s90, %s93
      %p99 = scmp.eq.s32.totalorder %s17, 0
      %p100 = por %p98, %p99
      %p101 = scmp.ne.s32.totalorder %s90, %s93
      %p102 = scmp.eq.s32.totalorder %s22, 1
      %p103 = por %p101, %p102
      %p104 = scmp.ne.s32.totalorder %s93, %s94
      %p105 = scmp.eq.s32.totalorder %s22, 0
      %p106 = por %p104, %p105
      %p107 = scmp.ne.s32.totalorder %s93, %s94
      %p108 = scmp.eq.s32.totalorder %s23, 1
      %p109 = por %p107, %p108
      %p111 = scmp.ne.s32.totalorder %s94, %s110
      %p112 = scmp.eq.s32.totalorder %s23, 0
      %p113 = por %p111, %p112
      %s115 = sadd.s32 %s114, 1
      %p118 = scmp.eq.s32.totalorder %s17, 1
      %p119 = scmp.ne.s32.totalorder %s114, %s116
      %p120 = scmp.eq.s32.totalorder %s17, 0
      %p121 = por %p119, %p120
      %p122 = scmp.ne.s32.totalorder %s114, %s116
      %p123 = scmp.eq.s32.totalorder %s22, 1
      %p124 = por %p122, %p123
      %p125 = scmp.ne.s32.totalorder %s116, %s117
      %p126 = scmp.eq.s32.totalorder %s22, 0
      %p127 = por %p125, %p126
      %p128 = scmp.ne.s32.totalorder %s116, %s117
      %p129 = scmp.eq.s32.totalorder %s23, 1
      %p130 = por %p128, %p129
      %p132 = scmp.ne.s32.totalorder %s117, %s131
      %p133 = scmp.eq.s32.totalorder %s23, 0
      %p134 = por %p132, %p133
      %s135 = ssub.s32 %s17, %s24
      %p136 = scmp.eq.s32.totalorder %s135, 0
      %s138 = sadd.s32 %s137, 1
      %s139 = scalar_select %p136, %s137, %s138
      %p142 = pneg %p136
      %p143 = scmp.eq.s32.totalorder %s17, 1
      %p144 = por %p142, %p143
      %p145 = scmp.ne.s32.totalorder %s137, %s140
      %p146 = scmp.eq.s32.totalorder %s17, 0
      %p147 = por %p145, %p146
      %p148 = scmp.ne.s32.totalorder %s137, %s140
      %p149 = scmp.eq.s32.totalorder %s22, 1
      %p150 = por %p148, %p149
      %p151 = scmp.ne.s32.totalorder %s140, %s141
      %p152 = scmp.eq.s32.totalorder %s22, 0
      %p153 = por %p151, %p152
      %p154 = scmp.ne.s32.totalorder %s140, %s141
      %p155 = scmp.eq.s32.totalorder %s23, 1
      %p156 = por %p154, %p155
      %p158 = scmp.ne.s32.totalorder %s141, %s157
      %p159 = scmp.eq.s32.totalorder %s23, 0
      %p160 = por %p158, %p159
      %s162 = sadd.s32 %s161, 1
      %p165 = scmp.eq.s32.totalorder %s17, 1
      %p166 = scmp.ne.s32.totalorder %s161, %s163
      %p167 = scmp.eq.s32.totalorder %s17, 0
      %p168 = por %p166, %p167
      %p169 = scmp.ne.s32.totalorder %s161, %s163
      %p170 = scmp.eq.s32.totalorder %s22, 1
      %p171 = por %p169, %p170
      %p172 = scmp.ne.s32.totalorder %s163, %s164
      %p173 = scmp.eq.s32.totalorder %s22, 0
      %p174 = por %p172, %p173
      %p175 = scmp.ne.s32.totalorder %s163, %s164
      %p176 = scmp.eq.s32.totalorder %s23, 1
      %p177 = por %p175, %p176
      %p179 = scmp.ne.s32.totalorder %s164, %s178
      %p180 = scmp.eq.s32.totalorder %s23, 0
      %p181 = por %p179, %p180
      %s183 = sadd.s32 %s182, 1
      %p186 = scmp.eq.s32.totalorder %s17, 1
      %p187 = scmp.ne.s32.totalorder %s182, %s184
      %p188 = scmp.eq.s32.totalorder %s17, 0
      %p189 = por %p187, %p188
      %p190 = scmp.ne.s32.totalorder %s182, %s184
      %p191 = scmp.eq.s32.totalorder %s22, 1
      %p192 = por %p190, %p191
      %p193 = scmp.ne.s32.totalorder %s184, %s185
      %p194 = scmp.eq.s32.totalorder %s22, 0
      %p195 = por %p193, %p194
      %p196 = scmp.ne.s32.totalorder %s184, %s185
      %p197 = scmp.eq.s32.totalorder %s23, 1
      %p198 = por %p196, %p197
      %p200 = scmp.ne.s32.totalorder %s185, %s199
      %p201 = scmp.eq.s32.totalorder %s23, 0
      %p202 = por %p200, %p201
      %s203 = ssub.s32 %s17, %s24
      %p204 = scmp.eq.s32.totalorder %s203, 0
      %s206 = sadd.s32 %s205, 1
      %s207 = scalar_select %p204, %s205, %s206
      %p210 = pneg %p204
      %p211 = scmp.eq.s32.totalorder %s17, 1
      %p212 = por %p210, %p211
      %p213 = scmp.ne.s32.totalorder %s205, %s208
      %p214 = scmp.eq.s32.totalorder %s17, 0
      %p215 = por %p213, %p214
      %p216 = scmp.ne.s32.totalorder %s205, %s208
      %p217 = scmp.eq.s32.totalorder %s22, 1
      %p218 = por %p216, %p217
      %p219 = scmp.ne.s32.totalorder %s208, %s209
      %p220 = scmp.eq.s32.totalorder %s22, 0
      %p221 = por %p219, %p220
      %p222 = scmp.ne.s32.totalorder %s208, %s209
      %p223 = scmp.eq.s32.totalorder %s23, 1
      %p224 = por %p222, %p223
      %p226 = scmp.ne.s32.totalorder %s209, %s225
      %p227 = scmp.eq.s32.totalorder %s23, 0
      %p228 = por %p226, %p227
      %p229 = scmp.le.s32.totalorder 1, %s17
      %p230 = scmp.lt.s32.totalorder %s17, 3
      %p231 = pnand %p229, %p230
      %p232 = pneg %p231
      // Predicated region
      $region9: #{tpu_custom_call.1} parent=5 // pred_check
        _
      $region10: #{tpu_custom_call.1} parent=5 // pred_check_branch
        %234 = sbr.rel (%p231) target = $region12
      $region11: #{tpu_custom_call.1} parent=5 // pred_region
        %s235 = ssub.s32 %s17, 1
        // Predicated region
        $region13: #{tpu_custom_call.1} parent=11 // pred_check
          %p236 = pneg %p38
        $region14: #{tpu_custom_call.1} parent=11 // pred_check_branch
          %238 = sbr.rel (%p236) target = $region16
        $region15: #{tpu_custom_call.1} parent=11 // pred_region
          _
        $region16: #{tpu_custom_call.1} parent=11 // pred_fallthru
          _
        // Predicated region
        $region17: #{tpu_custom_call.1} parent=11 // pred_check
          %p239 = pneg %p59
        $region18: #{tpu_custom_call.1} parent=11 // pred_check_branch
          %241 = sbr.rel (%p239) target = $region20
        $region19: #{tpu_custom_call.1} parent=11 // pred_region
          _
        $region20: #{tpu_custom_call.1} parent=11 // pred_fallthru
          _
        // Predicated region
        $region21: #{tpu_custom_call.1} parent=11 // pred_check
          %p242 = pneg %p80
        $region22: #{tpu_custom_call.1} parent=11 // pred_check_branch
          %244 = sbr.rel (%p242) target = $region24
        $region23: #{tpu_custom_call.1} parent=11 // pred_region
          _
        $region24: #{tpu_custom_call.1} parent=11 // pred_fallthru
          _
        // Predicated region
        $region25: #{tpu_custom_call.1} parent=11 // pred_check
          %p245 = pneg %p127
        $region26: #{tpu_custom_call.1} parent=11 // pred_check_branch
          %247 = sbr.rel (%p245) target = $region28
        $region27: #{tpu_custom_call.1} parent=11 // pred_region
          _
        $region28: #{tpu_custom_call.1} parent=11 // pred_fallthru
          _
        // Predicated region
        $region29: #{tpu_custom_call.1} parent=11 // pred_check
          %p248 = pneg %p174
        $region30: #{tpu_custom_call.1} parent=11 // pred_check_branch
          %250 = sbr.rel (%p248) target = $region32
        $region31: #{tpu_custom_call.1} parent=11 // pred_region
          _
        $region32: #{tpu_custom_call.1} parent=11 // pred_fallthru
          _
        // Predicated region
        $region33: #{tpu_custom_call.1} parent=11 // pred_check
          %p251 = pneg %p195
        $region34: #{tpu_custom_call.1} parent=11 // pred_check_branch
          %253 = sbr.rel (%p251) target = $region36
        $region35: #{tpu_custom_call.1} parent=11 // pred_region
          _
        $region36: #{tpu_custom_call.1} parent=11 // pred_fallthru
          _
      $region12: #{tpu_custom_call.1} parent=5 // pred_fallthru
        _
      %p254 = scmp.lt.s32.totalorder %s17, 2
      // Predicated region
      $region37: #{tpu_custom_call.1} parent=5 // pred_check
        %p255 = pneg %p254
      $region38: #{tpu_custom_call.1} parent=5 // pred_check_branch
        %257 = sbr.rel (%p255) target = $region40
      $region39: #{tpu_custom_call.1} parent=5 // pred_region
        // Predicated region
        $region41: #{tpu_custom_call.1} parent=39 // pred_check
          %p258 = pneg %p100
        $region42: #{tpu_custom_call.1} parent=39 // pred_check_branch
          %260 = sbr.rel (%p258) target = $region44
        $region43: #{tpu_custom_call.1} parent=39 // pred_region
          %s261 = smul.u32 8, %s17
          %p262 = scmp.lt.s32.totalorder %s261, 15
          %s263 = scalar_select %p262, %s261, 15
          %s264 = smul.addr %s263, 32
          %s265 = smul.addr %s264, 4
          %s266 = scalar_lea.vmem %s3, %s265
          %s267 = smul.u32 8, %s17
        $region44: #{tpu_custom_call.1} parent=39 // pred_fallthru
          _
        // Predicated region
        $region45: #{tpu_custom_call.1} parent=39 // pred_check
          %p268 = pneg %p147
        $region46: #{tpu_custom_call.1} parent=39 // pred_check_branch
          %270 = sbr.rel (%p268) target = $region48
        $region47: #{tpu_custom_call.1} parent=39 // pred_region
          %s271 = smul.u32 8, %s17
          %p272 = scmp.lt.s32.totalorder %s271, 15
          %s273 = scalar_select %p272, %s271, 15
          %s274 = smul.addr %s273, 32
          %s275 = smul.addr %s274, 4
          %s276 = scalar_lea.vmem %s5, %s275
          %s277 = smul.u32 8, %s17
        $region48: #{tpu_custom_call.1} parent=39 // pred_fallthru
          _
      $region40: #{tpu_custom_call.1} parent=5 // pred_fallthru
        _
      %p278 = scmp.le.s32.totalorder 1, %s17
      %p279 = scmp.lt.s32.totalorder %s17, 3
      %p280 = pnand %p278, %p279
      %p281 = pneg %p280
      // Predicated region
      $region49: #{tpu_custom_call.1} parent=5 // pred_check
        _
      $region50: #{tpu_custom_call.1} parent=5 // pred_check_branch
        %283 = sbr.rel (%p280) target = $region52
      $region51: #{tpu_custom_call.1} parent=5 // pred_region
        %s284 = ssub.s32 %s17, 1
        %p285 = pneg %p38
        %p286 = pneg %p35
        %p287 = pneg %p59
        %p288 = pneg %p56
        %p289 = pneg %p80
        %p290 = pneg %p77
        %s291 = smul.u32 8, %s22
        %p292 = scmp.lt.s32.totalorder %s291, 15
        %s293 = scalar_select %p292, %s291, 15
        %s294 = smul.addr %s293, 32
        %s295 = smul.addr %s294, 4
        %s296 = scalar_lea.vmem %s3, %s295
        %p297 = pneg %p106
        %p298 = pneg %p103
        %p299 = pneg %p127
        %p300 = pneg %p124
        %s301 = smul.u32 8, %s22
        %p302 = scmp.lt.s32.totalorder %s301, 15
        %s303 = scalar_select %p302, %s301, 15
        %s304 = smul.addr %s303, 32
        %s305 = smul.addr %s304, 4
        %s306 = scalar_lea.vmem %s5, %s305
        %p307 = pneg %p153
        %p308 = pneg %p150
        %p309 = pneg %p174
        %p310 = pneg %p171
        %p311 = pneg %p195
        %p312 = pneg %p192
        %p313 = pneg %p221
        %p314 = pneg %p218
        %s315 = sand.u32 %s208, 1
        %s316 = scalar_lea.sflag [#allocation4], %s315
        %s317 = sand.u32 %s208, 1
        %s318 = smul.addr %s317, 128
        %s319 = scalar_lea.vmem [#allocation3], %s318
        %s320 = smul.u32 8, %s22
        %p321 = scmp.lt.s32.totalorder %s320, 15
        %s322 = scalar_select %p321, %s320, 15
        %s323 = smul.addr %s322, 32
        %s324 = smul.addr %s323, 4
        %s325 = scalar_lea.vmem %s3, %s324
        %s326 = smul.u32 8, %s22
        %s327 = smul.u32 8, %s22
        %p328 = scmp.lt.s32.totalorder %s327, 15
        %s329 = scalar_select %p328, %s327, 15
        %s330 = smul.addr %s329, 32
        %s331 = smul.addr %s330, 4
        %s332 = scalar_lea.vmem %s5, %s331
        %s333 = smul.u32 8, %s22
        %p335 = scmp.eq.s32.totalorder %s22, 0
        // Predicated region
        $region53: #{tpu_custom_call.1} parent=51 // pred_check
          %p336 = pneg %p335
        $region54: #{tpu_custom_call.1} parent=51 // pred_check_branch
          %338 = sbr.rel (%p336) target = $region56
        $region55: #{tpu_custom_call.1} parent=51 // pred_region
          %v339 = vld [vmem:[%s1] sm:$0xff]
          %v340 = vld [vmem:[%s1 + $0x8] sm:$0xff]
          %v341 = vld [vmem:[%s4] sm:$0xf]
          %v342 = vld [vmem:[%s4 + $0x4] sm:$0xf]
          %v343 = vld [vmem:[%s4 + $0x8] sm:$0xf]
          %v344 = vld [vmem:[%s4 + $0xc] sm:$0xf]
          %v345 = vld [vmem:[%s4 + $0x10] sm:$0xf]
          %v346 = vld [vmem:[%s4 + $0x14] sm:$0xf]
          %v347 = vld [vmem:[%s4 + $0x18] sm:$0xf]
          %v348 = vld [vmem:[%s4 + $0x1c] sm:$0xf]
          %v349 = vld [vmem:[%s4 + $0x20] sm:$0xf]
          %v350 = vld [vmem:[%s4 + $0x24] sm:$0xf]
          %v351 = vld [vmem:[%s4 + $0x28] sm:$0xf]
          %v352 = vld [vmem:[%s4 + $0x2c] sm:$0xf]
          %v353 = vld [vmem:[%s4 + $0x30] sm:$0xf]
          %v354 = vld [vmem:[%s4 + $0x34] sm:$0xf]
          %v355 = vld [vmem:[%s4 + $0x38] sm:$0xf]
          %v356 = vld [vmem:[%s4 + $0x3c] sm:$0xf]
          %v357 = vld [vmem:[%s4 + $0x40] sm:$0xf]
          %v358 = vld [vmem:[%s4 + $0x44] sm:$0xf]
          %v359 = vld [vmem:[%s4 + $0x48] sm:$0xf]
          %v360 = vld [vmem:[%s4 + $0x4c] sm:$0xf]
          %v361 = vld [vmem:[%s4 + $0x50] sm:$0xf]
          %v362 = vld [vmem:[%s4 + $0x54] sm:$0xf]
          %v363 = vld [vmem:[%s4 + $0x58] sm:$0xf]
          %v364 = vld [vmem:[%s4 + $0x5c] sm:$0xf]
          %v365 = vld [vmem:[%s4 + $0x60] sm:$0xf]
          %v366 = vld [vmem:[%s4 + $0x64] sm:$0xf]
          %v367 = vld [vmem:[%s4 + $0x68] sm:$0xf]
          %v368 = vld [vmem:[%s4 + $0x6c] sm:$0xf]
          %v369 = vld [vmem:[%s4 + $0x70] sm:$0xf]
          %v370 = vld [vmem:[%s4 + $0x74] sm:$0xf]
          %v371 = vld [vmem:[%s4 + $0x78] sm:$0xf]
          %v372 = vld [vmem:[%s4 + $0x7c] sm:$0xf]
          %v375 = vunpack.c.l.b16 %v339
          %v376 = vunpack.c.h.b16 %v339
          %v377 = vunpack.c.l.b16 %v340
          %v378 = vunpack.c.h.b16 %v340
          %v379 = vpack.c.b16 %v377, %v375
          %v380 = vpack.c.b16 %v378, %v376
          %v415 = vunpack.c.l.b16 %v341
          %v416 = vunpack.c.l.b16 %v342
          %v417 = vunpack.c.l.b16 %v343
          %v418 = vunpack.c.l.b16 %v344
          %v419 = vunpack.c.l.b16 %v345
          %v420 = vunpack.c.l.b16 %v346
          %v421 = vunpack.c.l.b16 %v347
          %v422 = vunpack.c.l.b16 %v348
          %v423 = vunpack.c.l.b16 %v349
          %v424 = vunpack.c.l.b16 %v350
          %v425 = vunpack.c.l.b16 %v351
          %v426 = vunpack.c.l.b16 %v352
          %v427 = vunpack.c.l.b16 %v353
          %v428 = vunpack.c.l.b16 %v354
          %v429 = vunpack.c.l.b16 %v355
          %v430 = vunpack.c.l.b16 %v356
          %v431 = vunpack.c.l.b16 %v357
          %v432 = vunpack.c.l.b16 %v358
          %v433 = vunpack.c.l.b16 %v359
          %v434 = vunpack.c.l.b16 %v360
          %v435 = vunpack.c.l.b16 %v361
          %v436 = vunpack.c.l.b16 %v362
          %v437 = vunpack.c.l.b16 %v363
          %v438 = vunpack.c.l.b16 %v364
          %v439 = vunpack.c.l.b16 %v365
          %v440 = vunpack.c.l.b16 %v366
          %v441 = vunpack.c.l.b16 %v367
          %v442 = vunpack.c.l.b16 %v368
          %v443 = vunpack.c.l.b16 %v369
          %v444 = vunpack.c.l.b16 %v370
          %v445 = vunpack.c.l.b16 %v371
          %v446 = vunpack.c.l.b16 %v372
          %v447 = vpack.c.b16 %v416, %v415
          %v448 = vpack.c.b16 %v418, %v417
          %v449 = vpack.c.b16 %v420, %v419
          %v450 = vpack.c.b16 %v422, %v421
          %v451 = vpack.c.b16 %v424, %v423
          %v452 = vpack.c.b16 %v426, %v425
          %v453 = vpack.c.b16 %v428, %v427
          %v454 = vpack.c.b16 %v430, %v429
          %v455 = vpack.c.b16 %v432, %v431
          %v456 = vpack.c.b16 %v434, %v433
          %v457 = vpack.c.b16 %v436, %v435
          %v458 = vpack.c.b16 %v438, %v437
          %v459 = vpack.c.b16 %v440, %v439
          %v460 = vpack.c.b16 %v442, %v441
          %v461 = vpack.c.b16 %v444, %v443
          %v462 = vpack.c.b16 %v446, %v445
          %479 = vmatprep.subr.bf16.mxu0 0
          %480 = vmatpush1.bf16.msra.mxu0 %v447
          %481 = vmatprep.subr.bf16.mxu0 0
          %482 = vmatpush1.bf16.msra.mxu0 %v448
          %483 = vmatprep.subr.bf16.mxu0 0
          %484 = vmatpush1.bf16.msra.mxu0 %v449
          %485 = vmatprep.subr.bf16.mxu0 0
          %486 = vmatpush1.bf16.msra.mxu0 %v450
          %487 = vmatprep.subr.bf16.mxu0 0
          %488 = vmatpush1.bf16.msra.mxu0 %v451
          %489 = vmatprep.subr.bf16.mxu0 0
          %490 = vmatpush1.bf16.msra.mxu0 %v452
          %491 = vmatprep.subr.bf16.mxu0 0
          %492 = vmatpush1.bf16.msra.mxu0 %v453
          %493 = vmatprep.subr.bf16.mxu0 0
          %494 = vmatpush1.bf16.msra.mxu0 %v454
          %495 = vmatprep.subr.bf16.mxu0 0
          %496 = vmatpush1.bf16.msra.mxu0 %v455
          %497 = vmatprep.subr.bf16.mxu0 0
          %498 = vmatpush1.bf16.msra.mxu0 %v456
          %499 = vmatprep.subr.bf16.mxu0 0
          %500 = vmatpush1.bf16.msra.mxu0 %v457
          %501 = vmatprep.subr.bf16.mxu0 0
          %502 = vmatpush1.bf16.msra.mxu0 %v458
          %503 = vmatprep.subr.bf16.mxu0 0
          %504 = vmatpush1.bf16.msra.mxu0 %v459
          %505 = vmatprep.subr.bf16.mxu0 0
          %506 = vmatpush1.bf16.msra.mxu0 %v460
          %507 = vmatprep.subr.bf16.mxu0 0
          %508 = vmatpush1.bf16.msra.mxu0 %v461
          %509 = vmatprep.subr.bf16.mxu0 0
          %510 = vmatpush1.bf16.msra.mxu0 %v462
          %511 = vmatprep.mubr.bf16.mxu0 %v380
          %512 = vmatmul.mubr.bf16.gmra.mrb[0].mxu0 %v379
          %v513 = vpop.f32.mrb[0].mxu0
          %v514 = vadd.f32 0.0, %v513
          %v515 = vpop.f32.mrb[0].mxu0
          %v516 = vpop.f32.mrb[0].mxu0
          %v517 = vadd.f32 0.0, %v516
          %v518 = vpop.f32.mrb[0].mxu0
          %519 = vdwg.mxu0
          %520 = vst [vmem:[#allocation2] sm:$0xff] %v514
          %521 = vst [vmem:[#allocation2 + $0x8] sm:$0xff] %v517
        $region56: #{tpu_custom_call.1} parent=51 // pred_fallthru
          _
        %v522 = vld [vmem:[#allocation2] sm:$0xff]
        %v523 = vld [vmem:[#allocation2 + $0x8] sm:$0xff]
        %v524 = vld [vmem:[%s0] sm:$0xff]
        %v525 = vld [vmem:[%s0 + $0x8] sm:$0xff]
        %v526 = vld [vmem:[%s2] sm:$0xff]
        %v527 = vld [vmem:[%s2 + $0x8] sm:$0xff]
        %v528 = vld [vmem:[%s6] sm:$0xff]
        %v529 = vld [vmem:[%s6 + $0x8] sm:$0xff]
        %v530 = vld [vmem:[%s7] sm:$0xff]
        %v531 = vld [vmem:[%s325] sm:$0xf]
        %v532 = vld [vmem:[%s325 + $0x4] sm:$0xf]
        %v533 = vld [vmem:[%s325 + $0x8] sm:$0xf]
        %v534 = vld [vmem:[%s325 + $0xc] sm:$0xf]
        %v535 = vld [vmem:[%s325 + $0x10] sm:$0xf]
        %v536 = vld [vmem:[%s325 + $0x14] sm:$0xf]
        %v537 = vld [vmem:[%s325 + $0x18] sm:$0xf]
        %v538 = vld [vmem:[%s325 + $0x1c] sm:$0xf]
        %v539 = vld [vmem:[%s325 + $0x20] sm:$0xf]
        %v540 = vld [vmem:[%s325 + $0x24] sm:$0xf]
        %v541 = vld [vmem:[%s325 + $0x28] sm:$0xf]
        %v542 = vld [vmem:[%s325 + $0x2c] sm:$0xf]
        %v543 = vld [vmem:[%s325 + $0x30] sm:$0xf]
        %v544 = vld [vmem:[%s325 + $0x34] sm:$0xf]
        %v545 = vld [vmem:[%s325 + $0x38] sm:$0xf]
        %v546 = vld [vmem:[%s325 + $0x3c] sm:$0xf]
        %v547 = vld [vmem:[%s325 + $0x40] sm:$0xf]
        %v548 = vld [vmem:[%s325 + $0x44] sm:$0xf]
        %v549 = vld [vmem:[%s325 + $0x48] sm:$0xf]
        %v550 = vld [vmem:[%s325 + $0x4c] sm:$0xf]
        %v551 = vld [vmem:[%s325 + $0x50] sm:$0xf]
        %v552 = vld [vmem:[%s325 + $0x54] sm:$0xf]
        %v553 = vld [vmem:[%s325 + $0x58] sm:$0xf]
        %v554 = vld [vmem:[%s325 + $0x5c] sm:$0xf]
        %v555 = vld [vmem:[%s325 + $0x60] sm:$0xf]
        %v556 = vld [vmem:[%s325 + $0x64] sm:$0xf]
        %v557 = vld [vmem:[%s325 + $0x68] sm:$0xf]
        %v558 = vld [vmem:[%s325 + $0x6c] sm:$0xf]
        %v559 = vld [vmem:[%s325 + $0x70] sm:$0xf]
        %v560 = vld [vmem:[%s325 + $0x74] sm:$0xf]
        %v561 = vld [vmem:[%s325 + $0x78] sm:$0xf]
        %v562 = vld [vmem:[%s325 + $0x7c] sm:$0xf]
        %v565 = vunpack.c.l.b16 %v524
        %v566 = vunpack.c.h.b16 %v524
        %v567 = vunpack.c.l.b16 %v525
        %v568 = vunpack.c.h.b16 %v525
        %v569 = vpack.c.b16 %v567, %v565
        %v570 = vpack.c.b16 %v568, %v566
        %v605 = vunpack.c.l.b16 %v531
        %v606 = vunpack.c.l.b16 %v532
        %v607 = vunpack.c.l.b16 %v533
        %v608 = vunpack.c.l.b16 %v534
        %v609 = vunpack.c.l.b16 %v535
        %v610 = vunpack.c.l.b16 %v536
        %v611 = vunpack.c.l.b16 %v537
        %v612 = vunpack.c.l.b16 %v538
        %v613 = vunpack.c.l.b16 %v539
        %v614 = vunpack.c.l.b16 %v540
        %v615 = vunpack.c.l.b16 %v541
        %v616 = vunpack.c.l.b16 %v542
        %v617 = vunpack.c.l.b16 %v543
        %v618 = vunpack.c.l.b16 %v544
        %v619 = vunpack.c.l.b16 %v545
        %v620 = vunpack.c.l.b16 %v546
        %v621 = vunpack.c.l.b16 %v547
        %v622 = vunpack.c.l.b16 %v548
        %v623 = vunpack.c.l.b16 %v549
        %v624 = vunpack.c.l.b16 %v550
        %v625 = vunpack.c.l.b16 %v551
        %v626 = vunpack.c.l.b16 %v552
        %v627 = vunpack.c.l.b16 %v553
        %v628 = vunpack.c.l.b16 %v554
        %v629 = vunpack.c.l.b16 %v555
        %v630 = vunpack.c.l.b16 %v556
        %v631 = vunpack.c.l.b16 %v557
        %v632 = vunpack.c.l.b16 %v558
        %v633 = vunpack.c.l.b16 %v559
        %v634 = vunpack.c.l.b16 %v560
        %v635 = vunpack.c.l.b16 %v561
        %v636 = vunpack.c.l.b16 %v562
        %v637 = vpack.c.b16 %v606, %v605
        %v638 = vpack.c.b16 %v608, %v607
        %v639 = vpack.c.b16 %v610, %v609
        %v640 = vpack.c.b16 %v612, %v611
        %v641 = vpack.c.b16 %v614, %v613
        %v642 = vpack.c.b16 %v616, %v615
        %v643 = vpack.c.b16 %v618, %v617
        %v644 = vpack.c.b16 %v620, %v619
        %v645 = vpack.c.b16 %v622, %v621
        %v646 = vpack.c.b16 %v624, %v623
        %v647 = vpack.c.b16 %v626, %v625
        %v648 = vpack.c.b16 %v628, %v627
        %v649 = vpack.c.b16 %v630, %v629
        %v650 = vpack.c.b16 %v632, %v631
        %v651 = vpack.c.b16 %v634, %v633
        %v652 = vpack.c.b16 %v636, %v635
        %669 = vmatprep.subr.bf16.mxu0 0
        %670 = vmatpush1.bf16.msra.mxu0 %v637
        %671 = vmatprep.subr.bf16.mxu0 0
        %672 = vmatpush1.bf16.msra.mxu0 %v638
        %673 = vmatprep.subr.bf16.mxu0 0
        %674 = vmatpush1.bf16.msra.mxu0 %v639
        %675 = vmatprep.subr.bf16.mxu0 0
        %676 = vmatpush1.bf16.msra.mxu0 %v640
        %677 = vmatprep.subr.bf16.mxu0 0
        %678 = vmatpush1.bf16.msra.mxu0 %v641
        %679 = vmatprep.subr.bf16.mxu0 0
        %680 = vmatpush1.bf16.msra.mxu0 %v642
        %681 = vmatprep.subr.bf16.mxu0 0
        %682 = vmatpush1.bf16.msra.mxu0 %v643
        %683 = vmatprep.subr.bf16.mxu0 0
        %684 = vmatpush1.bf16.msra.mxu0 %v644
        %685 = vmatprep.subr.bf16.mxu0 0
        %686 = vmatpush1.bf16.msra.mxu0 %v645
        %687 = vmatprep.subr.bf16.mxu0 0
        %688 = vmatpush1.bf16.msra.mxu0 %v646
        %689 = vmatprep.subr.bf16.mxu0 0
        %690 = vmatpush1.bf16.msra.mxu0 %v647
        %691 = vmatprep.subr.bf16.mxu0 0
        %692 = vmatpush1.bf16.msra.mxu0 %v648
        %693 = vmatprep.subr.bf16.mxu0 0
        %694 = vmatpush1.bf16.msra.mxu0 %v649
        %695 = vmatprep.subr.bf16.mxu0 0
        %696 = vmatpush1.bf16.msra.mxu0 %v650
        %697 = vmatprep.subr.bf16.mxu0 0
        %698 = vmatpush1.bf16.msra.mxu0 %v651
        %699 = vmatprep.subr.bf16.mxu0 0
        %700 = vmatpush1.bf16.msra.mxu0 %v652
        %701 = vmatprep.mubr.bf16.mxu0 %v570
        %702 = vmatmul.mubr.bf16.gmra.mrb[0].mxu0 %v569
        %v703 = vpop.f32.mrb[0].mxu0
        %v704 = vadd.f32 0.0, %v703
        %v705 = vpop.f32.mrb[0].mxu0
        %v706 = vpop.f32.mrb[0].mxu0
        %v707 = vadd.f32 0.0, %v706
        %v708 = vpop.f32.mrb[0].mxu0
        %709 = vdwg.mxu0
        %v710 = vld [vmem:[%s332] sm:$0xf]
        %v711 = vld [vmem:[%s332 + $0x4] sm:$0xf]
        %v712 = vld [vmem:[%s332 + $0x8] sm:$0xf]
        %v713 = vld [vmem:[%s332 + $0xc] sm:$0xf]
        %v714 = vld [vmem:[%s332 + $0x10] sm:$0xf]
        %v715 = vld [vmem:[%s332 + $0x14] sm:$0xf]
        %v716 = vld [vmem:[%s332 + $0x18] sm:$0xf]
        %v717 = vld [vmem:[%s332 + $0x1c] sm:$0xf]
        %v718 = vld [vmem:[%s332 + $0x20] sm:$0xf]
        %v719 = vld [vmem:[%s332 + $0x24] sm:$0xf]
        %v720 = vld [vmem:[%s332 + $0x28] sm:$0xf]
        %v721 = vld [vmem:[%s332 + $0x2c] sm:$0xf]
        %v722 = vld [vmem:[%s332 + $0x30] sm:$0xf]
        %v723 = vld [vmem:[%s332 + $0x34] sm:$0xf]
        %v724 = vld [vmem:[%s332 + $0x38] sm:$0xf]
        %v725 = vld [vmem:[%s332 + $0x3c] sm:$0xf]
        %v726 = vld [vmem:[%s332 + $0x40] sm:$0xf]
        %v727 = vld [vmem:[%s332 + $0x44] sm:$0xf]
        %v728 = vld [vmem:[%s332 + $0x48] sm:$0xf]
        %v729 = vld [vmem:[%s332 + $0x4c] sm:$0xf]
        %v730 = vld [vmem:[%s332 + $0x50] sm:$0xf]
        %v731 = vld [vmem:[%s332 + $0x54] sm:$0xf]
        %v732 = vld [vmem:[%s332 + $0x58] sm:$0xf]
        %v733 = vld [vmem:[%s332 + $0x5c] sm:$0xf]
        %v734 = vld [vmem:[%s332 + $0x60] sm:$0xf]
        %v735 = vld [vmem:[%s332 + $0x64] sm:$0xf]
        %v736 = vld [vmem:[%s332 + $0x68] sm:$0xf]
        %v737 = vld [vmem:[%s332 + $0x6c] sm:$0xf]
        %v738 = vld [vmem:[%s332 + $0x70] sm:$0xf]
        %v739 = vld [vmem:[%s332 + $0x74] sm:$0xf]
        %v740 = vld [vmem:[%s332 + $0x78] sm:$0xf]
        %v741 = vld [vmem:[%s332 + $0x7c] sm:$0xf]
        %v744 = vunpack.c.l.b16 %v526
        %v745 = vunpack.c.h.b16 %v526
        %v746 = vunpack.c.l.b16 %v527
        %v747 = vunpack.c.h.b16 %v527
        %v748 = vpack.c.b16 %v746, %v744
        %v749 = vpack.c.b16 %v747, %v745
        %v784 = vunpack.c.l.b16 %v710
        %v785 = vunpack.c.l.b16 %v711
        %v786 = vunpack.c.l.b16 %v712
        %v787 = vunpack.c.l.b16 %v713
        %v788 = vunpack.c.l.b16 %v714
        %v789 = vunpack.c.l.b16 %v715
        %v790 = vunpack.c.l.b16 %v716
        %v791 = vunpack.c.l.b16 %v717
        %v792 = vunpack.c.l.b16 %v718
        %v793 = vunpack.c.l.b16 %v719
        %v794 = vunpack.c.l.b16 %v720
        %v795 = vunpack.c.l.b16 %v721
        %v796 = vunpack.c.l.b16 %v722
        %v797 = vunpack.c.l.b16 %v723
        %v798 = vunpack.c.l.b16 %v724
        %v799 = vunpack.c.l.b16 %v725
        %v800 = vunpack.c.l.b16 %v726
        %v801 = vunpack.c.l.b16 %v727
        %v802 = vunpack.c.l.b16 %v728
        %v803 = vunpack.c.l.b16 %v729
        %v804 = vunpack.c.l.b16 %v730
        %v805 = vunpack.c.l.b16 %v731
        %v806 = vunpack.c.l.b16 %v732
        %v807 = vunpack.c.l.b16 %v733
        %v808 = vunpack.c.l.b16 %v734
        %v809 = vunpack.c.l.b16 %v735
        %v810 = vunpack.c.l.b16 %v736
        %v811 = vunpack.c.l.b16 %v737
        %v812 = vunpack.c.l.b16 %v738
        %v813 = vunpack.c.l.b16 %v739
        %v814 = vunpack.c.l.b16 %v740
        %v815 = vunpack.c.l.b16 %v741
        %v816 = vpack.c.b16 %v785, %v784
        %v817 = vpack.c.b16 %v787, %v786
        %v818 = vpack.c.b16 %v789, %v788
        %v819 = vpack.c.b16 %v791, %v790
        %v820 = vpack.c.b16 %v793, %v792
        %v821 = vpack.c.b16 %v795, %v794
        %v822 = vpack.c.b16 %v797, %v796
        %v823 = vpack.c.b16 %v799, %v798
        %v824 = vpack.c.b16 %v801, %v800
        %v825 = vpack.c.b16 %v803, %v802
        %v826 = vpack.c.b16 %v805, %v804
        %v827 = vpack.c.b16 %v807, %v806
        %v828 = vpack.c.b16 %v809, %v808
        %v829 = vpack.c.b16 %v811, %v810
        %v830 = vpack.c.b16 %v813, %v812
        %v831 = vpack.c.b16 %v815, %v814
        %848 = vmatprep.subr.bf16.mxu0 0
        %849 = vmatpush1.bf16.msra.mxu0 %v816
        %850 = vmatprep.subr.bf16.mxu0 0
        %851 = vmatpush1.bf16.msra.mxu0 %v817
        %852 = vmatprep.subr.bf16.mxu0 0
        %853 = vmatpush1.bf16.msra.mxu0 %v818
        %854 = vmatprep.subr.bf16.mxu0 0
        %855 = vmatpush1.bf16.msra.mxu0 %v819
        %856 = vmatprep.subr.bf16.mxu0 0
        %857 = vmatpush1.bf16.msra.mxu0 %v820
        %858 = vmatprep.subr.bf16.mxu0 0
        %859 = vmatpush1.bf16.msra.mxu0 %v821
        %860 = vmatprep.subr.bf16.mxu0 0
        %861 = vmatpush1.bf16.msra.mxu0 %v822
        %862 = vmatprep.subr.bf16.mxu0 0
        %863 = vmatpush1.bf16.msra.mxu0 %v823
        %864 = vmatprep.subr.bf16.mxu0 0
        %865 = vmatpush1.bf16.msra.mxu0 %v824
        %866 = vmatprep.subr.bf16.mxu0 0
        %867 = vmatpush1.bf16.msra.mxu0 %v825
        %868 = vmatprep.subr.bf16.mxu0 0
        %869 = vmatpush1.bf16.msra.mxu0 %v826
        %870 = vmatprep.subr.bf16.mxu0 0
        %871 = vmatpush1.bf16.msra.mxu0 %v827
        %872 = vmatprep.subr.bf16.mxu0 0
        %873 = vmatpush1.bf16.msra.mxu0 %v828
        %874 = vmatprep.subr.bf16.mxu0 0
        %875 = vmatpush1.bf16.msra.mxu0 %v829
        %876 = vmatprep.subr.bf16.mxu0 0
        %877 = vmatpush1.bf16.msra.mxu0 %v830
        %878 = vmatprep.subr.bf16.mxu0 0
        %879 = vmatpush1.bf16.msra.mxu0 %v831
        %880 = vmatprep.mubr.bf16.mxu0 %v749
        %881 = vmatmul.mubr.bf16.gmra.mrb[0].mxu0 %v748
        %v882 = vpop.f32.mrb[0].mxu0
        %v883 = vadd.f32 0.0, %v882
        %v884 = vpop.f32.mrb[0].mxu0
        %v885 = vpop.f32.mrb[0].mxu0
        %v886 = vadd.f32 0.0, %v885
        %v887 = vpop.f32.mrb[0].mxu0
        %888 = vdwg.mxu0
        %vm889 = vcmask 130048
        %v891 = vsel %vm889, %v704, 0
        %v894 = vsel %vm889, %v707, 0
        %896 = vmatprep.subr.mxu0 0.0
        %897 = vmatpush1.msra.mxu0 %v528
        %898 = vmatprep.subr.mxu0 0.0
        %899 = vmatpush1.msra.mxu0 %v529
        %900 = vmatprep.subr.mxu0 0.0
        %901 = vmatpush1.msra.mxu0 0.0
        %902 = vmatprep.subr.mxu0 0.0
        %903 = vmatpush1.msra.mxu0 0.0
        %904 = vmatprep.subr.mxu0 0.0
        %905 = vmatpush1.msra.mxu0 0.0
        %906 = vmatprep.subr.mxu0 0.0
        %907 = vmatpush1.msra.mxu0 0.0
        %908 = vmatprep.subr.mxu0 0.0
        %909 = vmatpush1.msra.mxu0 0.0
        %910 = vmatprep.subr.mxu0 0.0
        %911 = vmatpush1.msra.mxu0 0.0
        %912 = vmatprep.subr.mxu0 0.0
        %913 = vmatpush1.msra.mxu0 0.0
        %914 = vmatprep.subr.mxu0 0.0
        %915 = vmatpush1.msra.mxu0 0.0
        %916 = vmatprep.subr.mxu0 0.0
        %917 = vmatpush1.msra.mxu0 0.0
        %918 = vmatprep.subr.mxu0 0.0
        %919 = vmatpush1.msra.mxu0 0.0
        %920 = vmatprep.subr.mxu0 0.0
        %921 = vmatpush1.msra.mxu0 0.0
        %922 = vmatprep.subr.mxu0 0.0
        %923 = vmatpush1.msra.mxu0 0.0
        %924 = vmatprep.subr.mxu0 0.0
        %925 = vmatpush1.msra.mxu0 0.0
        %926 = vmatprep.subr.mxu0 0.0
        %927 = vmatpush1.msra.mxu0 0.0
        %928 = vmatprep.subr.mxu0 0.0
        %929 = vmatpush1.msra.mxu0 0.0
        %930 = vmatprep.subr.mxu0 0.0
        %931 = vmatpush1.msra.mxu0 0.0
        %932 = vmatprep.subr.mxu0 0.0
        %933 = vmatpush1.msra.mxu0 0.0
        %934 = vmatprep.subr.mxu0 0.0
        %935 = vmatpush1.msra.mxu0 0.0
        %936 = vmatprep.subr.mxu0 0.0
        %937 = vmatpush1.msra.mxu0 0.0
        %938 = vmatprep.subr.mxu0 0.0
        %939 = vmatpush1.msra.mxu0 0.0
        %940 = vmatprep.subr.mxu0 0.0
        %941 = vmatpush1.msra.mxu0 0.0
        %942 = vmatprep.subr.mxu0 0.0
        %943 = vmatpush1.msra.mxu0 0.0
        %944 = vmatprep.subr.mxu0 0.0
        %945 = vmatpush1.msra.mxu0 0.0
        %946 = vmatprep.subr.mxu0 0.0
        %947 = vmatpush1.msra.mxu0 0.0
        %948 = vmatprep.subr.mxu0 0.0
        %949 = vmatpush1.msra.mxu0 0.0
        %950 = vmatprep.subr.mxu0 0.0
        %951 = vmatpush1.msra.mxu0 0.0
        %952 = vmatprep.subr.mxu0 0.0
        %953 = vmatpush1.msra.mxu0 0.0
        %954 = vmatprep.subr.mxu0 0.0
        %955 = vmatpush1.msra.mxu0 0.0
        %956 = vmatprep.subr.mxu0 0.0
        %957 = vmatpush1.msra.mxu0 0.0
        %958 = vmatprep.subr.mxu0 0.0
        %959 = vmatpush1.msra.mxu0 0.0
        %960 = vmatprep.mubr.f32.mxu0 0.0
        %961 = vmatmul.mubr.f32.gmra.mrb[0].mxu0 %v891
        %v962 = vpop.f32.mrb[0].mxu0
        %v963 = vadd.f32 0.0, %v962
        %v964 = vpop.f32.mrb[0].mxu0
        %965 = vmatprep.mubr.f32.mxu0 0.0
        %966 = vmatmul.mubr.f32.gmra.mrb[0].mxu0 %v894
        %v967 = vpop.f32.mrb[0].mxu0
        %v968 = vadd.f32 0.0, %v967
        %v969 = vpop.f32.mrb[0].mxu0
        %970 = vdwg.mxu0
        %v971 = vadd.f32 %v522, %v963
        %v972 = vadd.f32 %v523, %v968
        %vm973 = vcmask 64512
        %v975 = vsel %vm973, %v883, 0
        %v978 = vsel %vm973, %v886, 0
        %980 = vmatprep.subr.mxu0 0.0
        %981 = vmatpush1.msra.mxu0 %v530
        %982 = vmatprep.subr.mxu0 0.0
        %983 = vmatpush1.msra.mxu0 0.0
        %984 = vmatprep.subr.mxu0 0.0
        %985 = vmatpush1.msra.mxu0 0.0
        %986 = vmatprep.subr.mxu0 0.0
        %987 = vmatpush1.msra.mxu0 0.0
        %988 = vmatprep.subr.mxu0 0.0
        %989 = vmatpush1.msra.mxu0 0.0
        %990 = vmatprep.subr.mxu0 0.0
        %991 = vmatpush1.msra.mxu0 0.0
        %992 = vmatprep.subr.mxu0 0.0
        %993 = vmatpush1.msra.mxu0 0.0
        %994 = vmatprep.subr.mxu0 0.0
        %995 = vmatpush1.msra.mxu0 0.0
        %996 = vmatprep.subr.mxu0 0.0
        %997 = vmatpush1.msra.mxu0 0.0
        %998 = vmatprep.subr.mxu0 0.0
        %999 = vmatpush1.msra.mxu0 0.0
        %1000 = vmatprep.subr.mxu0 0.0
        %1001 = vmatpush1.msra.mxu0 0.0
        %1002 = vmatprep.subr.mxu0 0.0
        %1003 = vmatpush1.msra.mxu0 0.0
        %1004 = vmatprep.subr.mxu0 0.0
        %1005 = vmatpush1.msra.mxu0 0.0
        %1006 = vmatprep.subr.mxu0 0.0
        %1007 = vmatpush1.msra.mxu0 0.0
        %1008 = vmatprep.subr.mxu0 0.0
        %1009 = vmatpush1.msra.mxu0 0.0
        %1010 = vmatprep.subr.mxu0 0.0
        %1011 = vmatpush1.msra.mxu0 0.0
        %1012 = vmatprep.subr.mxu0 0.0
        %1013 = vmatpush1.msra.mxu0 0.0
        %1014 = vmatprep.subr.mxu0 0.0
        %1015 = vmatpush1.msra.mxu0 0.0
        %1016 = vmatprep.subr.mxu0 0.0
        %1017 = vmatpush1.msra.mxu0 0.0
        %1018 = vmatprep.subr.mxu0 0.0
        %1019 = vmatpush1.msra.mxu0 0.0
        %1020 = vmatprep.subr.mxu0 0.0
        %1021 = vmatpush1.msra.mxu0 0.0
        %1022 = vmatprep.subr.mxu0 0.0
        %1023 = vmatpush1.msra.mxu0 0.0
        %1024 = vmatprep.subr.mxu0 0.0
        %1025 = vmatpush1.msra.mxu0 0.0
        %1026 = vmatprep.subr.mxu0 0.0
        %1027 = vmatpush1.msra.mxu0 0.0
        %1028 = vmatprep.subr.mxu0 0.0
        %1029 = vmatpush1.msra.mxu0 0.0
        %1030 = vmatprep.subr.mxu0 0.0
        %1031 = vmatpush1.msra.mxu0 0.0
        %1032 = vmatprep.subr.mxu0 0.0
        %1033 = vmatpush1.msra.mxu0 0.0
        %1034 = vmatprep.subr.mxu0 0.0
        %1035 = vmatpush1.msra.mxu0 0.0
        %1036 = vmatprep.subr.mxu0 0.0
        %1037 = vmatpush1.msra.mxu0 0.0
        %1038 = vmatprep.subr.mxu0 0.0
        %1039 = vmatpush1.msra.mxu0 0.0
        %1040 = vmatprep.subr.mxu0 0.0
        %1041 = vmatpush1.msra.mxu0 0.0
        %1042 = vmatprep.subr.mxu0 0.0
        %1043 = vmatpush1.msra.mxu0 0.0
        %1044 = vmatprep.mubr.f32.mxu0 0.0
        %1045 = vmatmul.mubr.f32.gmra.mrb[0].mxu0 %v975
        %v1046 = vpop.f32.mrb[0].mxu0
        %v1047 = vadd.f32 0.0, %v1046
        %v1048 = vpop.f32.mrb[0].mxu0
        %1049 = vmatprep.mubr.f32.mxu0 0.0
        %1050 = vmatmul.mubr.f32.gmra.mrb[0].mxu0 %v978
        %v1051 = vpop.f32.mrb[0].mxu0
        %v1052 = vadd.f32 0.0, %v1051
        %v1053 = vpop.f32.mrb[0].mxu0
        %1054 = vdwg.mxu0
        %v1055 = vadd.f32 %v971, %v1047
        %v1056 = vadd.f32 %v972, %v1052
        %v1059 = vcombine.high %v1055, %v1055
        %v1061 = vunpack.c.l.s4 1966171168
        %v1062 = vunpack.c.0.s8 %v1061
        %v1063 = vlaneseq
        %v1064 = vshrl.u32 %v1063, 7
        %v1065 = vsub.s32 %v1062, %v1064
        %v1066 = vrot.slane %v1055, %v1065
        %v1068 = vunpack.c.l.s4 1966171168
        %v1069 = vunpack.c.0.s8 %v1068
        %v1070 = vlaneseq
        %v1071 = vshrl.u32 %v1070, 7
        %v1072 = vsub.s32 %v1069, %v1071
        %v1073 = vrot.slane %v1059, %v1072
        %v1074 = vcombine.high %v1066, %v1066
        %v1075 = vcombine.high %v1073, %v1073
        %v1077 = vunpack.c.l.s4 1966171168
        %v1078 = vunpack.c.0.s8 %v1077
        %v1079 = vlaneseq
        %v1080 = vshrl.u32 %v1079, 7
        %v1081 = vsub.s32 %v1078, %v1080
        %v1082 = vrot.slane %v1066, %v1081
        %v1084 = vunpack.c.l.s4 1966171168
        %v1085 = vunpack.c.0.s8 %v1084
        %v1086 = vlaneseq
        %v1087 = vshrl.u32 %v1086, 7
        %v1088 = vsub.s32 %v1085, %v1087
        %v1089 = vrot.slane %v1073, %v1088
        %v1091 = vunpack.c.l.s4 1966171168
        %v1092 = vunpack.c.0.s8 %v1091
        %v1093 = vlaneseq
        %v1094 = vshrl.u32 %v1093, 7
        %v1095 = vsub.s32 %v1092, %v1094
        %v1096 = vrot.slane %v1074, %v1095
        %v1098 = vunpack.c.l.s4 1966171168
        %v1099 = vunpack.c.0.s8 %v1098
        %v1100 = vlaneseq
        %v1101 = vshrl.u32 %v1100, 7
        %v1102 = vsub.s32 %v1099, %v1101
        %v1103 = vrot.slane %v1075, %v1102
        %v1104 = vcombine.high %v1082, %v1082
        %v1105 = vcombine.high %v1089, %v1089
        %v1106 = vcombine.high %v1096, %v1096
        %v1107 = vcombine.high %v1103, %v1103
        %v1108 = vcombine.high %v1056, %v1056
        %v1110 = vunpack.c.l.s4 1966171168
        %v1111 = vunpack.c.0.s8 %v1110
        %v1112 = vlaneseq
        %v1113 = vshrl.u32 %v1112, 7
        %v1114 = vsub.s32 %v1111, %v1113
        %v1115 = vrot.slane %v1056, %v1114
        %v1117 = vunpack.c.l.s4 1966171168
        %v1118 = vunpack.c.0.s8 %v1117
        %v1119 = vlaneseq
        %v1120 = vshrl.u32 %v1119, 7
        %v1121 = vsub.s32 %v1118, %v1120
        %v1122 = vrot.slane %v1108, %v1121
        %v1123 = vcombine.high %v1115, %v1115
        %v1124 = vcombine.high %v1122, %v1122
        %v1126 = vunpack.c.l.s4 1966171168
        %v1127 = vunpack.c.0.s8 %v1126
        %v1128 = vlaneseq
        %v1129 = vshrl.u32 %v1128, 7
        %v1130 = vsub.s32 %v1127, %v1129
        %v1131 = vrot.slane %v1115, %v1130
        %v1133 = vunpack.c.l.s4 1966171168
        %v1134 = vunpack.c.0.s8 %v1133
        %v1135 = vlaneseq
        %v1136 = vshrl.u32 %v1135, 7
        %v1137 = vsub.s32 %v1134, %v1136
        %v1138 = vrot.slane %v1122, %v1137
        %v1140 = vunpack.c.l.s4 1966171168
        %v1141 = vunpack.c.0.s8 %v1140
        %v1142 = vlaneseq
        %v1143 = vshrl.u32 %v1142, 7
        %v1144 = vsub.s32 %v1141, %v1143
        %v1145 = vrot.slane %v1123, %v1144
        %v1147 = vunpack.c.l.s4 1966171168
        %v1148 = vunpack.c.0.s8 %v1147
        %v1149 = vlaneseq
        %v1150 = vshrl.u32 %v1149, 7
        %v1151 = vsub.s32 %v1148, %v1150
        %v1152 = vrot.slane %v1124, %v1151
        %v1153 = vcombine.high %v1131, %v1131
        %v1154 = vcombine.high %v1138, %v1138
        %v1155 = vcombine.high %v1145, %v1145
        %v1156 = vcombine.high %v1152, %v1152
        %1173 = vst [vmem:[%s319] sm:$0x1] %v1082
        %1174 = vst [vmem:[%s319 + $0x8] sm:$0x1] %v1096
        %1175 = vst [vmem:[%s319 + $0x10] sm:$0x1] %v1104
        %1176 = vst [vmem:[%s319 + $0x18] sm:$0x1] %v1106
        %1177 = vst [vmem:[%s319 + $0x20] sm:$0x1] %v1089
        %1178 = vst [vmem:[%s319 + $0x28] sm:$0x1] %v1103
        %1179 = vst [vmem:[%s319 + $0x30] sm:$0x1] %v1105
        %1180 = vst [vmem:[%s319 + $0x38] sm:$0x1] %v1107
        %1181 = vst [vmem:[%s319 + $0x40] sm:$0x1] %v1131
        %1182 = vst [vmem:[%s319 + $0x48] sm:$0x1] %v1145
        %1183 = vst [vmem:[%s319 + $0x50] sm:$0x1] %v1153
        %1184 = vst [vmem:[%s319 + $0x58] sm:$0x1] %v1155
        %1185 = vst [vmem:[%s319 + $0x60] sm:$0x1] %v1138
        %1186 = vst [vmem:[%s319 + $0x68] sm:$0x1] %v1152
        %1187 = vst [vmem:[%s319 + $0x70] sm:$0x1] %v1154
        %1188 = vst [vmem:[%s319 + $0x78] sm:$0x1] %v1156
        %s1189 = scalar_lea.vmem %s325, 128
        %v1190 = vld [vmem:[%s1189] sm:$0xf]
        %v1191 = vld [vmem:[%s1189 + $0x4] sm:$0xf]
        %v1192 = vld [vmem:[%s1189 + $0x8] sm:$0xf]
        %v1193 = vld [vmem:[%s1189 + $0xc] sm:$0xf]
        %v1194 = vld [vmem:[%s1189 + $0x10] sm:$0xf]
        %v1195 = vld [vmem:[%s1189 + $0x14] sm:$0xf]
        %v1196 = vld [vmem:[%s1189 + $0x18] sm:$0xf]
        %v1197 = vld [vmem:[%s1189 + $0x1c] sm:$0xf]
        %v1198 = vld [vmem:[%s1189 + $0x20] sm:$0xf]
        %v1199 = vld [vmem:[%s1189 + $0x24] sm:$0xf]
        %v1200 = vld [vmem:[%s1189 + $0x28] sm:$0xf]
        %v1201 = vld [vmem:[%s1189 + $0x2c] sm:$0xf]
        %v1202 = vld [vmem:[%s1189 + $0x30] sm:$0xf]
        %v1203 = vld [vmem:[%s1189 + $0x34] sm:$0xf]
        %v1204 = vld [vmem:[%s1189 + $0x38] sm:$0xf]
        %v1205 = vld [vmem:[%s1189 + $0x3c] sm:$0xf]
        %v1206 = vld [vmem:[%s1189 + $0x40] sm:$0xf]
        %v1207 = vld [vmem:[%s1189 + $0x44] sm:$0xf]
        %v1208 = vld [vmem:[%s1189 + $0x48] sm:$0xf]
        %v1209 = vld [vmem:[%s1189 + $0x4c] sm:$0xf]
        %v1210 = vld [vmem:[%s1189 + $0x50] sm:$0xf]
        %v1211 = vld [vmem:[%s1189 + $0x54] sm:$0xf]
        %v1212 = vld [vmem:[%s1189 + $0x58] sm:$0xf]
        %v1213 = vld [vmem:[%s1189 + $0x5c] sm:$0xf]
        %v1214 = vld [vmem:[%s1189 + $0x60] sm:$0xf]
        %v1215 = vld [vmem:[%s1189 + $0x64] sm:$0xf]
        %v1216 = vld [vmem:[%s1189 + $0x68] sm:$0xf]
        %v1217 = vld [vmem:[%s1189 + $0x6c] sm:$0xf]
        %v1218 = vld [vmem:[%s1189 + $0x70] sm:$0xf]
        %v1219 = vld [vmem:[%s1189 + $0x74] sm:$0xf]
        %v1220 = vld [vmem:[%s1189 + $0x78] sm:$0xf]
        %v1221 = vld [vmem:[%s1189 + $0x7c] sm:$0xf]
        %v1254 = vunpack.c.l.b16 %v1190
        %v1255 = vunpack.c.l.b16 %v1191
        %v1256 = vunpack.c.l.b16 %v1192
        %v1257 = vunpack.c.l.b16 %v1193
        %v1258 = vunpack.c.l.b16 %v1194
        %v1259 = vunpack.c.l.b16 %v1195
        %v1260 = vunpack.c.l.b16 %v1196
        %v1261 = vunpack.c.l.b16 %v1197
        %v1262 = vunpack.c.l.b16 %v1198
        %v1263 = vunpack.c.l.b16 %v1199
        %v1264 = vunpack.c.l.b16 %v1200
        %v1265 = vunpack.c.l.b16 %v1201
        %v1266 = vunpack.c.l.b16 %v1202
        %v1267 = vunpack.c.l.b16 %v1203
        %v1268 = vunpack.c.l.b16 %v1204
        %v1269 = vunpack.c.l.b16 %v1205
        %v1270 = vunpack.c.l.b16 %v1206
        %v1271 = vunpack.c.l.b16 %v1207
        %v1272 = vunpack.c.l.b16 %v1208
        %v1273 = vunpack.c.l.b16 %v1209
        %v1274 = vunpack.c.l.b16 %v1210
        %v1275 = vunpack.c.l.b16 %v1211
        %v1276 = vunpack.c.l.b16 %v1212
        %v1277 = vunpack.c.l.b16 %v1213
        %v1278 = vunpack.c.l.b16 %v1214
        %v1279 = vunpack.c.l.b16 %v1215
        %v1280 = vunpack.c.l.b16 %v1216
        %v1281 = vunpack.c.l.b16 %v1217
        %v1282 = vunpack.c.l.b16 %v1218
        %v1283 = vunpack.c.l.b16 %v1219
        %v1284 = vunpack.c.l.b16 %v1220
        %v1285 = vunpack.c.l.b16 %v1221
        %v1286 = vpack.c.b16 %v1255, %v1254
        %v1287 = vpack.c.b16 %v1257, %v1256
        %v1288 = vpack.c.b16 %v1259, %v1258
        %v1289 = vpack.c.b16 %v1261, %v1260
        %v1290 = vpack.c.b16 %v1263, %v1262
        %v1291 = vpack.c.b16 %v1265, %v1264
        %v1292 = vpack.c.b16 %v1267, %v1266
        %v1293 = vpack.c.b16 %v1269, %v1268
        %v1294 = vpack.c.b16 %v1271, %v1270
        %v1295 = vpack.c.b16 %v1273, %v1272
        %v1296 = vpack.c.b16 %v1275, %v1274
        %v1297 = vpack.c.b16 %v1277, %v1276
        %v1298 = vpack.c.b16 %v1279, %v1278
        %v1299 = vpack.c.b16 %v1281, %v1280
        %v1300 = vpack.c.b16 %v1283, %v1282
        %v1301 = vpack.c.b16 %v1285, %v1284
        %1318 = vmatprep.subr.bf16.mxu0 0
        %1319 = vmatpush1.bf16.msra.mxu0 %v1286
        %1320 = vmatprep.subr.bf16.mxu0 0
        %1321 = vmatpush1.bf16.msra.mxu0 %v1287
        %1322 = vmatprep.subr.bf16.mxu0 0
        %1323 = vmatpush1.bf16.msra.mxu0 %v1288
        %1324 = vmatprep.subr.bf16.mxu0 0
        %1325 = vmatpush1.bf16.msra.mxu0 %v1289
        %1326 = vmatprep.subr.bf16.mxu0 0
        %1327 = vmatpush1.bf16.msra.mxu0 %v1290
        %1328 = vmatprep.subr.bf16.mxu0 0
        %1329 = vmatpush1.bf16.msra.mxu0 %v1291
        %1330 = vmatprep.subr.bf16.mxu0 0
        %1331 = vmatpush1.bf16.msra.mxu0 %v1292
        %1332 = vmatprep.subr.bf16.mxu0 0
        %1333 = vmatpush1.bf16.msra.mxu0 %v1293
        %1334 = vmatprep.subr.bf16.mxu0 0
        %1335 = vmatpush1.bf16.msra.mxu0 %v1294
        %1336 = vmatprep.subr.bf16.mxu0 0
        %1337 = vmatpush1.bf16.msra.mxu0 %v1295
        %1338 = vmatprep.subr.bf16.mxu0 0
        %1339 = vmatpush1.bf16.msra.mxu0 %v1296
        %1340 = vmatprep.subr.bf16.mxu0 0
        %1341 = vmatpush1.bf16.msra.mxu0 %v1297
        %1342 = vmatprep.subr.bf16.mxu0 0
        %1343 = vmatpush1.bf16.msra.mxu0 %v1298
        %1344 = vmatprep.subr.bf16.mxu0 0
        %1345 = vmatpush1.bf16.msra.mxu0 %v1299
        %1346 = vmatprep.subr.bf16.mxu0 0
        %1347 = vmatpush1.bf16.msra.mxu0 %v1300
        %1348 = vmatprep.subr.bf16.mxu0 0
        %1349 = vmatpush1.bf16.msra.mxu0 %v1301
        %1350 = vmatprep.mubr.bf16.mxu0 %v570
        %1351 = vmatmul.mubr.bf16.gmra.mrb[0].mxu0 %v569
        %v1352 = vpop.f32.mrb[0].mxu0
        %v1353 = vadd.f32 0.0, %v1352
        %v1354 = vpop.f32.mrb[0].mxu0
        %v1355 = vpop.f32.mrb[0].mxu0
        %v1356 = vadd.f32 0.0, %v1355
        %v1357 = vpop.f32.mrb[0].mxu0
        %1358 = vdwg.mxu0
        %s1359 = scalar_lea.vmem %s332, 128
        %v1360 = vld [vmem:[%s1359] sm:$0xf]
        %v1361 = vld [vmem:[%s1359 + $0x4] sm:$0xf]
        %v1362 = vld [vmem:[%s1359 + $0x8] sm:$0xf]
        %v1363 = vld [vmem:[%s1359 + $0xc] sm:$0xf]
        %v1364 = vld [vmem:[%s1359 + $0x10] sm:$0xf]
        %v1365 = vld [vmem:[%s1359 + $0x14] sm:$0xf]
        %v1366 = vld [vmem:[%s1359 + $0x18] sm:$0xf]
        %v1367 = vld [vmem:[%s1359 + $0x1c] sm:$0xf]
        %v1368 = vld [vmem:[%s1359 + $0x20] sm:$0xf]
        %v1369 = vld [vmem:[%s1359 + $0x24] sm:$0xf]
        %v1370 = vld [vmem:[%s1359 + $0x28] sm:$0xf]
        %v1371 = vld [vmem:[%s1359 + $0x2c] sm:$0xf]
        %v1372 = vld [vmem:[%s1359 + $0x30] sm:$0xf]
        %v1373 = vld [vmem:[%s1359 + $0x34] sm:$0xf]
        %v1374 = vld [vmem:[%s1359 + $0x38] sm:$0xf]
        %v1375 = vld [vmem:[%s1359 + $0x3c] sm:$0xf]
        %v1376 = vld [vmem:[%s1359 + $0x40] sm:$0xf]
        %v1377 = vld [vmem:[%s1359 + $0x44] sm:$0xf]
        %v1378 = vld [vmem:[%s1359 + $0x48] sm:$0xf]
        %v1379 = vld [vmem:[%s1359 + $0x4c] sm:$0xf]
        %v1380 = vld [vmem:[%s1359 + $0x50] sm:$0xf]
        %v1381 = vld [vmem:[%s1359 + $0x54] sm:$0xf]
        %v1382 = vld [vmem:[%s1359 + $0x58] sm:$0xf]
        %v1383 = vld [vmem:[%s1359 + $0x5c] sm:$0xf]
        %v1384 = vld [vmem:[%s1359 + $0x60] sm:$0xf]
        %v1385 = vld [vmem:[%s1359 + $0x64] sm:$0xf]
        %v1386 = vld [vmem:[%s1359 + $0x68] sm:$0xf]
        %v1387 = vld [vmem:[%s1359 + $0x6c] sm:$0xf]
        %v1388 = vld [vmem:[%s1359 + $0x70] sm:$0xf]
        %v1389 = vld [vmem:[%s1359 + $0x74] sm:$0xf]
        %v1390 = vld [vmem:[%s1359 + $0x78] sm:$0xf]
        %v1391 = vld [vmem:[%s1359 + $0x7c] sm:$0xf]
        %v1424 = vunpack.c.l.b16 %v1360
        %v1425 = vunpack.c.l.b16 %v1361
        %v1426 = vunpack.c.l.b16 %v1362
        %v1427 = vunpack.c.l.b16 %v1363
        %v1428 = vunpack.c.l.b16 %v1364
        %v1429 = vunpack.c.l.b16 %v1365
        %v1430 = vunpack.c.l.b16 %v1366
        %v1431 = vunpack.c.l.b16 %v1367
        %v1432 = vunpack.c.l.b16 %v1368
        %v1433 = vunpack.c.l.b16 %v1369
        %v1434 = vunpack.c.l.b16 %v1370
        %v1435 = vunpack.c.l.b16 %v1371
        %v1436 = vunpack.c.l.b16 %v1372
        %v1437 = vunpack.c.l.b16 %v1373
        %v1438 = vunpack.c.l.b16 %v1374
        %v1439 = vunpack.c.l.b16 %v1375
        %v1440 = vunpack.c.l.b16 %v1376
        %v1441 = vunpack.c.l.b16 %v1377
        %v1442 = vunpack.c.l.b16 %v1378
        %v1443 = vunpack.c.l.b16 %v1379
        %v1444 = vunpack.c.l.b16 %v1380
        %v1445 = vunpack.c.l.b16 %v1381
        %v1446 = vunpack.c.l.b16 %v1382
        %v1447 = vunpack.c.l.b16 %v1383
        %v1448 = vunpack.c.l.b16 %v1384
        %v1449 = vunpack.c.l.b16 %v1385
        %v1450 = vunpack.c.l.b16 %v1386
        %v1451 = vunpack.c.l.b16 %v1387
        %v1452 = vunpack.c.l.b16 %v1388
        %v1453 = vunpack.c.l.b16 %v1389
        %v1454 = vunpack.c.l.b16 %v1390
        %v1455 = vunpack.c.l.b16 %v1391
        %v1456 = vpack.c.b16 %v1425, %v1424
        %v1457 = vpack.c.b16 %v1427, %v1426
        %v1458 = vpack.c.b16 %v1429, %v1428
        %v1459 = vpack.c.b16 %v1431, %v1430
        %v1460 = vpack.c.b16 %v1433, %v1432
        %v1461 = vpack.c.b16 %v1435, %v1434
        %v1462 = vpack.c.b16 %v1437, %v1436
        %v1463 = vpack.c.b16 %v1439, %v1438
        %v1464 = vpack.c.b16 %v1441, %v1440
        %v1465 = vpack.c.b16 %v1443, %v1442
        %v1466 = vpack.c.b16 %v1445, %v1444
        %v1467 = vpack.c.b16 %v1447, %v1446
        %v1468 = vpack.c.b16 %v1449, %v1448
        %v1469 = vpack.c.b16 %v1451, %v1450
        %v1470 = vpack.c.b16 %v1453, %v1452
        %v1471 = vpack.c.b16 %v1455, %v1454
        %1488 = vmatprep.subr.bf16.mxu0 0
        %1489 = vmatpush1.bf16.msra.mxu0 %v1456
        %1490 = vmatprep.subr.bf16.mxu0 0
        %1491 = vmatpush1.bf16.msra.mxu0 %v1457
        %1492 = vmatprep.subr.bf16.mxu0 0
        %1493 = vmatpush1.bf16.msra.mxu0 %v1458
        %1494 = vmatprep.subr.bf16.mxu0 0
        %1495 = vmatpush1.bf16.msra.mxu0 %v1459
        %1496 = vmatprep.subr.bf16.mxu0 0
        %1497 = vmatpush1.bf16.msra.mxu0 %v1460
        %1498 = vmatprep.subr.bf16.mxu0 0
        %1499 = vmatpush1.bf16.msra.mxu0 %v1461
        %1500 = vmatprep.subr.bf16.mxu0 0
        %1501 = vmatpush1.bf16.msra.mxu0 %v1462
        %1502 = vmatprep.subr.bf16.mxu0 0
        %1503 = vmatpush1.bf16.msra.mxu0 %v1463
        %1504 = vmatprep.subr.bf16.mxu0 0
        %1505 = vmatpush1.bf16.msra.mxu0 %v1464
        %1506 = vmatprep.subr.bf16.mxu0 0
        %1507 = vmatpush1.bf16.msra.mxu0 %v1465
        %1508 = vmatprep.subr.bf16.mxu0 0
        %1509 = vmatpush1.bf16.msra.mxu0 %v1466
        %1510 = vmatprep.subr.bf16.mxu0 0
        %1511 = vmatpush1.bf16.msra.mxu0 %v1467
        %1512 = vmatprep.subr.bf16.mxu0 0
        %1513 = vmatpush1.bf16.msra.mxu0 %v1468
        %1514 = vmatprep.subr.bf16.mxu0 0
        %1515 = vmatpush1.bf16.msra.mxu0 %v1469
        %1516 = vmatprep.subr.bf16.mxu0 0
        %1517 = vmatpush1.bf16.msra.mxu0 %v1470
        %1518 = vmatprep.subr.bf16.mxu0 0
        %1519 = vmatpush1.bf16.msra.mxu0 %v1471
        %1520 = vmatprep.mubr.bf16.mxu0 %v749
        %1521 = vmatmul.mubr.bf16.gmra.mrb[0].mxu0 %v748
        %v1522 = vpop.f32.mrb[0].mxu0
        %v1523 = vadd.f32 0.0, %v1522
        %v1524 = vpop.f32.mrb[0].mxu0
        %v1525 = vpop.f32.mrb[0].mxu0
        %v1526 = vadd.f32 0.0, %v1525
        %v1527 = vpop.f32.mrb[0].mxu0
        %1528 = vdwg.mxu0
        %v1530 = vsel %vm889, %v1353, 0
        %v1533 = vsel %vm889, %v1356, 0
        %1535 = vmatprep.subr.mxu0 0.0
        %1536 = vmatpush1.msra.mxu0 %v528
        %1537 = vmatprep.subr.mxu0 0.0
        %1538 = vmatpush1.msra.mxu0 %v529
        %1539 = vmatprep.subr.mxu0 0.0
        %1540 = vmatpush1.msra.mxu0 0.0
        %1541 = vmatprep.subr.mxu0 0.0
        %1542 = vmatpush1.msra.mxu0 0.0
        %1543 = vmatprep.subr.mxu0 0.0
        %1544 = vmatpush1.msra.mxu0 0.0
        %1545 = vmatprep.subr.mxu0 0.0
        %1546 = vmatpush1.msra.mxu0 0.0
        %1547 = vmatprep.subr.mxu0 0.0
        %1548 = vmatpush1.msra.mxu0 0.0
        %1549 = vmatprep.subr.mxu0 0.0
        %1550 = vmatpush1.msra.mxu0 0.0
        %1551 = vmatprep.subr.mxu0 0.0
        %1552 = vmatpush1.msra.mxu0 0.0
        %1553 = vmatprep.subr.mxu0 0.0
        %1554 = vmatpush1.msra.mxu0 0.0
        %1555 = vmatprep.subr.mxu0 0.0
        %1556 = vmatpush1.msra.mxu0 0.0
        %1557 = vmatprep.subr.mxu0 0.0
        %1558 = vmatpush1.msra.mxu0 0.0
        %1559 = vmatprep.subr.mxu0 0.0
        %1560 = vmatpush1.msra.mxu0 0.0
        %1561 = vmatprep.subr.mxu0 0.0
        %1562 = vmatpush1.msra.mxu0 0.0
        %1563 = vmatprep.subr.mxu0 0.0
        %1564 = vmatpush1.msra.mxu0 0.0
        %1565 = vmatprep.subr.mxu0 0.0
        %1566 = vmatpush1.msra.mxu0 0.0
        %1567 = vmatprep.subr.mxu0 0.0
        %1568 = vmatpush1.msra.mxu0 0.0
        %1569 = vmatprep.subr.mxu0 0.0
        %1570 = vmatpush1.msra.mxu0 0.0
        %1571 = vmatprep.subr.mxu0 0.0
        %1572 = vmatpush1.msra.mxu0 0.0
        %1573 = vmatprep.subr.mxu0 0.0
        %1574 = vmatpush1.msra.mxu0 0.0
        %1575 = vmatprep.subr.mxu0 0.0
        %1576 = vmatpush1.msra.mxu0 0.0
        %1577 = vmatprep.subr.mxu0 0.0
        %1578 = vmatpush1.msra.mxu0 0.0
        %1579 = vmatprep.subr.mxu0 0.0
        %1580 = vmatpush1.msra.mxu0 0.0
        %1581 = vmatprep.subr.mxu0 0.0
        %1582 = vmatpush1.msra.mxu0 0.0
        %1583 = vmatprep.subr.mxu0 0.0
        %1584 = vmatpush1.msra.mxu0 0.0
        %1585 = vmatprep.subr.mxu0 0.0
        %1586 = vmatpush1.msra.mxu0 0.0
        %1587 = vmatprep.subr.mxu0 0.0
        %1588 = vmatpush1.msra.mxu0 0.0
        %1589 = vmatprep.subr.mxu0 0.0
        %1590 = vmatpush1.msra.mxu0 0.0
        %1591 = vmatprep.subr.mxu0 0.0
        %1592 = vmatpush1.msra.mxu0 0.0
        %1593 = vmatprep.subr.mxu0 0.0
        %1594 = vmatpush1.msra.mxu0 0.0
        %1595 = vmatprep.subr.mxu0 0.0
        %1596 = vmatpush1.msra.mxu0 0.0
        %1597 = vmatprep.subr.mxu0 0.0
        %1598 = vmatpush1.msra.mxu0 0.0
        %1599 = vmatprep.mubr.f32.mxu0 0.0
        %1600 = vmatmul.mubr.f32.gmra.mrb[0].mxu0 %v1530
        %v1601 = vpop.f32.mrb[0].mxu0
        %v1602 = vadd.f32 0.0, %v1601
        %v1603 = vpop.f32.mrb[0].mxu0
        %1604 = vmatprep.mubr.f32.mxu0 0.0
        %1605 = vmatmul.mubr.f32.gmra.mrb[0].mxu0 %v1533
        %v1606 = vpop.f32.mrb[0].mxu0
        %v1607 = vadd.f32 0.0, %v1606
        %v1608 = vpop.f32.mrb[0].mxu0
        %1609 = vdwg.mxu0
        %v1610 = vadd.f32 %v522, %v1602
        %v1611 = vadd.f32 %v523, %v1607
        %v1613 = vsel %vm973, %v1523, 0
        %v1616 = vsel %vm973, %v1526, 0
        %1618 = vmatprep.subr.mxu0 0.0
        %1619 = vmatpush1.msra.mxu0 %v530
        %1620 = vmatprep.subr.mxu0 0.0
        %1621 = vmatpush1.msra.mxu0 0.0
        %1622 = vmatprep.subr.mxu0 0.0
        %1623 = vmatpush1.msra.mxu0 0.0
        %1624 = vmatprep.subr.mxu0 0.0
        %1625 = vmatpush1.msra.mxu0 0.0
        %1626 = vmatprep.subr.mxu0 0.0
        %1627 = vmatpush1.msra.mxu0 0.0
        %1628 = vmatprep.subr.mxu0 0.0
        %1629 = vmatpush1.msra.mxu0 0.0
        %1630 = vmatprep.subr.mxu0 0.0
        %1631 = vmatpush1.msra.mxu0 0.0
        %1632 = vmatprep.subr.mxu0 0.0
        %1633 = vmatpush1.msra.mxu0 0.0
        %1634 = vmatprep.subr.mxu0 0.0
        %1635 = vmatpush1.msra.mxu0 0.0
        %1636 = vmatprep.subr.mxu0 0.0
        %1637 = vmatpush1.msra.mxu0 0.0
        %1638 = vmatprep.subr.mxu0 0.0
        %1639 = vmatpush1.msra.mxu0 0.0
        %1640 = vmatprep.subr.mxu0 0.0
        %1641 = vmatpush1.msra.mxu0 0.0
        %1642 = vmatprep.subr.mxu0 0.0
        %1643 = vmatpush1.msra.mxu0 0.0
        %1644 = vmatprep.subr.mxu0 0.0
        %1645 = vmatpush1.msra.mxu0 0.0
        %1646 = vmatprep.subr.mxu0 0.0
        %1647 = vmatpush1.msra.mxu0 0.0
        %1648 = vmatprep.subr.mxu0 0.0
        %1649 = vmatpush1.msra.mxu0 0.0
        %1650 = vmatprep.subr.mxu0 0.0
        %1651 = vmatpush1.msra.mxu0 0.0
        %1652 = vmatprep.subr.mxu0 0.0
        %1653 = vmatpush1.msra.mxu0 0.0
        %1654 = vmatprep.subr.mxu0 0.0
        %1655 = vmatpush1.msra.mxu0 0.0
        %1656 = vmatprep.subr.mxu0 0.0
        %1657 = vmatpush1.msra.mxu0 0.0
        %1658 = vmatprep.subr.mxu0 0.0
        %1659 = vmatpush1.msra.mxu0 0.0
        %1660 = vmatprep.subr.mxu0 0.0
        %1661 = vmatpush1.msra.mxu0 0.0
        %1662 = vmatprep.subr.mxu0 0.0
        %1663 = vmatpush1.msra.mxu0 0.0
        %1664 = vmatprep.subr.mxu0 0.0
        %1665 = vmatpush1.msra.mxu0 0.0
        %1666 = vmatprep.subr.mxu0 0.0
        %1667 = vmatpush1.msra.mxu0 0.0
        %1668 = vmatprep.subr.mxu0 0.0
        %1669 = vmatpush1.msra.mxu0 0.0
        %1670 = vmatprep.subr.mxu0 0.0
        %1671 = vmatpush1.msra.mxu0 0.0
        %1672 = vmatprep.subr.mxu0 0.0
        %1673 = vmatpush1.msra.mxu0 0.0
        %1674 = vmatprep.subr.mxu0 0.0
        %1675 = vmatpush1.msra.mxu0 0.0
        %1676 = vmatprep.subr.mxu0 0.0
        %1677 = vmatpush1.msra.mxu0 0.0
        %1678 = vmatprep.subr.mxu0 0.0
        %1679 = vmatpush1.msra.mxu0 0.0
        %1680 = vmatprep.subr.mxu0 0.0
        %1681 = vmatpush1.msra.mxu0 0.0
        %1682 = vmatprep.mubr.f32.mxu0 0.0
        %1683 = vmatmul.mubr.f32.gmra.mrb[0].mxu0 %v1613
        %v1684 = vpop.f32.mrb[0].mxu0
        %v1685 = vadd.f32 0.0, %v1684
        %v1686 = vpop.f32.mrb[0].mxu0
        %1687 = vmatprep.mubr.f32.mxu0 0.0
        %1688 = vmatmul.mubr.f32.gmra.mrb[0].mxu0 %v1616
        %v1689 = vpop.f32.mrb[0].mxu0
        %v1690 = vadd.f32 0.0, %v1689
        %v1691 = vpop.f32.mrb[0].mxu0
        %1692 = vdwg.mxu0
        %v1693 = vadd.f32 %v1610, %v1685
        %v1694 = vadd.f32 %v1611, %v1690
        %v1697 = vcombine.high %v1693, %v1693
        %v1699 = vunpack.c.l.s4 1966171168
        %v1700 = vunpack.c.0.s8 %v1699
        %v1701 = vlaneseq
        %v1702 = vshrl.u32 %v1701, 7
        %v1703 = vsub.s32 %v1700, %v1702
        %v1704 = vrot.slane %v1693, %v1703
        %v1706 = vunpack.c.l.s4 1966171168
        %v1707 = vunpack.c.0.s8 %v1706
        %v1708 = vlaneseq
        %v1709 = vshrl.u32 %v1708, 7
        %v1710 = vsub.s32 %v1707, %v1709
        %v1711 = vrot.slane %v1697, %v1710
        %v1712 = vcombine.high %v1704, %v1704
        %v1713 = vcombine.high %v1711, %v1711
        %v1715 = vunpack.c.l.s4 1966171168
        %v1716 = vunpack.c.0.s8 %v1715
        %v1717 = vlaneseq
        %v1718 = vshrl.u32 %v1717, 7
        %v1719 = vsub.s32 %v1716, %v1718
        %v1720 = vrot.slane %v1704, %v1719
        %v1722 = vunpack.c.l.s4 1966171168
        %v1723 = vunpack.c.0.s8 %v1722
        %v1724 = vlaneseq
        %v1725 = vshrl.u32 %v1724, 7
        %v1726 = vsub.s32 %v1723, %v1725
        %v1727 = vrot.slane %v1711, %v1726
        %v1729 = vunpack.c.l.s4 1966171168
        %v1730 = vunpack.c.0.s8 %v1729
        %v1731 = vlaneseq
        %v1732 = vshrl.u32 %v1731, 7
        %v1733 = vsub.s32 %v1730, %v1732
        %v1734 = vrot.slane %v1712, %v1733
        %v1736 = vunpack.c.l.s4 1966171168
        %v1737 = vunpack.c.0.s8 %v1736
        %v1738 = vlaneseq
        %v1739 = vshrl.u32 %v1738, 7
        %v1740 = vsub.s32 %v1737, %v1739
        %v1741 = vrot.slane %v1713, %v1740
        %v1742 = vcombine.high %v1720, %v1720
        %v1743 = vcombine.high %v1727, %v1727
        %v1744 = vcombine.high %v1734, %v1734
        %v1745 = vcombine.high %v1741, %v1741
        %v1746 = vcombine.high %v1694, %v1694
        %v1748 = vunpack.c.l.s4 1966171168
        %v1749 = vunpack.c.0.s8 %v1748
        %v1750 = vlaneseq
        %v1751 = vshrl.u32 %v1750, 7
        %v1752 = vsub.s32 %v1749, %v1751
        %v1753 = vrot.slane %v1694, %v1752
        %v1755 = vunpack.c.l.s4 1966171168
        %v1756 = vunpack.c.0.s8 %v1755
        %v1757 = vlaneseq
        %v1758 = vshrl.u32 %v1757, 7
        %v1759 = vsub.s32 %v1756, %v1758
        %v1760 = vrot.slane %v1746, %v1759
        %v1761 = vcombine.high %v1753, %v1753
        %v1762 = vcombine.high %v1760, %v1760
        %v1764 = vunpack.c.l.s4 1966171168
        %v1765 = vunpack.c.0.s8 %v1764
        %v1766 = vlaneseq
        %v1767 = vshrl.u32 %v1766, 7
        %v1768 = vsub.s32 %v1765, %v1767
        %v1769 = vrot.slane %v1753, %v1768
        %v1771 = vunpack.c.l.s4 1966171168
        %v1772 = vunpack.c.0.s8 %v1771
        %v1773 = vlaneseq
        %v1774 = vshrl.u32 %v1773, 7
        %v1775 = vsub.s32 %v1772, %v1774
        %v1776 = vrot.slane %v1760, %v1775
        %v1778 = vunpack.c.l.s4 1966171168
        %v1779 = vunpack.c.0.s8 %v1778
        %v1780 = vlaneseq
        %v1781 = vshrl.u32 %v1780, 7
        %v1782 = vsub.s32 %v1779, %v1781
        %v1783 = vrot.slane %v1761, %v1782
        %v1785 = vunpack.c.l.s4 1966171168
        %v1786 = vunpack.c.0.s8 %v1785
        %v1787 = vlaneseq
        %v1788 = vshrl.u32 %v1787, 7
        %v1789 = vsub.s32 %v1786, %v1788
        %v1790 = vrot.slane %v1762, %v1789
        %v1791 = vcombine.high %v1769, %v1769
        %v1792 = vcombine.high %v1776, %v1776
        %v1793 = vcombine.high %v1783, %v1783
        %v1794 = vcombine.high %v1790, %v1790
        %1811 = vst [vmem:[%s319 + $0x1] sm:$0x1] %v1720
        %1812 = vst [vmem:[%s319 + $0x9] sm:$0x1] %v1734
        %1813 = vst [vmem:[%s319 + $0x11] sm:$0x1] %v1742
        %1814 = vst [vmem:[%s319 + $0x19] sm:$0x1] %v1744
        %1815 = vst [vmem:[%s319 + $0x21] sm:$0x1] %v1727
        %1816 = vst [vmem:[%s319 + $0x29] sm:$0x1] %v1741
        %1817 = vst [vmem:[%s319 + $0x31] sm:$0x1] %v1743
        %1818 = vst [vmem:[%s319 + $0x39] sm:$0x1] %v1745
        %1819 = vst [vmem:[%s319 + $0x41] sm:$0x1] %v1769
        %1820 = vst [vmem:[%s319 + $0x49] sm:$0x1] %v1783
        %1821 = vst [vmem:[%s319 + $0x51] sm:$0x1] %v1791
        %1822 = vst [vmem:[%s319 + $0x59] sm:$0x1] %v1793
        %1823 = vst [vmem:[%s319 + $0x61] sm:$0x1] %v1776
        %1824 = vst [vmem:[%s319 + $0x69] sm:$0x1] %v1790
        %1825 = vst [vmem:[%s319 + $0x71] sm:$0x1] %v1792
        %1826 = vst [vmem:[%s319 + $0x79] sm:$0x1] %v1794
        %s1827 = scalar_lea.vmem %s325, 256
        %v1828 = vld [vmem:[%s1827] sm:$0xf]
        %v1829 = vld [vmem:[%s1827 + $0x4] sm:$0xf]
        %v1830 = vld [vmem:[%s1827 + $0x8] sm:$0xf]
        %v1831 = vld [vmem:[%s1827 + $0xc] sm:$0xf]
        %v1832 = vld [vmem:[%s1827 + $0x10] sm:$0xf]
        %v1833 = vld [vmem:[%s1827 + $0x14] sm:$0xf]
        %v1834 = vld [vmem:[%s1827 + $0x18] sm:$0xf]
        %v1835 = vld [vmem:[%s1827 + $0x1c] sm:$0xf]
        %v1836 = vld [vmem:[%s1827 + $0x20] sm:$0xf]
        %v1837 = vld [vmem:[%s1827 + $0x24] sm:$0xf]
        %v1838 = vld [vmem:[%s1827 + $0x28] sm:$0xf]
        %v1839 = vld [vmem:[%s1827 + $0x2c] sm:$0xf]
        %v1840 = vld [vmem:[%s1827 + $0x30] sm:$0xf]
        %v1841 = vld [vmem:[%s1827 + $0x34] sm:$0xf]
        %v1842 = vld [vmem:[%s1827 + $0x38] sm:$0xf]
        %v1843 = vld [vmem:[%s1827 + $0x3c] sm:$0xf]
        %v1844 = vld [vmem:[%s1827 + $0x40] sm:$0xf]
        %v1845 = vld [vmem:[%s1827 + $0x44] sm:$0xf]
        %v1846 = vld [vmem:[%s1827 + $0x48] sm:$0xf]
        %v1847 = vld [vmem:[%s1827 + $0x4c] sm:$0xf]
        %v1848 = vld [vmem:[%s1827 + $0x50] sm:$0xf]
        %v1849 = vld [vmem:[%s1827 + $0x54] sm:$0xf]
        %v1850 = vld [vmem:[%s1827 + $0x58] sm:$0xf]
        %v1851 = vld [vmem:[%s1827 + $0x5c] sm:$0xf]
        %v1852 = vld [vmem:[%s1827 + $0x60] sm:$0xf]
        %v1853 = vld [vmem:[%s1827 + $0x64] sm:$0xf]
        %v1854 = vld [vmem:[%s1827 + $0x68] sm:$0xf]
        %v1855 = vld [vmem:[%s1827 + $0x6c] sm:$0xf]
        %v1856 = vld [vmem:[%s1827 + $0x70] sm:$0xf]
        %v1857 = vld [vmem:[%s1827 + $0x74] sm:$0xf]
        %v1858 = vld [vmem:[%s1827 + $0x78] sm:$0xf]
        %v1859 = vld [vmem:[%s1827 + $0x7c] sm:$0xf]
        %v1892 = vunpack.c.l.b16 %v1828
        %v1893 = vunpack.c.l.b16 %v1829
        %v1894 = vunpack.c.l.b16 %v1830
        %v1895 = vunpack.c.l.b16 %v1831
        %v1896 = vunpack.c.l.b16 %v1832
        %v1897 = vunpack.c.l.b16 %v1833
        %v1898 = vunpack.c.l.b16 %v1834
        %v1899 = vunpack.c.l.b16 %v1835
        %v1900 = vunpack.c.l.b16 %v1836
        %v1901 = vunpack.c.l.b16 %v1837
        %v1902 = vunpack.c.l.b16 %v1838
        %v1903 = vunpack.c.l.b16 %v1839
        %v1904 = vunpack.c.l.b16 %v1840
        %v1905 = vunpack.c.l.b16 %v1841
        %v1906 = vunpack.c.l.b16 %v1842
        %v1907 = vunpack.c.l.b16 %v1843
        %v1908 = vunpack.c.l.b16 %v1844
        %v1909 = vunpack.c.l.b16 %v1845
        %v1910 = vunpack.c.l.b16 %v1846
        %v1911 = vunpack.c.l.b16 %v1847
        %v1912 = vunpack.c.l.b16 %v1848
        %v1913 = vunpack.c.l.b16 %v1849
        %v1914 = vunpack.c.l.b16 %v1850
        %v1915 = vunpack.c.l.b16 %v1851
        %v1916 = vunpack.c.l.b16 %v1852
        %v1917 = vunpack.c.l.b16 %v1853
        %v1918 = vunpack.c.l.b16 %v1854
        %v1919 = vunpack.c.l.b16 %v1855
        %v1920 = vunpack.c.l.b16 %v1856
        %v1921 = vunpack.c.l.b16 %v1857
        %v1922 = vunpack.c.l.b16 %v1858
        %v1923 = vunpack.c.l.b16 %v1859
        %v1924 = vpack.c.b16 %v1893, %v1892
        %v1925 = vpack.c.b16 %v1895, %v1894
        %v1926 = vpack.c.b16 %v1897, %v1896
        %v1927 = vpack.c.b16 %v1899, %v1898
        %v1928 = vpack.c.b16 %v1901, %v1900
        %v1929 = vpack.c.b16 %v1903, %v1902
        %v1930 = vpack.c.b16 %v1905, %v1904
        %v1931 = vpack.c.b16 %v1907, %v1906
        %v1932 = vpack.c.b16 %v1909, %v1908
        %v1933 = vpack.c.b16 %v1911, %v1910
        %v1934 = vpack.c.b16 %v1913, %v1912
        %v1935 = vpack.c.b16 %v1915, %v1914
        %v1936 = vpack.c.b16 %v1917, %v1916
        %v1937 = vpack.c.b16 %v1919, %v1918
        %v1938 = vpack.c.b16 %v1921, %v1920
        %v1939 = vpack.c.b16 %v1923, %v1922
        %1956 = vmatprep.subr.bf16.mxu0 0
        %1957 = vmatpush1.bf16.msra.mxu0 %v1924
        %1958 = vmatprep.subr.bf16.mxu0 0
        %1959 = vmatpush1.bf16.msra.mxu0 %v1925
        %1960 = vmatprep.subr.bf16.mxu0 0
        %1961 = vmatpush1.bf16.msra.mxu0 %v1926
        %1962 = vmatprep.subr.bf16.mxu0 0
        %1963 = vmatpush1.bf16.msra.mxu0 %v1927
        %1964 = vmatprep.subr.bf16.mxu0 0
        %1965 = vmatpush1.bf16.msra.mxu0 %v1928
        %1966 = vmatprep.subr.bf16.mxu0 0
        %1967 = vmatpush1.bf16.msra.mxu0 %v1929
        %1968 = vmatprep.subr.bf16.mxu0 0
        %1969 = vmatpush1.bf16.msra.mxu0 %v1930
        %1970 = vmatprep.subr.bf16.mxu0 0
        %1971 = vmatpush1.bf16.msra.mxu0 %v1931
        %1972 = vmatprep.subr.bf16.mxu0 0
        %1973 = vmatpush1.bf16.msra.mxu0 %v1932
        %1974 = vmatprep.subr.bf16.mxu0 0
        %1975 = vmatpush1.bf16.msra.mxu0 %v1933
        %1976 = vmatprep.subr.bf16.mxu0 0
        %1977 = vmatpush1.bf16.msra.mxu0 %v1934
        %1978 = vmatprep.subr.bf16.mxu0 0
        %1979 = vmatpush1.bf16.msra.mxu0 %v1935
        %1980 = vmatprep.subr.bf16.mxu0 0
        %1981 = vmatpush1.bf16.msra.mxu0 %v1936
        %1982 = vmatprep.subr.bf16.mxu0 0
        %1983 = vmatpush1.bf16.msra.mxu0 %v1937
        %1984 = vmatprep.subr.bf16.mxu0 0
        %1985 = vmatpush1.bf16.msra.mxu0 %v1938
        %1986 = vmatprep.subr.bf16.mxu0 0
        %1987 = vmatpush1.bf16.msra.mxu0 %v1939
        %1988 = vmatprep.mubr.bf16.mxu0 %v570
        %1989 = vmatmul.mubr.bf16.gmra.mrb[0].mxu0 %v569
        %v1990 = vpop.f32.mrb[0].mxu0
        %v1991 = vadd.f32 0.0, %v1990
        %v1992 = vpop.f32.mrb[0].mxu0
        %v1993 = vpop.f32.mrb[0].mxu0
        %v1994 = vadd.f32 0.0, %v1993
        %v1995 = vpop.f32.mrb[0].mxu0
        %1996 = vdwg.mxu0
        %s1997 = scalar_lea.vmem %s332, 256
        %v1998 = vld [vmem:[%s1997] sm:$0xf]
        %v1999 = vld [vmem:[%s1997 + $0x4] sm:$0xf]
        %v2000 = vld [vmem:[%s1997 + $0x8] sm:$0xf]
        %v2001 = vld [vmem:[%s1997 + $0xc] sm:$0xf]
        %v2002 = vld [vmem:[%s1997 + $0x10] sm:$0xf]
        %v2003 = vld [vmem:[%s1997 + $0x14] sm:$0xf]
        %v2004 = vld [vmem:[%s1997 + $0x18] sm:$0xf]
        %v2005 = vld [vmem:[%s1997 + $0x1c] sm:$0xf]
        %v2006 = vld [vmem:[%s1997 + $0x20] sm:$0xf]
        %v2007 = vld [vmem:[%s1997 + $0x24] sm:$0xf]
        %v2008 = vld [vmem:[%s1997 + $0x28] sm:$0xf]
        %v2009 = vld [vmem:[%s1997 + $0x2c] sm:$0xf]
        %v2010 = vld [vmem:[%s1997 + $0x30] sm:$0xf]
        %v2011 = vld [vmem:[%s1997 + $0x34] sm:$0xf]
        %v2012 = vld [vmem:[%s1997 + $0x38] sm:$0xf]
        %v2013 = vld [vmem:[%s1997 + $0x3c] sm:$0xf]
        %v2014 = vld [vmem:[%s1997 + $0x40] sm:$0xf]
        %v2015 = vld [vmem:[%s1997 + $0x44] sm:$0xf]
        %v2016 = vld [vmem:[%s1997 + $0x48] sm:$0xf]
        %v2017 = vld [vmem:[%s1997 + $0x4c] sm:$0xf]
        %v2018 = vld [vmem:[%s1997 + $0x50] sm:$0xf]
        %v2019 = vld [vmem:[%s1997 + $0x54] sm:$0xf]
        %v2020 = vld [vmem:[%s1997 + $0x58] sm:$0xf]
        %v2021 = vld [vmem:[%s1997 + $0x5c] sm:$0xf]
        %v2022 = vld [vmem:[%s1997 + $0x60] sm:$0xf]
        %v2023 = vld [vmem:[%s1997 + $0x64] sm:$0xf]
        %v2024 = vld [vmem:[%s1997 + $0x68] sm:$0xf]
        %v2025 = vld [vmem:[%s1997 + $0x6c] sm:$0xf]
        %v2026 = vld [vmem:[%s1997 + $0x70] sm:$0xf]
        %v2027 = vld [vmem:[%s1997 + $0x74] sm:$0xf]
        %v2028 = vld [vmem:[%s1997 + $0x78] sm:$0xf]
        %v2029 = vld [vmem:[%s1997 + $0x7c] sm:$0xf]
        %v2062 = vunpack.c.l.b16 %v1998
        %v2063 = vunpack.c.l.b16 %v1999
        %v2064 = vunpack.c.l.b16 %v2000
        %v2065 = vunpack.c.l.b16 %v2001
        %v2066 = vunpack.c.l.b16 %v2002
        %v2067 = vunpack.c.l.b16 %v2003
        %v2068 = vunpack.c.l.b16 %v2004
        %v2069 = vunpack.c.l.b16 %v2005
        %v2070 = vunpack.c.l.b16 %v2006
        %v2071 = vunpack.c.l.b16 %v2007
        %v2072 = vunpack.c.l.b16 %v2008
        %v2073 = vunpack.c.l.b16 %v2009
        %v2074 = vunpack.c.l.b16 %v2010
        %v2075 = vunpack.c.l.b16 %v2011
        %v2076 = vunpack.c.l.b16 %v2012
        %v2077 = vunpack.c.l.b16 %v2013
        %v2078 = vunpack.c.l.b16 %v2014
        %v2079 = vunpack.c.l.b16 %v2015
        %v2080 = vunpack.c.l.b16 %v2016
        %v2081 = vunpack.c.l.b16 %v2017
        %v2082 = vunpack.c.l.b16 %v2018
        %v2083 = vunpack.c.l.b16 %v2019
        %v2084 = vunpack.c.l.b16 %v2020
        %v2085 = vunpack.c.l.b16 %v2021
        %v2086 = vunpack.c.l.b16 %v2022
        %v2087 = vunpack.c.l.b16 %v2023
        %v2088 = vunpack.c.l.b16 %v2024
        %v2089 = vunpack.c.l.b16 %v2025
        %v2090 = vunpack.c.l.b16 %v2026
        %v2091 = vunpack.c.l.b16 %v2027
        %v2092 = vunpack.c.l.b16 %v2028
        %v2093 = vunpack.c.l.b16 %v2029
        %v2094 = vpack.c.b16 %v2063, %v2062
        %v2095 = vpack.c.b16 %v2065, %v2064
        %v2096 = vpack.c.b16 %v2067, %v2066
        %v2097 = vpack.c.b16 %v2069, %v2068
        %v2098 = vpack.c.b16 %v2071, %v2070
        %v2099 = vpack.c.b16 %v2073, %v2072
        %v2100 = vpack.c.b16 %v2075, %v2074
        %v2101 = vpack.c.b16 %v2077, %v2076
        %v2102 = vpack.c.b16 %v2079, %v2078
        %v2103 = vpack.c.b16 %v2081, %v2080
        %v2104 = vpack.c.b16 %v2083, %v2082
        %v2105 = vpack.c.b16 %v2085, %v2084
        %v2106 = vpack.c.b16 %v2087, %v2086
        %v2107 = vpack.c.b16 %v2089, %v2088
        %v2108 = vpack.c.b16 %v2091, %v2090
        %v2109 = vpack.c.b16 %v2093, %v2092
        %2126 = vmatprep.subr.bf16.mxu0 0
        %2127 = vmatpush1.bf16.msra.mxu0 %v2094
        %2128 = vmatprep.subr.bf16.mxu0 0
        %2129 = vmatpush1.bf16.msra.mxu0 %v2095
        %2130 = vmatprep.subr.bf16.mxu0 0
        %2131 = vmatpush1.bf16.msra.mxu0 %v2096
        %2132 = vmatprep.subr.bf16.mxu0 0
        %2133 = vmatpush1.bf16.msra.mxu0 %v2097
        %2134 = vmatprep.subr.bf16.mxu0 0
        %2135 = vmatpush1.bf16.msra.mxu0 %v2098
        %2136 = vmatprep.subr.bf16.mxu0 0
        %2137 = vmatpush1.bf16.msra.mxu0 %v2099
        %2138 = vmatprep.subr.bf16.mxu0 0
        %2139 = vmatpush1.bf16.msra.mxu0 %v2100
        %2140 = vmatprep.subr.bf16.mxu0 0
        %2141 = vmatpush1.bf16.msra.mxu0 %v2101
        %2142 = vmatprep.subr.bf16.mxu0 0
        %2143 = vmatpush1.bf16.msra.mxu0 %v2102
        %2144 = vmatprep.subr.bf16.mxu0 0
        %2145 = vmatpush1.bf16.msra.mxu0 %v2103
        %2146 = vmatprep.subr.bf16.mxu0 0
        %2147 = vmatpush1.bf16.msra.mxu0 %v2104
        %2148 = vmatprep.subr.bf16.mxu0 0
        %2149 = vmatpush1.bf16.msra.mxu0 %v2105
        %2150 = vmatprep.subr.bf16.mxu0 0
        %2151 = vmatpush1.bf16.msra.mxu0 %v2106
        %2152 = vmatprep.subr.bf16.mxu0 0
        %2153 = vmatpush1.bf16.msra.mxu0 %v2107
        %2154 = vmatprep.subr.bf16.mxu0 0
        %2155 = vmatpush1.bf16.msra.mxu0 %v2108
        %2156 = vmatprep.subr.bf16.mxu0 0
        %2157 = vmatpush1.bf16.msra.mxu0 %v2109
        %2158 = vmatprep.mubr.bf16.mxu0 %v749
        %2159 = vmatmul.mubr.bf16.gmra.mrb[0].mxu0 %v748
        %v2160 = vpop.f32.mrb[0].mxu0
        %v2161 = vadd.f32 0.0, %v2160
        %v2162 = vpop.f32.mrb[0].mxu0
        %v2163 = vpop.f32.mrb[0].mxu0
        %v2164 = vadd.f32 0.0, %v2163
        %v2165 = vpop.f32.mrb[0].mxu0
        %2166 = vdwg.mxu0
        %v2168 = vsel %vm889, %v1991, 0
        %v2171 = vsel %vm889, %v1994, 0
        %2173 = vmatprep.subr.mxu0 0.0
        %2174 = vmatpush1.msra.mxu0 %v528
        %2175 = vmatprep.subr.mxu0 0.0
        %2176 = vmatpush1.msra.mxu0 %v529
        %2177 = vmatprep.subr.mxu0 0.0
        %2178 = vmatpush1.msra.mxu0 0.0
        %2179 = vmatprep.subr.mxu0 0.0
        %2180 = vmatpush1.msra.mxu0 0.0
        %2181 = vmatprep.subr.mxu0 0.0
        %2182 = vmatpush1.msra.mxu0 0.0
        %2183 = vmatprep.subr.mxu0 0.0
        %2184 = vmatpush1.msra.mxu0 0.0
        %2185 = vmatprep.subr.mxu0 0.0
        %2186 = vmatpush1.msra.mxu0 0.0
        %2187 = vmatprep.subr.mxu0 0.0
        %2188 = vmatpush1.msra.mxu0 0.0
        %2189 = vmatprep.subr.mxu0 0.0
        %2190 = vmatpush1.msra.mxu0 0.0
        %2191 = vmatprep.subr.mxu0 0.0
        %2192 = vmatpush1.msra.mxu0 0.0
        %2193 = vmatprep.subr.mxu0 0.0
        %2194 = vmatpush1.msra.mxu0 0.0
        %2195 = vmatprep.subr.mxu0 0.0
        %2196 = vmatpush1.msra.mxu0 0.0
        %2197 = vmatprep.subr.mxu0 0.0
        %2198 = vmatpush1.msra.mxu0 0.0
        %2199 = vmatprep.subr.mxu0 0.0
        %2200 = vmatpush1.msra.mxu0 0.0
        %2201 = vmatprep.subr.mxu0 0.0
        %2202 = vmatpush1.msra.mxu0 0.0
        %2203 = vmatprep.subr.mxu0 0.0
        %2204 = vmatpush1.msra.mxu0 0.0
        %2205 = vmatprep.subr.mxu0 0.0
        %2206 = vmatpush1.msra.mxu0 0.0
        %2207 = vmatprep.subr.mxu0 0.0
        %2208 = vmatpush1.msra.mxu0 0.0
        %2209 = vmatprep.subr.mxu0 0.0
        %2210 = vmatpush1.msra.mxu0 0.0
        %2211 = vmatprep.subr.mxu0 0.0
        %2212 = vmatpush1.msra.mxu0 0.0
        %2213 = vmatprep.subr.mxu0 0.0
        %2214 = vmatpush1.msra.mxu0 0.0
        %2215 = vmatprep.subr.mxu0 0.0
        %2216 = vmatpush1.msra.mxu0 0.0
        %2217 = vmatprep.subr.mxu0 0.0
        %2218 = vmatpush1.msra.mxu0 0.0
        %2219 = vmatprep.subr.mxu0 0.0
        %2220 = vmatpush1.msra.mxu0 0.0
        %2221 = vmatprep.subr.mxu0 0.0
        %2222 = vmatpush1.msra.mxu0 0.0
        %2223 = vmatprep.subr.mxu0 0.0
        %2224 = vmatpush1.msra.mxu0 0.0
        %2225 = vmatprep.subr.mxu0 0.0
        %2226 = vmatpush1.msra.mxu0 0.0
        %2227 = vmatprep.subr.mxu0 0.0
        %2228 = vmatpush1.msra.mxu0 0.0
        %2229 = vmatprep.subr.mxu0 0.0
        %2230 = vmatpush1.msra.mxu0 0.0
        %2231 = vmatprep.subr.mxu0 0.0
        %2232 = vmatpush1.msra.mxu0 0.0
        %2233 = vmatprep.subr.mxu0 0.0
        %2234 = vmatpush1.msra.mxu0 0.0
        %2235 = vmatprep.subr.mxu0 0.0
        %2236 = vmatpush1.msra.mxu0 0.0
        %2237 = vmatprep.mubr.f32.mxu0 0.0
        %2238 = vmatmul.mubr.f32.gmra.mrb[0].mxu0 %v2168
        %v2239 = vpop.f32.mrb[0].mxu0
        %v2240 = vadd.f32 0.0, %v2239
        %v2241 = vpop.f32.mrb[0].mxu0
        %2242 = vmatprep.mubr.f32.mxu0 0.0
        %2243 = vmatmul.mubr.f32.gmra.mrb[0].mxu0 %v2171
        %v2244 = vpop.f32.mrb[0].mxu0
        %v2245 = vadd.f32 0.0, %v2244
        %v2246 = vpop.f32.mrb[0].mxu0
        %2247 = vdwg.mxu0
        %v2248 = vadd.f32 %v522, %v2240
        %v2249 = vadd.f32 %v523, %v2245
        %v2251 = vsel %vm973, %v2161, 0
        %v2254 = vsel %vm973, %v2164, 0
        %2256 = vmatprep.subr.mxu0 0.0
        %2257 = vmatpush1.msra.mxu0 %v530
        %2258 = vmatprep.subr.mxu0 0.0
        %2259 = vmatpush1.msra.mxu0 0.0
        %2260 = vmatprep.subr.mxu0 0.0
        %2261 = vmatpush1.msra.mxu0 0.0
        %2262 = vmatprep.subr.mxu0 0.0
        %2263 = vmatpush1.msra.mxu0 0.0
        %2264 = vmatprep.subr.mxu0 0.0
        %2265 = vmatpush1.msra.mxu0 0.0
        %2266 = vmatprep.subr.mxu0 0.0
        %2267 = vmatpush1.msra.mxu0 0.0
        %2268 = vmatprep.subr.mxu0 0.0
        %2269 = vmatpush1.msra.mxu0 0.0
        %2270 = vmatprep.subr.mxu0 0.0
        %2271 = vmatpush1.msra.mxu0 0.0
        %2272 = vmatprep.subr.mxu0 0.0
        %2273 = vmatpush1.msra.mxu0 0.0
        %2274 = vmatprep.subr.mxu0 0.0
        %2275 = vmatpush1.msra.mxu0 0.0
        %2276 = vmatprep.subr.mxu0 0.0
        %2277 = vmatpush1.msra.mxu0 0.0
        %2278 = vmatprep.subr.mxu0 0.0
        %2279 = vmatpush1.msra.mxu0 0.0
        %2280 = vmatprep.subr.mxu0 0.0
        %2281 = vmatpush1.msra.mxu0 0.0
        %2282 = vmatprep.subr.mxu0 0.0
        %2283 = vmatpush1.msra.mxu0 0.0
        %2284 = vmatprep.subr.mxu0 0.0
        %2285 = vmatpush1.msra.mxu0 0.0
        %2286 = vmatprep.subr.mxu0 0.0
        %2287 = vmatpush1.msra.mxu0 0.0
        %2288 = vmatprep.subr.mxu0 0.0
        %2289 = vmatpush1.msra.mxu0 0.0
        %2290 = vmatprep.subr.mxu0 0.0
        %2291 = vmatpush1.msra.mxu0 0.0
        %2292 = vmatprep.subr.mxu0 0.0
        %2293 = vmatpush1.msra.mxu0 0.0
        %2294 = vmatprep.subr.mxu0 0.0
        %2295 = vmatpush1.msra.mxu0 0.0
        %2296 = vmatprep.subr.mxu0 0.0
        %2297 = vmatpush1.msra.mxu0 0.0
        %2298 = vmatprep.subr.mxu0 0.0
        %2299 = vmatpush1.msra.mxu0 0.0
        %2300 = vmatprep.subr.mxu0 0.0
        %2301 = vmatpush1.msra.mxu0 0.0
        %2302 = vmatprep.subr.mxu0 0.0
        %2303 = vmatpush1.msra.mxu0 0.0
        %2304 = vmatprep.subr.mxu0 0.0
        %2305 = vmatpush1.msra.mxu0 0.0
        %2306 = vmatprep.subr.mxu0 0.0
        %2307 = vmatpush1.msra.mxu0 0.0
        %2308 = vmatprep.subr.mxu0 0.0
        %2309 = vmatpush1.msra.mxu0 0.0
        %2310 = vmatprep.subr.mxu0 0.0
        %2311 = vmatpush1.msra.mxu0 0.0
        %2312 = vmatprep.subr.mxu0 0.0
        %2313 = vmatpush1.msra.mxu0 0.0
        %2314 = vmatprep.subr.mxu0 0.0
        %2315 = vmatpush1.msra.mxu0 0.0
        %2316 = vmatprep.subr.mxu0 0.0
        %2317 = vmatpush1.msra.mxu0 0.0
        %2318 = vmatprep.subr.mxu0 0.0
        %2319 = vmatpush1.msra.mxu0 0.0
        %2320 = vmatprep.mubr.f32.mxu0 0.0
        %2321 = vmatmul.mubr.f32.gmra.mrb[0].mxu0 %v2251
        %v2322 = vpop.f32.mrb[0].mxu0
        %v2323 = vadd.f32 0.0, %v2322
        %v2324 = vpop.f32.mrb[0].mxu0
        %2325 = vmatprep.mubr.f32.mxu0 0.0
        %2326 = vmatmul.mubr.f32.gmra.mrb[0].mxu0 %v2254
        %v2327 = vpop.f32.mrb[0].mxu0
        %v2328 = vadd.f32 0.0, %v2327
        %v2329 = vpop.f32.mrb[0].mxu0
        %2330 = vdwg.mxu0
        %v2331 = vadd.f32 %v2248, %v2323
        %v2332 = vadd.f32 %v2249, %v2328
        %v2335 = vcombine.high %v2331, %v2331
        %v2337 = vunpack.c.l.s4 1966171168
        %v2338 = vunpack.c.0.s8 %v2337
        %v2339 = vlaneseq
        %v2340 = vshrl.u32 %v2339, 7
        %v2341 = vsub.s32 %v2338, %v2340
        %v2342 = vrot.slane %v2331, %v2341
        %v2344 = vunpack.c.l.s4 1966171168
        %v2345 = vunpack.c.0.s8 %v2344
        %v2346 = vlaneseq
        %v2347 = vshrl.u32 %v2346, 7
        %v2348 = vsub.s32 %v2345, %v2347
        %v2349 = vrot.slane %v2335, %v2348
        %v2350 = vcombine.high %v2342, %v2342
        %v2351 = vcombine.high %v2349, %v2349
        %v2353 = vunpack.c.l.s4 1966171168
        %v2354 = vunpack.c.0.s8 %v2353
        %v2355 = vlaneseq
        %v2356 = vshrl.u32 %v2355, 7
        %v2357 = vsub.s32 %v2354, %v2356
        %v2358 = vrot.slane %v2342, %v2357
        %v2360 = vunpack.c.l.s4 1966171168
        %v2361 = vunpack.c.0.s8 %v2360
        %v2362 = vlaneseq
        %v2363 = vshrl.u32 %v2362, 7
        %v2364 = vsub.s32 %v2361, %v2363
        %v2365 = vrot.slane %v2349, %v2364
        %v2367 = vunpack.c.l.s4 1966171168
        %v2368 = vunpack.c.0.s8 %v2367
        %v2369 = vlaneseq
        %v2370 = vshrl.u32 %v2369, 7
        %v2371 = vsub.s32 %v2368, %v2370
        %v2372 = vrot.slane %v2350, %v2371
        %v2374 = vunpack.c.l.s4 1966171168
        %v2375 = vunpack.c.0.s8 %v2374
        %v2376 = vlaneseq
        %v2377 = vshrl.u32 %v2376, 7
        %v2378 = vsub.s32 %v2375, %v2377
        %v2379 = vrot.slane %v2351, %v2378
        %v2380 = vcombine.high %v2358, %v2358
        %v2381 = vcombine.high %v2365, %v2365
        %v2382 = vcombine.high %v2372, %v2372
        %v2383 = vcombine.high %v2379, %v2379
        %v2384 = vcombine.high %v2332, %v2332
        %v2386 = vunpack.c.l.s4 1966171168
        %v2387 = vunpack.c.0.s8 %v2386
        %v2388 = vlaneseq
        %v2389 = vshrl.u32 %v2388, 7
        %v2390 = vsub.s32 %v2387, %v2389
        %v2391 = vrot.slane %v2332, %v2390
        %v2393 = vunpack.c.l.s4 1966171168
        %v2394 = vunpack.c.0.s8 %v2393
        %v2395 = vlaneseq
        %v2396 = vshrl.u32 %v2395, 7
        %v2397 = vsub.s32 %v2394, %v2396
        %v2398 = vrot.slane %v2384, %v2397
        %v2399 = vcombine.high %v2391, %v2391
        %v2400 = vcombine.high %v2398, %v2398
        %v2402 = vunpack.c.l.s4 1966171168
        %v2403 = vunpack.c.0.s8 %v2402
        %v2404 = vlaneseq
        %v2405 = vshrl.u32 %v2404, 7
        %v2406 = vsub.s32 %v2403, %v2405
        %v2407 = vrot.slane %v2391, %v2406
        %v2409 = vunpack.c.l.s4 1966171168
        %v2410 = vunpack.c.0.s8 %v2409
        %v2411 = vlaneseq
        %v2412 = vshrl.u32 %v2411, 7
        %v2413 = vsub.s32 %v2410, %v2412
        %v2414 = vrot.slane %v2398, %v2413
        %v2416 = vunpack.c.l.s4 1966171168
        %v2417 = vunpack.c.0.s8 %v2416
        %v2418 = vlaneseq
        %v2419 = vshrl.u32 %v2418, 7
        %v2420 = vsub.s32 %v2417, %v2419
        %v2421 = vrot.slane %v2399, %v2420
        %v2423 = vunpack.c.l.s4 1966171168
        %v2424 = vunpack.c.0.s8 %v2423
        %v2425 = vlaneseq
        %v2426 = vshrl.u32 %v2425, 7
        %v2427 = vsub.s32 %v2424, %v2426
        %v2428 = vrot.slane %v2400, %v2427
        %v2429 = vcombine.high %v2407, %v2407
        %v2430 = vcombine.high %v2414, %v2414
        %v2431 = vcombine.high %v2421, %v2421
        %v2432 = vcombine.high %v2428, %v2428
        %2449 = vst [vmem:[%s319 + $0x2] sm:$0x1] %v2358
        %2450 = vst [vmem:[%s319 + $0xa] sm:$0x1] %v2372
        %2451 = vst [vmem:[%s319 + $0x12] sm:$0x1] %v2380
        %2452 = vst [vmem:[%s319 + $0x1a] sm:$0x1] %v2382
        %2453 = vst [vmem:[%s319 + $0x22] sm:$0x1] %v2365
        %2454 = vst [vmem:[%s319 + $0x2a] sm:$0x1] %v2379
        %2455 = vst [vmem:[%s319 + $0x32] sm:$0x1] %v2381
        %2456 = vst [vmem:[%s319 + $0x3a] sm:$0x1] %v2383
        %2457 = vst [vmem:[%s319 + $0x42] sm:$0x1] %v2407
        %2458 = vst [vmem:[%s319 + $0x4a] sm:$0x1] %v2421
        %2459 = vst [vmem:[%s319 + $0x52] sm:$0x1] %v2429
        %2460 = vst [vmem:[%s319 + $0x5a] sm:$0x1] %v2431
        %2461 = vst [vmem:[%s319 + $0x62] sm:$0x1] %v2414
        %2462 = vst [vmem:[%s319 + $0x6a] sm:$0x1] %v2428
        %2463 = vst [vmem:[%s319 + $0x72] sm:$0x1] %v2430
        %2464 = vst [vmem:[%s319 + $0x7a] sm:$0x1] %v2432
        %s2465 = scalar_lea.vmem %s325, 384
        %v2466 = vld [vmem:[%s2465] sm:$0xf]
        %v2467 = vld [vmem:[%s2465 + $0x4] sm:$0xf]
        %v2468 = vld [vmem:[%s2465 + $0x8] sm:$0xf]
        %v2469 = vld [vmem:[%s2465 + $0xc] sm:$0xf]
        %v2470 = vld [vmem:[%s2465 + $0x10] sm:$0xf]
        %v2471 = vld [vmem:[%s2465 + $0x14] sm:$0xf]
        %v2472 = vld [vmem:[%s2465 + $0x18] sm:$0xf]
        %v2473 = vld [vmem:[%s2465 + $0x1c] sm:$0xf]
        %v2474 = vld [vmem:[%s2465 + $0x20] sm:$0xf]
        %v2475 = vld [vmem:[%s2465 + $0x24] sm:$0xf]
        %v2476 = vld [vmem:[%s2465 + $0x28] sm:$0xf]
        %v2477 = vld [vmem:[%s2465 + $0x2c] sm:$0xf]
        %v2478 = vld [vmem:[%s2465 + $0x30] sm:$0xf]
        %v2479 = vld [vmem:[%s2465 + $0x34] sm:$0xf]
        %v2480 = vld [vmem:[%s2465 + $0x38] sm:$0xf]
        %v2481 = vld [vmem:[%s2465 + $0x3c] sm:$0xf]
        %v2482 = vld [vmem:[%s2465 + $0x40] sm:$0xf]
        %v2483 = vld [vmem:[%s2465 + $0x44] sm:$0xf]
        %v2484 = vld [vmem:[%s2465 + $0x48] sm:$0xf]
        %v2485 = vld [vmem:[%s2465 + $0x4c] sm:$0xf]
        %v2486 = vld [vmem:[%s2465 + $0x50] sm:$0xf]
        %v2487 = vld [vmem:[%s2465 + $0x54] sm:$0xf]
        %v2488 = vld [vmem:[%s2465 + $0x58] sm:$0xf]
        %v2489 = vld [vmem:[%s2465 + $0x5c] sm:$0xf]
        %v2490 = vld [vmem:[%s2465 + $0x60] sm:$0xf]
        %v2491 = vld [vmem:[%s2465 + $0x64] sm:$0xf]
        %v2492 = vld [vmem:[%s2465 + $0x68] sm:$0xf]
        %v2493 = vld [vmem:[%s2465 + $0x6c] sm:$0xf]
        %v2494 = vld [vmem:[%s2465 + $0x70] sm:$0xf]
        %v2495 = vld [vmem:[%s2465 + $0x74] sm:$0xf]
        %v2496 = vld [vmem:[%s2465 + $0x78] sm:$0xf]
        %v2497 = vld [vmem:[%s2465 + $0x7c] sm:$0xf]
        %v2530 = vunpack.c.l.b16 %v2466
        %v2531 = vunpack.c.l.b16 %v2467
        %v2532 = vunpack.c.l.b16 %v2468
        %v2533 = vunpack.c.l.b16 %v2469
        %v2534 = vunpack.c.l.b16 %v2470
        %v2535 = vunpack.c.l.b16 %v2471
        %v2536 = vunpack.c.l.b16 %v2472
        %v2537 = vunpack.c.l.b16 %v2473
        %v2538 = vunpack.c.l.b16 %v2474
        %v2539 = vunpack.c.l.b16 %v2475
        %v2540 = vunpack.c.l.b16 %v2476
        %v2541 = vunpack.c.l.b16 %v2477
        %v2542 = vunpack.c.l.b16 %v2478
        %v2543 = vunpack.c.l.b16 %v2479
        %v2544 = vunpack.c.l.b16 %v2480
        %v2545 = vunpack.c.l.b16 %v2481
        %v2546 = vunpack.c.l.b16 %v2482
        %v2547 = vunpack.c.l.b16 %v2483
        %v2548 = vunpack.c.l.b16 %v2484
        %v2549 = vunpack.c.l.b16 %v2485
        %v2550 = vunpack.c.l.b16 %v2486
        %v2551 = vunpack.c.l.b16 %v2487
        %v2552 = vunpack.c.l.b16 %v2488
        %v2553 = vunpack.c.l.b16 %v2489
        %v2554 = vunpack.c.l.b16 %v2490
        %v2555 = vunpack.c.l.b16 %v2491
        %v2556 = vunpack.c.l.b16 %v2492
        %v2557 = vunpack.c.l.b16 %v2493
        %v2558 = vunpack.c.l.b16 %v2494
        %v2559 = vunpack.c.l.b16 %v2495
        %v2560 = vunpack.c.l.b16 %v2496
        %v2561 = vunpack.c.l.b16 %v2497
        %v2562 = vpack.c.b16 %v2531, %v2530
        %v2563 = vpack.c.b16 %v2533, %v2532
        %v2564 = vpack.c.b16 %v2535, %v2534
        %v2565 = vpack.c.b16 %v2537, %v2536
        %v2566 = vpack.c.b16 %v2539, %v2538
        %v2567 = vpack.c.b16 %v2541, %v2540
        %v2568 = vpack.c.b16 %v2543, %v2542
        %v2569 = vpack.c.b16 %v2545, %v2544
        %v2570 = vpack.c.b16 %v2547, %v2546
        %v2571 = vpack.c.b16 %v2549, %v2548
        %v2572 = vpack.c.b16 %v2551, %v2550
        %v2573 = vpack.c.b16 %v2553, %v2552
        %v2574 = vpack.c.b16 %v2555, %v2554
        %v2575 = vpack.c.b16 %v2557, %v2556
        %v2576 = vpack.c.b16 %v2559, %v2558
        %v2577 = vpack.c.b16 %v2561, %v2560
        %2594 = vmatprep.subr.bf16.mxu0 0
        %2595 = vmatpush1.bf16.msra.mxu0 %v2562
        %2596 = vmatprep.subr.bf16.mxu0 0
        %2597 = vmatpush1.bf16.msra.mxu0 %v2563
        %2598 = vmatprep.subr.bf16.mxu0 0
        %2599 = vmatpush1.bf16.msra.mxu0 %v2564
        %2600 = vmatprep.subr.bf16.mxu0 0
        %2601 = vmatpush1.bf16.msra.mxu0 %v2565
        %2602 = vmatprep.subr.bf16.mxu0 0
        %2603 = vmatpush1.bf16.msra.mxu0 %v2566
        %2604 = vmatprep.subr.bf16.mxu0 0
        %2605 = vmatpush1.bf16.msra.mxu0 %v2567
        %2606 = vmatprep.subr.bf16.mxu0 0
        %2607 = vmatpush1.bf16.msra.mxu0 %v2568
        %2608 = vmatprep.subr.bf16.mxu0 0
        %2609 = vmatpush1.bf16.msra.mxu0 %v2569
        %2610 = vmatprep.subr.bf16.mxu0 0
        %2611 = vmatpush1.bf16.msra.mxu0 %v2570
        %2612 = vmatprep.subr.bf16.mxu0 0
        %2613 = vmatpush1.bf16.msra.mxu0 %v2571
        %2614 = vmatprep.subr.bf16.mxu0 0
        %2615 = vmatpush1.bf16.msra.mxu0 %v2572
        %2616 = vmatprep.subr.bf16.mxu0 0
        %2617 = vmatpush1.bf16.msra.mxu0 %v2573
        %2618 = vmatprep.subr.bf16.mxu0 0
        %2619 = vmatpush1.bf16.msra.mxu0 %v2574
        %2620 = vmatprep.subr.bf16.mxu0 0
        %2621 = vmatpush1.bf16.msra.mxu0 %v2575
        %2622 = vmatprep.subr.bf16.mxu0 0
        %2623 = vmatpush1.bf16.msra.mxu0 %v2576
        %2624 = vmatprep.subr.bf16.mxu0 0
        %2625 = vmatpush1.bf16.msra.mxu0 %v2577
        %2626 = vmatprep.mubr.bf16.mxu0 %v570
        %2627 = vmatmul.mubr.bf16.gmra.mrb[0].mxu0 %v569
        %v2628 = vpop.f32.mrb[0].mxu0
        %v2629 = vadd.f32 0.0, %v2628
        %v2630 = vpop.f32.mrb[0].mxu0
        %v2631 = vpop.f32.mrb[0].mxu0
        %v2632 = vadd.f32 0.0, %v2631
        %v2633 = vpop.f32.mrb[0].mxu0
        %2634 = vdwg.mxu0
        %s2635 = scalar_lea.vmem %s332, 384
        %v2636 = vld [vmem:[%s2635] sm:$0xf]
        %v2637 = vld [vmem:[%s2635 + $0x4] sm:$0xf]
        %v2638 = vld [vmem:[%s2635 + $0x8] sm:$0xf]
        %v2639 = vld [vmem:[%s2635 + $0xc] sm:$0xf]
        %v2640 = vld [vmem:[%s2635 + $0x10] sm:$0xf]
        %v2641 = vld [vmem:[%s2635 + $0x14] sm:$0xf]
        %v2642 = vld [vmem:[%s2635 + $0x18] sm:$0xf]
        %v2643 = vld [vmem:[%s2635 + $0x1c] sm:$0xf]
        %v2644 = vld [vmem:[%s2635 + $0x20] sm:$0xf]
        %v2645 = vld [vmem:[%s2635 + $0x24] sm:$0xf]
        %v2646 = vld [vmem:[%s2635 + $0x28] sm:$0xf]
        %v2647 = vld [vmem:[%s2635 + $0x2c] sm:$0xf]
        %v2648 = vld [vmem:[%s2635 + $0x30] sm:$0xf]
        %v2649 = vld [vmem:[%s2635 + $0x34] sm:$0xf]
        %v2650 = vld [vmem:[%s2635 + $0x38] sm:$0xf]
        %v2651 = vld [vmem:[%s2635 + $0x3c] sm:$0xf]
        %v2652 = vld [vmem:[%s2635 + $0x40] sm:$0xf]
        %v2653 = vld [vmem:[%s2635 + $0x44] sm:$0xf]
        %v2654 = vld [vmem:[%s2635 + $0x48] sm:$0xf]
        %v2655 = vld [vmem:[%s2635 + $0x4c] sm:$0xf]
        %v2656 = vld [vmem:[%s2635 + $0x50] sm:$0xf]
        %v2657 = vld [vmem:[%s2635 + $0x54] sm:$0xf]
        %v2658 = vld [vmem:[%s2635 + $0x58] sm:$0xf]
        %v2659 = vld [vmem:[%s2635 + $0x5c] sm:$0xf]
        %v2660 = vld [vmem:[%s2635 + $0x60] sm:$0xf]
        %v2661 = vld [vmem:[%s2635 + $0x64] sm:$0xf]
        %v2662 = vld [vmem:[%s2635 + $0x68] sm:$0xf]
        %v2663 = vld [vmem:[%s2635 + $0x6c] sm:$0xf]
        %v2664 = vld [vmem:[%s2635 + $0x70] sm:$0xf]
        %v2665 = vld [vmem:[%s2635 + $0x74] sm:$0xf]
        %v2666 = vld [vmem:[%s2635 + $0x78] sm:$0xf]
        %v2667 = vld [vmem:[%s2635 + $0x7c] sm:$0xf]
        %v2700 = vunpack.c.l.b16 %v2636
        %v2701 = vunpack.c.l.b16 %v2637
        %v2702 = vunpack.c.l.b16 %v2638
        %v2703 = vunpack.c.l.b16 %v2639
        %v2704 = vunpack.c.l.b16 %v2640
        %v2705 = vunpack.c.l.b16 %v2641
        %v2706 = vunpack.c.l.b16 %v2642
        %v2707 = vunpack.c.l.b16 %v2643
        %v2708 = vunpack.c.l.b16 %v2644
        %v2709 = vunpack.c.l.b16 %v2645
        %v2710 = vunpack.c.l.b16 %v2646
        %v2711 = vunpack.c.l.b16 %v2647
        %v2712 = vunpack.c.l.b16 %v2648
        %v2713 = vunpack.c.l.b16 %v2649
        %v2714 = vunpack.c.l.b16 %v2650
        %v2715 = vunpack.c.l.b16 %v2651
        %v2716 = vunpack.c.l.b16 %v2652
        %v2717 = vunpack.c.l.b16 %v2653
        %v2718 = vunpack.c.l.b16 %v2654
        %v2719 = vunpack.c.l.b16 %v2655
        %v2720 = vunpack.c.l.b16 %v2656
        %v2721 = vunpack.c.l.b16 %v2657
        %v2722 = vunpack.c.l.b16 %v2658
        %v2723 = vunpack.c.l.b16 %v2659
        %v2724 = vunpack.c.l.b16 %v2660
        %v2725 = vunpack.c.l.b16 %v2661
        %v2726 = vunpack.c.l.b16 %v2662
        %v2727 = vunpack.c.l.b16 %v2663
        %v2728 = vunpack.c.l.b16 %v2664
        %v2729 = vunpack.c.l.b16 %v2665
        %v2730 = vunpack.c.l.b16 %v2666
        %v2731 = vunpack.c.l.b16 %v2667
        %v2732 = vpack.c.b16 %v2701, %v2700
        %v2733 = vpack.c.b16 %v2703, %v2702
        %v2734 = vpack.c.b16 %v2705, %v2704
        %v2735 = vpack.c.b16 %v2707, %v2706
        %v2736 = vpack.c.b16 %v2709, %v2708
        %v2737 = vpack.c.b16 %v2711, %v2710
        %v2738 = vpack.c.b16 %v2713, %v2712
        %v2739 = vpack.c.b16 %v2715, %v2714
        %v2740 = vpack.c.b16 %v2717, %v2716
        %v2741 = vpack.c.b16 %v2719, %v2718
        %v2742 = vpack.c.b16 %v2721, %v2720
        %v2743 = vpack.c.b16 %v2723, %v2722
        %v2744 = vpack.c.b16 %v2725, %v2724
        %v2745 = vpack.c.b16 %v2727, %v2726
        %v2746 = vpack.c.b16 %v2729, %v2728
        %v2747 = vpack.c.b16 %v2731, %v2730
        %2764 = vmatprep.subr.bf16.mxu0 0
        %2765 = vmatpush1.bf16.msra.mxu0 %v2732
        %2766 = vmatprep.subr.bf16.mxu0 0
        %2767 = vmatpush1.bf16.msra.mxu0 %v2733
        %2768 = vmatprep.subr.bf16.mxu0 0
        %2769 = vmatpush1.bf16.msra.mxu0 %v2734
        %2770 = vmatprep.subr.bf16.mxu0 0
        %2771 = vmatpush1.bf16.msra.mxu0 %v2735
        %2772 = vmatprep.subr.bf16.mxu0 0
        %2773 = vmatpush1.bf16.msra.mxu0 %v2736
        %2774 = vmatprep.subr.bf16.mxu0 0
        %2775 = vmatpush1.bf16.msra.mxu0 %v2737
        %2776 = vmatprep.subr.bf16.mxu0 0
        %2777 = vmatpush1.bf16.msra.mxu0 %v2738
        %2778 = vmatprep.subr.bf16.mxu0 0
        %2779 = vmatpush1.bf16.msra.mxu0 %v2739
        %2780 = vmatprep.subr.bf16.mxu0 0
        %2781 = vmatpush1.bf16.msra.mxu0 %v2740
        %2782 = vmatprep.subr.bf16.mxu0 0
        %2783 = vmatpush1.bf16.msra.mxu0 %v2741
        %2784 = vmatprep.subr.bf16.mxu0 0
        %2785 = vmatpush1.bf16.msra.mxu0 %v2742
        %2786 = vmatprep.subr.bf16.mxu0 0
        %2787 = vmatpush1.bf16.msra.mxu0 %v2743
        %2788 = vmatprep.subr.bf16.mxu0 0
        %2789 = vmatpush1.bf16.msra.mxu0 %v2744
        %2790 = vmatprep.subr.bf16.mxu0 0
        %2791 = vmatpush1.bf16.msra.mxu0 %v2745
        %2792 = vmatprep.subr.bf16.mxu0 0
        %2793 = vmatpush1.bf16.msra.mxu0 %v2746
        %2794 = vmatprep.subr.bf16.mxu0 0
        %2795 = vmatpush1.bf16.msra.mxu0 %v2747
        %2796 = vmatprep.mubr.bf16.mxu0 %v749
        %2797 = vmatmul.mubr.bf16.gmra.mrb[0].mxu0 %v748
        %v2798 = vpop.f32.mrb[0].mxu0
        %v2799 = vadd.f32 0.0, %v2798
        %v2800 = vpop.f32.mrb[0].mxu0
        %v2801 = vpop.f32.mrb[0].mxu0
        %v2802 = vadd.f32 0.0, %v2801
        %v2803 = vpop.f32.mrb[0].mxu0
        %2804 = vdwg.mxu0
        %v2806 = vsel %vm889, %v2629, 0
        %v2809 = vsel %vm889, %v2632, 0
        %2811 = vmatprep.subr.mxu0 0.0
        %2812 = vmatpush1.msra.mxu0 %v528
        %2813 = vmatprep.subr.mxu0 0.0
        %2814 = vmatpush1.msra.mxu0 %v529
        %2815 = vmatprep.subr.mxu0 0.0
        %2816 = vmatpush1.msra.mxu0 0.0
        %2817 = vmatprep.subr.mxu0 0.0
        %2818 = vmatpush1.msra.mxu0 0.0
        %2819 = vmatprep.subr.mxu0 0.0
        %2820 = vmatpush1.msra.mxu0 0.0
        %2821 = vmatprep.subr.mxu0 0.0
        %2822 = vmatpush1.msra.mxu0 0.0
        %2823 = vmatprep.subr.mxu0 0.0
        %2824 = vmatpush1.msra.mxu0 0.0
        %2825 = vmatprep.subr.mxu0 0.0
        %2826 = vmatpush1.msra.mxu0 0.0
        %2827 = vmatprep.subr.mxu0 0.0
        %2828 = vmatpush1.msra.mxu0 0.0
        %2829 = vmatprep.subr.mxu0 0.0
        %2830 = vmatpush1.msra.mxu0 0.0
        %2831 = vmatprep.subr.mxu0 0.0
        %2832 = vmatpush1.msra.mxu0 0.0
        %2833 = vmatprep.subr.mxu0 0.0
        %2834 = vmatpush1.msra.mxu0 0.0
        %2835 = vmatprep.subr.mxu0 0.0
        %2836 = vmatpush1.msra.mxu0 0.0
        %2837 = vmatprep.subr.mxu0 0.0
        %2838 = vmatpush1.msra.mxu0 0.0
        %2839 = vmatprep.subr.mxu0 0.0
        %2840 = vmatpush1.msra.mxu0 0.0
        %2841 = vmatprep.subr.mxu0 0.0
        %2842 = vmatpush1.msra.mxu0 0.0
        %2843 = vmatprep.subr.mxu0 0.0
        %2844 = vmatpush1.msra.mxu0 0.0
        %2845 = vmatprep.subr.mxu0 0.0
        %2846 = vmatpush1.msra.mxu0 0.0
        %2847 = vmatprep.subr.mxu0 0.0
        %2848 = vmatpush1.msra.mxu0 0.0
        %2849 = vmatprep.subr.mxu0 0.0
        %2850 = vmatpush1.msra.mxu0 0.0
        %2851 = vmatprep.subr.mxu0 0.0
        %2852 = vmatpush1.msra.mxu0 0.0
        %2853 = vmatprep.subr.mxu0 0.0
        %2854 = vmatpush1.msra.mxu0 0.0
        %2855 = vmatprep.subr.mxu0 0.0
        %2856 = vmatpush1.msra.mxu0 0.0
        %2857 = vmatprep.subr.mxu0 0.0
        %2858 = vmatpush1.msra.mxu0 0.0
        %2859 = vmatprep.subr.mxu0 0.0
        %2860 = vmatpush1.msra.mxu0 0.0
        %2861 = vmatprep.subr.mxu0 0.0
        %2862 = vmatpush1.msra.mxu0 0.0
        %2863 = vmatprep.subr.mxu0 0.0
        %2864 = vmatpush1.msra.mxu0 0.0
        %2865 = vmatprep.subr.mxu0 0.0
        %2866 = vmatpush1.msra.mxu0 0.0
        %2867 = vmatprep.subr.mxu0 0.0
        %2868 = vmatpush1.msra.mxu0 0.0
        %2869 = vmatprep.subr.mxu0 0.0
        %2870 = vmatpush1.msra.mxu0 0.0
        %2871 = vmatprep.subr.mxu0 0.0
        %2872 = vmatpush1.msra.mxu0 0.0
        %2873 = vmatprep.subr.mxu0 0.0
        %2874 = vmatpush1.msra.mxu0 0.0
        %2875 = vmatprep.mubr.f32.mxu0 0.0
        %2876 = vmatmul.mubr.f32.gmra.mrb[0].mxu0 %v2806
        %v2877 = vpop.f32.mrb[0].mxu0
        %v2878 = vadd.f32 0.0, %v2877
        %v2879 = vpop.f32.mrb[0].mxu0
        %2880 = vmatprep.mubr.f32.mxu0 0.0
        %2881 = vmatmul.mubr.f32.gmra.mrb[0].mxu0 %v2809
        %v2882 = vpop.f32.mrb[0].mxu0
        %v2883 = vadd.f32 0.0, %v2882
        %v2884 = vpop.f32.mrb[0].mxu0
        %2885 = vdwg.mxu0
        %v2886 = vadd.f32 %v522, %v2878
        %v2887 = vadd.f32 %v523, %v2883
        %v2889 = vsel %vm973, %v2799, 0
        %v2892 = vsel %vm973, %v2802, 0
        %2894 = vmatprep.subr.mxu0 0.0
        %2895 = vmatpush1.msra.mxu0 %v530
        %2896 = vmatprep.subr.mxu0 0.0
        %2897 = vmatpush1.msra.mxu0 0.0
        %2898 = vmatprep.subr.mxu0 0.0
        %2899 = vmatpush1.msra.mxu0 0.0
        %2900 = vmatprep.subr.mxu0 0.0
        %2901 = vmatpush1.msra.mxu0 0.0
        %2902 = vmatprep.subr.mxu0 0.0
        %2903 = vmatpush1.msra.mxu0 0.0
        %2904 = vmatprep.subr.mxu0 0.0
        %2905 = vmatpush1.msra.mxu0 0.0
        %2906 = vmatprep.subr.mxu0 0.0
        %2907 = vmatpush1.msra.mxu0 0.0
        %2908 = vmatprep.subr.mxu0 0.0
        %2909 = vmatpush1.msra.mxu0 0.0
        %2910 = vmatprep.subr.mxu0 0.0
        %2911 = vmatpush1.msra.mxu0 0.0
        %2912 = vmatprep.subr.mxu0 0.0
        %2913 = vmatpush1.msra.mxu0 0.0
        %2914 = vmatprep.subr.mxu0 0.0
        %2915 = vmatpush1.msra.mxu0 0.0
        %2916 = vmatprep.subr.mxu0 0.0
        %2917 = vmatpush1.msra.mxu0 0.0
        %2918 = vmatprep.subr.mxu0 0.0
        %2919 = vmatpush1.msra.mxu0 0.0
        %2920 = vmatprep.subr.mxu0 0.0
        %2921 = vmatpush1.msra.mxu0 0.0
        %2922 = vmatprep.subr.mxu0 0.0
        %2923 = vmatpush1.msra.mxu0 0.0
        %2924 = vmatprep.subr.mxu0 0.0
        %2925 = vmatpush1.msra.mxu0 0.0
        %2926 = vmatprep.subr.mxu0 0.0
        %2927 = vmatpush1.msra.mxu0 0.0
        %2928 = vmatprep.subr.mxu0 0.0
        %2929 = vmatpush1.msra.mxu0 0.0
        %2930 = vmatprep.subr.mxu0 0.0
        %2931 = vmatpush1.msra.mxu0 0.0
        %2932 = vmatprep.subr.mxu0 0.0
        %2933 = vmatpush1.msra.mxu0 0.0
        %2934 = vmatprep.subr.mxu0 0.0
        %2935 = vmatpush1.msra.mxu0 0.0
        %2936 = vmatprep.subr.mxu0 0.0
        %2937 = vmatpush1.msra.mxu0 0.0
        %2938 = vmatprep.subr.mxu0 0.0
        %2939 = vmatpush1.msra.mxu0 0.0
        %2940 = vmatprep.subr.mxu0 0.0
        %2941 = vmatpush1.msra.mxu0 0.0
        %2942 = vmatprep.subr.mxu0 0.0
        %2943 = vmatpush1.msra.mxu0 0.0
        %2944 = vmatprep.subr.mxu0 0.0
        %2945 = vmatpush1.msra.mxu0 0.0
        %2946 = vmatprep.subr.mxu0 0.0
        %2947 = vmatpush1.msra.mxu0 0.0
        %2948 = vmatprep.subr.mxu0 0.0
        %2949 = vmatpush1.msra.mxu0 0.0
        %2950 = vmatprep.subr.mxu0 0.0
        %2951 = vmatpush1.msra.mxu0 0.0
        %2952 = vmatprep.subr.mxu0 0.0
        %2953 = vmatpush1.msra.mxu0 0.0
        %2954 = vmatprep.subr.mxu0 0.0
        %2955 = vmatpush1.msra.mxu0 0.0
        %2956 = vmatprep.subr.mxu0 0.0
        %2957 = vmatpush1.msra.mxu0 0.0
        %2958 = vmatprep.mubr.f32.mxu0 0.0
        %2959 = vmatmul.mubr.f32.gmra.mrb[0].mxu0 %v2889
        %v2960 = vpop.f32.mrb[0].mxu0
        %v2961 = vadd.f32 0.0, %v2960
        %v2962 = vpop.f32.mrb[0].mxu0
        %2963 = vmatprep.mubr.f32.mxu0 0.0
        %2964 = vmatmul.mubr.f32.gmra.mrb[0].mxu0 %v2892
        %v2965 = vpop.f32.mrb[0].mxu0
        %v2966 = vadd.f32 0.0, %v2965
        %v2967 = vpop.f32.mrb[0].mxu0
        %2968 = vdwg.mxu0
        %v2969 = vadd.f32 %v2886, %v2961
        %v2970 = vadd.f32 %v2887, %v2966
        %v2973 = vcombine.high %v2969, %v2969
        %v2975 = vunpack.c.l.s4 1966171168
        %v2976 = vunpack.c.0.s8 %v2975
        %v2977 = vlaneseq
        %v2978 = vshrl.u32 %v2977, 7
        %v2979 = vsub.s32 %v2976, %v2978
        %v2980 = vrot.slane %v2969, %v2979
        %v2982 = vunpack.c.l.s4 1966171168
        %v2983 = vunpack.c.0.s8 %v2982
        %v2984 = vlaneseq
        %v2985 = vshrl.u32 %v2984, 7
        %v2986 = vsub.s32 %v2983, %v2985
        %v2987 = vrot.slane %v2973, %v2986
        %v2988 = vcombine.high %v2980, %v2980
        %v2989 = vcombine.high %v2987, %v2987
        %v2991 = vunpack.c.l.s4 1966171168
        %v2992 = vunpack.c.0.s8 %v2991
        %v2993 = vlaneseq
        %v2994 = vshrl.u32 %v2993, 7
        %v2995 = vsub.s32 %v2992, %v2994
        %v2996 = vrot.slane %v2980, %v2995
        %v2998 = vunpack.c.l.s4 1966171168
        %v2999 = vunpack.c.0.s8 %v2998
        %v3000 = vlaneseq
        %v3001 = vshrl.u32 %v3000, 7
        %v3002 = vsub.s32 %v2999, %v3001
        %v3003 = vrot.slane %v2987, %v3002
        %v3005 = vunpack.c.l.s4 1966171168
        %v3006 = vunpack.c.0.s8 %v3005
        %v3007 = vlaneseq
        %v3008 = vshrl.u32 %v3007, 7
        %v3009 = vsub.s32 %v3006, %v3008
        %v3010 = vrot.slane %v2988, %v3009
        %v3012 = vunpack.c.l.s4 1966171168
        %v3013 = vunpack.c.0.s8 %v3012
        %v3014 = vlaneseq
        %v3015 = vshrl.u32 %v3014, 7
        %v3016 = vsub.s32 %v3013, %v3015
        %v3017 = vrot.slane %v2989, %v3016
        %v3018 = vcombine.high %v2996, %v2996
        %v3019 = vcombine.high %v3003, %v3003
        %v3020 = vcombine.high %v3010, %v3010
        %v3021 = vcombine.high %v3017, %v3017
        %v3022 = vcombine.high %v2970, %v2970
        %v3024 = vunpack.c.l.s4 1966171168
        %v3025 = vunpack.c.0.s8 %v3024
        %v3026 = vlaneseq
        %v3027 = vshrl.u32 %v3026, 7
        %v3028 = vsub.s32 %v3025, %v3027
        %v3029 = vrot.slane %v2970, %v3028
        %v3031 = vunpack.c.l.s4 1966171168
        %v3032 = vunpack.c.0.s8 %v3031
        %v3033 = vlaneseq
        %v3034 = vshrl.u32 %v3033, 7
        %v3035 = vsub.s32 %v3032, %v3034
        %v3036 = vrot.slane %v3022, %v3035
        %v3037 = vcombine.high %v3029, %v3029
        %v3038 = vcombine.high %v3036, %v3036
        %v3040 = vunpack.c.l.s4 1966171168
        %v3041 = vunpack.c.0.s8 %v3040
        %v3042 = vlaneseq
        %v3043 = vshrl.u32 %v3042, 7
        %v3044 = vsub.s32 %v3041, %v3043
        %v3045 = vrot.slane %v3029, %v3044
        %v3047 = vunpack.c.l.s4 1966171168
        %v3048 = vunpack.c.0.s8 %v3047
        %v3049 = vlaneseq
        %v3050 = vshrl.u32 %v3049, 7
        %v3051 = vsub.s32 %v3048, %v3050
        %v3052 = vrot.slane %v3036, %v3051
        %v3054 = vunpack.c.l.s4 1966171168
        %v3055 = vunpack.c.0.s8 %v3054
        %v3056 = vlaneseq
        %v3057 = vshrl.u32 %v3056, 7
        %v3058 = vsub.s32 %v3055, %v3057
        %v3059 = vrot.slane %v3037, %v3058
        %v3061 = vunpack.c.l.s4 1966171168
        %v3062 = vunpack.c.0.s8 %v3061
        %v3063 = vlaneseq
        %v3064 = vshrl.u32 %v3063, 7
        %v3065 = vsub.s32 %v3062, %v3064
        %v3066 = vrot.slane %v3038, %v3065
        %v3067 = vcombine.high %v3045, %v3045
        %v3068 = vcombine.high %v3052, %v3052
        %v3069 = vcombine.high %v3059, %v3059
        %v3070 = vcombine.high %v3066, %v3066
        %3087 = vst [vmem:[%s319 + $0x3] sm:$0x1] %v2996
        %3088 = vst [vmem:[%s319 + $0xb] sm:$0x1] %v3010
        %3089 = vst [vmem:[%s319 + $0x13] sm:$0x1] %v3018
        %3090 = vst [vmem:[%s319 + $0x1b] sm:$0x1] %v3020
        %3091 = vst [vmem:[%s319 + $0x23] sm:$0x1] %v3003
        %3092 = vst [vmem:[%s319 + $0x2b] sm:$0x1] %v3017
        %3093 = vst [vmem:[%s319 + $0x33] sm:$0x1] %v3019
        %3094 = vst [vmem:[%s319 + $0x3b] sm:$0x1] %v3021
        %3095 = vst [vmem:[%s319 + $0x43] sm:$0x1] %v3045
        %3096 = vst [vmem:[%s319 + $0x4b] sm:$0x1] %v3059
        %3097 = vst [vmem:[%s319 + $0x53] sm:$0x1] %v3067
        %3098 = vst [vmem:[%s319 + $0x5b] sm:$0x1] %v3069
        %3099 = vst [vmem:[%s319 + $0x63] sm:$0x1] %v3052
        %3100 = vst [vmem:[%s319 + $0x6b] sm:$0x1] %v3066
        %3101 = vst [vmem:[%s319 + $0x73] sm:$0x1] %v3068
        %3102 = vst [vmem:[%s319 + $0x7b] sm:$0x1] %v3070
        %s3103 = scalar_lea.vmem %s325, 512
        %v3104 = vld [vmem:[%s3103] sm:$0xf]
        %v3105 = vld [vmem:[%s3103 + $0x4] sm:$0xf]
        %v3106 = vld [vmem:[%s3103 + $0x8] sm:$0xf]
        %v3107 = vld [vmem:[%s3103 + $0xc] sm:$0xf]
        %v3108 = vld [vmem:[%s3103 + $0x10] sm:$0xf]
        %v3109 = vld [vmem:[%s3103 + $0x14] sm:$0xf]
        %v3110 = vld [vmem:[%s3103 + $0x18] sm:$0xf]
        %v3111 = vld [vmem:[%s3103 + $0x1c] sm:$0xf]
        %v3112 = vld [vmem:[%s3103 + $0x20] sm:$0xf]
        %v3113 = vld [vmem:[%s3103 + $0x24] sm:$0xf]
        %v3114 = vld [vmem:[%s3103 + $0x28] sm:$0xf]
        %v3115 = vld [vmem:[%s3103 + $0x2c] sm:$0xf]
        %v3116 = vld [vmem:[%s3103 + $0x30] sm:$0xf]
        %v3117 = vld [vmem:[%s3103 + $0x34] sm:$0xf]
        %v3118 = vld [vmem:[%s3103 + $0x38] sm:$0xf]
        %v3119 = vld [vmem:[%s3103 + $0x3c] sm:$0xf]
        %v3120 = vld [vmem:[%s3103 + $0x40] sm:$0xf]
        %v3121 = vld [vmem:[%s3103 + $0x44] sm:$0xf]
        %v3122 = vld [vmem:[%s3103 + $0x48] sm:$0xf]
        %v3123 = vld [vmem:[%s3103 + $0x4c] sm:$0xf]
        %v3124 = vld [vmem:[%s3103 + $0x50] sm:$0xf]
        %v3125 = vld [vmem:[%s3103 + $0x54] sm:$0xf]
        %v3126 = vld [vmem:[%s3103 + $0x58] sm:$0xf]
        %v3127 = vld [vmem:[%s3103 + $0x5c] sm:$0xf]
        %v3128 = vld [vmem:[%s3103 + $0x60] sm:$0xf]
        %v3129 = vld [vmem:[%s3103 + $0x64] sm:$0xf]
        %v3130 = vld [vmem:[%s3103 + $0x68] sm:$0xf]
        %v3131 = vld [vmem:[%s3103 + $0x6c] sm:$0xf]
        %v3132 = vld [vmem:[%s3103 + $0x70] sm:$0xf]
        %v3133 = vld [vmem:[%s3103 + $0x74] sm:$0xf]
        %v3134 = vld [vmem:[%s3103 + $0x78] sm:$0xf]
        %v3135 = vld [vmem:[%s3103 + $0x7c] sm:$0xf]
        %v3168 = vunpack.c.l.b16 %v3104
        %v3169 = vunpack.c.l.b16 %v3105
        %v3170 = vunpack.c.l.b16 %v3106
        %v3171 = vunpack.c.l.b16 %v3107
        %v3172 = vunpack.c.l.b16 %v3108
        %v3173 = vunpack.c.l.b16 %v3109
        %v3174 = vunpack.c.l.b16 %v3110
        %v3175 = vunpack.c.l.b16 %v3111
        %v3176 = vunpack.c.l.b16 %v3112
        %v3177 = vunpack.c.l.b16 %v3113
        %v3178 = vunpack.c.l.b16 %v3114
        %v3179 = vunpack.c.l.b16 %v3115
        %v3180 = vunpack.c.l.b16 %v3116
        %v3181 = vunpack.c.l.b16 %v3117
        %v3182 = vunpack.c.l.b16 %v3118
        %v3183 = vunpack.c.l.b16 %v3119
        %v3184 = vunpack.c.l.b16 %v3120
        %v3185 = vunpack.c.l.b16 %v3121
        %v3186 = vunpack.c.l.b16 %v3122
        %v3187 = vunpack.c.l.b16 %v3123
        %v3188 = vunpack.c.l.b16 %v3124
        %v3189 = vunpack.c.l.b16 %v3125
        %v3190 = vunpack.c.l.b16 %v3126
        %v3191 = vunpack.c.l.b16 %v3127
        %v3192 = vunpack.c.l.b16 %v3128
        %v3193 = vunpack.c.l.b16 %v3129
        %v3194 = vunpack.c.l.b16 %v3130
        %v3195 = vunpack.c.l.b16 %v3131
        %v3196 = vunpack.c.l.b16 %v3132
        %v3197 = vunpack.c.l.b16 %v3133
        %v3198 = vunpack.c.l.b16 %v3134
        %v3199 = vunpack.c.l.b16 %v3135
        %v3200 = vpack.c.b16 %v3169, %v3168
        %v3201 = vpack.c.b16 %v3171, %v3170
        %v3202 = vpack.c.b16 %v3173, %v3172
        %v3203 = vpack.c.b16 %v3175, %v3174
        %v3204 = vpack.c.b16 %v3177, %v3176
        %v3205 = vpack.c.b16 %v3179, %v3178
        %v3206 = vpack.c.b16 %v3181, %v3180
        %v3207 = vpack.c.b16 %v3183, %v3182
        %v3208 = vpack.c.b16 %v3185, %v3184
        %v3209 = vpack.c.b16 %v3187, %v3186
        %v3210 = vpack.c.b16 %v3189, %v3188
        %v3211 = vpack.c.b16 %v3191, %v3190
        %v3212 = vpack.c.b16 %v3193, %v3192
        %v3213 = vpack.c.b16 %v3195, %v3194
        %v3214 = vpack.c.b16 %v3197, %v3196
        %v3215 = vpack.c.b16 %v3199, %v3198
        %3232 = vmatprep.subr.bf16.mxu0 0
        %3233 = vmatpush1.bf16.msra.mxu0 %v3200
        %3234 = vmatprep.subr.bf16.mxu0 0
        %3235 = vmatpush1.bf16.msra.mxu0 %v3201
        %3236 = vmatprep.subr.bf16.mxu0 0
        %3237 = vmatpush1.bf16.msra.mxu0 %v3202
        %3238 = vmatprep.subr.bf16.mxu0 0
        %3239 = vmatpush1.bf16.msra.mxu0 %v3203
        %3240 = vmatprep.subr.bf16.mxu0 0
        %3241 = vmatpush1.bf16.msra.mxu0 %v3204
        %3242 = vmatprep.subr.bf16.mxu0 0
        %3243 = vmatpush1.bf16.msra.mxu0 %v3205
        %3244 = vmatprep.subr.bf16.mxu0 0
        %3245 = vmatpush1.bf16.msra.mxu0 %v3206
        %3246 = vmatprep.subr.bf16.mxu0 0
        %3247 = vmatpush1.bf16.msra.mxu0 %v3207
        %3248 = vmatprep.subr.bf16.mxu0 0
        %3249 = vmatpush1.bf16.msra.mxu0 %v3208
        %3250 = vmatprep.subr.bf16.mxu0 0
        %3251 = vmatpush1.bf16.msra.mxu0 %v3209
        %3252 = vmatprep.subr.bf16.mxu0 0
        %3253 = vmatpush1.bf16.msra.mxu0 %v3210
        %3254 = vmatprep.subr.bf16.mxu0 0
        %3255 = vmatpush1.bf16.msra.mxu0 %v3211
        %3256 = vmatprep.subr.bf16.mxu0 0
        %3257 = vmatpush1.bf16.msra.mxu0 %v3212
        %3258 = vmatprep.subr.bf16.mxu0 0
        %3259 = vmatpush1.bf16.msra.mxu0 %v3213
        %3260 = vmatprep.subr.bf16.mxu0 0
        %3261 = vmatpush1.bf16.msra.mxu0 %v3214
        %3262 = vmatprep.subr.bf16.mxu0 0
        %3263 = vmatpush1.bf16.msra.mxu0 %v3215
        %3264 = vmatprep.mubr.bf16.mxu0 %v570
        %3265 = vmatmul.mubr.bf16.gmra.mrb[0].mxu0 %v569
        %v3266 = vpop.f32.mrb[0].mxu0
        %v3267 = vadd.f32 0.0, %v3266
        %v3268 = vpop.f32.mrb[0].mxu0
        %v3269 = vpop.f32.mrb[0].mxu0
        %v3270 = vadd.f32 0.0, %v3269
        %v3271 = vpop.f32.mrb[0].mxu0
        %3272 = vdwg.mxu0
        %s3273 = scalar_lea.vmem %s332, 512
        %v3274 = vld [vmem:[%s3273] sm:$0xf]
        %v3275 = vld [vmem:[%s3273 + $0x4] sm:$0xf]
        %v3276 = vld [vmem:[%s3273 + $0x8] sm:$0xf]
        %v3277 = vld [vmem:[%s3273 + $0xc] sm:$0xf]
        %v3278 = vld [vmem:[%s3273 + $0x10] sm:$0xf]
        %v3279 = vld [vmem:[%s3273 + $0x14] sm:$0xf]
        %v3280 = vld [vmem:[%s3273 + $0x18] sm:$0xf]
        %v3281 = vld [vmem:[%s3273 + $0x1c] sm:$0xf]
        %v3282 = vld [vmem:[%s3273 + $0x20] sm:$0xf]
        %v3283 = vld [vmem:[%s3273 + $0x24] sm:$0xf]
        %v3284 = vld [vmem:[%s3273 + $0x28] sm:$0xf]
        %v3285 = vld [vmem:[%s3273 + $0x2c] sm:$0xf]
        %v3286 = vld [vmem:[%s3273 + $0x30] sm:$0xf]
        %v3287 = vld [vmem:[%s3273 + $0x34] sm:$0xf]
        %v3288 = vld [vmem:[%s3273 + $0x38] sm:$0xf]
        %v3289 = vld [vmem:[%s3273 + $0x3c] sm:$0xf]
        %v3290 = vld [vmem:[%s3273 + $0x40] sm:$0xf]
        %v3291 = vld [vmem:[%s3273 + $0x44] sm:$0xf]
        %v3292 = vld [vmem:[%s3273 + $0x48] sm:$0xf]
        %v3293 = vld [vmem:[%s3273 + $0x4c] sm:$0xf]
        %v3294 = vld [vmem:[%s3273 + $0x50] sm:$0xf]
        %v3295 = vld [vmem:[%s3273 + $0x54] sm:$0xf]
        %v3296 = vld [vmem:[%s3273 + $0x58] sm:$0xf]
        %v3297 = vld [vmem:[%s3273 + $0x5c] sm:$0xf]
        %v3298 = vld [vmem:[%s3273 + $0x60] sm:$0xf]
        %v3299 = vld [vmem:[%s3273 + $0x64] sm:$0xf]
        %v3300 = vld [vmem:[%s3273 + $0x68] sm:$0xf]
        %v3301 = vld [vmem:[%s3273 + $0x6c] sm:$0xf]
        %v3302 = vld [vmem:[%s3273 + $0x70] sm:$0xf]
        %v3303 = vld [vmem:[%s3273 + $0x74] sm:$0xf]
        %v3304 = vld [vmem:[%s3273 + $0x78] sm:$0xf]
        %v3305 = vld [vmem:[%s3273 + $0x7c] sm:$0xf]
        %v3338 = vunpack.c.l.b16 %v3274
        %v3339 = vunpack.c.l.b16 %v3275
        %v3340 = vunpack.c.l.b16 %v3276
        %v3341 = vunpack.c.l.b16 %v3277
        %v3342 = vunpack.c.l.b16 %v3278
        %v3343 = vunpack.c.l.b16 %v3279
        %v3344 = vunpack.c.l.b16 %v3280
        %v3345 = vunpack.c.l.b16 %v3281
        %v3346 = vunpack.c.l.b16 %v3282
        %v3347 = vunpack.c.l.b16 %v3283
        %v3348 = vunpack.c.l.b16 %v3284
        %v3349 = vunpack.c.l.b16 %v3285
        %v3350 = vunpack.c.l.b16 %v3286
        %v3351 = vunpack.c.l.b16 %v3287
        %v3352 = vunpack.c.l.b16 %v3288
        %v3353 = vunpack.c.l.b16 %v3289
        %v3354 = vunpack.c.l.b16 %v3290
        %v3355 = vunpack.c.l.b16 %v3291
        %v3356 = vunpack.c.l.b16 %v3292
        %v3357 = vunpack.c.l.b16 %v3293
        %v3358 = vunpack.c.l.b16 %v3294
        %v3359 = vunpack.c.l.b16 %v3295
        %v3360 = vunpack.c.l.b16 %v3296
        %v3361 = vunpack.c.l.b16 %v3297
        %v3362 = vunpack.c.l.b16 %v3298
        %v3363 = vunpack.c.l.b16 %v3299
        %v3364 = vunpack.c.l.b16 %v3300
        %v3365 = vunpack.c.l.b16 %v3301
        %v3366 = vunpack.c.l.b16 %v3302
        %v3367 = vunpack.c.l.b16 %v3303
        %v3368 = vunpack.c.l.b16 %v3304
        %v3369 = vunpack.c.l.b16 %v3305
        %v3370 = vpack.c.b16 %v3339, %v3338
        %v3371 = vpack.c.b16 %v3341, %v3340
        %v3372 = vpack.c.b16 %v3343, %v3342
        %v3373 = vpack.c.b16 %v3345, %v3344
        %v3374 = vpack.c.b16 %v3347, %v3346
        %v3375 = vpack.c.b16 %v3349, %v3348
        %v3376 = vpack.c.b16 %v3351, %v3350
        %v3377 = vpack.c.b16 %v3353, %v3352
        %v3378 = vpack.c.b16 %v3355, %v3354
        %v3379 = vpack.c.b16 %v3357, %v3356
        %v3380 = vpack.c.b16 %v3359, %v3358
        %v3381 = vpack.c.b16 %v3361, %v3360
        %v3382 = vpack.c.b16 %v3363, %v3362
        %v3383 = vpack.c.b16 %v3365, %v3364
        %v3384 = vpack.c.b16 %v3367, %v3366
        %v3385 = vpack.c.b16 %v3369, %v3368
        %3402 = vmatprep.subr.bf16.mxu0 0
        %3403 = vmatpush1.bf16.msra.mxu0 %v3370
        %3404 = vmatprep.subr.bf16.mxu0 0
        %3405 = vmatpush1.bf16.msra.mxu0 %v3371
        %3406 = vmatprep.subr.bf16.mxu0 0
        %3407 = vmatpush1.bf16.msra.mxu0 %v3372
        %3408 = vmatprep.subr.bf16.mxu0 0
        %3409 = vmatpush1.bf16.msra.mxu0 %v3373
        %3410 = vmatprep.subr.bf16.mxu0 0
        %3411 = vmatpush1.bf16.msra.mxu0 %v3374
        %3412 = vmatprep.subr.bf16.mxu0 0
        %3413 = vmatpush1.bf16.msra.mxu0 %v3375
        %3414 = vmatprep.subr.bf16.mxu0 0
        %3415 = vmatpush1.bf16.msra.mxu0 %v3376
        %3416 = vmatprep.subr.bf16.mxu0 0
        %3417 = vmatpush1.bf16.msra.mxu0 %v3377
        %3418 = vmatprep.subr.bf16.mxu0 0
        %3419 = vmatpush1.bf16.msra.mxu0 %v3378
        %3420 = vmatprep.subr.bf16.mxu0 0
        %3421 = vmatpush1.bf16.msra.mxu0 %v3379
        %3422 = vmatprep.subr.bf16.mxu0 0
        %3423 = vmatpush1.bf16.msra.mxu0 %v3380
        %3424 = vmatprep.subr.bf16.mxu0 0
        %3425 = vmatpush1.bf16.msra.mxu0 %v3381
        %3426 = vmatprep.subr.bf16.mxu0 0
        %3427 = vmatpush1.bf16.msra.mxu0 %v3382
        %3428 = vmatprep.subr.bf16.mxu0 0
        %3429 = vmatpush1.bf16.msra.mxu0 %v3383
        %3430 = vmatprep.subr.bf16.mxu0 0
        %3431 = vmatpush1.bf16.msra.mxu0 %v3384
        %3432 = vmatprep.subr.bf16.mxu0 0
        %3433 = vmatpush1.bf16.msra.mxu0 %v3385
        %3434 = vmatprep.mubr.bf16.mxu0 %v749
        %3435 = vmatmul.mubr.bf16.gmra.mrb[0].mxu0 %v748
        %v3436 = vpop.f32.mrb[0].mxu0
        %v3437 = vadd.f32 0.0, %v3436
        %v3438 = vpop.f32.mrb[0].mxu0
        %v3439 = vpop.f32.mrb[0].mxu0
        %v3440 = vadd.f32 0.0, %v3439
        %v3441 = vpop.f32.mrb[0].mxu0
        %3442 = vdwg.mxu0
        %v3444 = vsel %vm889, %v3267, 0
        %v3447 = vsel %vm889, %v3270, 0
        %3449 = vmatprep.subr.mxu0 0.0
        %3450 = vmatpush1.msra.mxu0 %v528
        %3451 = vmatprep.subr.mxu0 0.0
        %3452 = vmatpush1.msra.mxu0 %v529
        %3453 = vmatprep.subr.mxu0 0.0
        %3454 = vmatpush1.msra.mxu0 0.0
        %3455 = vmatprep.subr.mxu0 0.0
        %3456 = vmatpush1.msra.mxu0 0.0
        %3457 = vmatprep.subr.mxu0 0.0
        %3458 = vmatpush1.msra.mxu0 0.0
        %3459 = vmatprep.subr.mxu0 0.0
        %3460 = vmatpush1.msra.mxu0 0.0
        %3461 = vmatprep.subr.mxu0 0.0
        %3462 = vmatpush1.msra.mxu0 0.0
        %3463 = vmatprep.subr.mxu0 0.0
        %3464 = vmatpush1.msra.mxu0 0.0
        %3465 = vmatprep.subr.mxu0 0.0
        %3466 = vmatpush1.msra.mxu0 0.0
        %3467 = vmatprep.subr.mxu0 0.0
        %3468 = vmatpush1.msra.mxu0 0.0
        %3469 = vmatprep.subr.mxu0 0.0
        %3470 = vmatpush1.msra.mxu0 0.0
        %3471 = vmatprep.subr.mxu0 0.0
        %3472 = vmatpush1.msra.mxu0 0.0
        %3473 = vmatprep.subr.mxu0 0.0
        %3474 = vmatpush1.msra.mxu0 0.0
        %3475 = vmatprep.subr.mxu0 0.0
        %3476 = vmatpush1.msra.mxu0 0.0
        %3477 = vmatprep.subr.mxu0 0.0
        %3478 = vmatpush1.msra.mxu0 0.0
        %3479 = vmatprep.subr.mxu0 0.0
        %3480 = vmatpush1.msra.mxu0 0.0
        %3481 = vmatprep.subr.mxu0 0.0
        %3482 = vmatpush1.msra.mxu0 0.0
        %3483 = vmatprep.subr.mxu0 0.0
        %3484 = vmatpush1.msra.mxu0 0.0
        %3485 = vmatprep.subr.mxu0 0.0
        %3486 = vmatpush1.msra.mxu0 0.0
        %3487 = vmatprep.subr.mxu0 0.0
        %3488 = vmatpush1.msra.mxu0 0.0
        %3489 = vmatprep.subr.mxu0 0.0
        %3490 = vmatpush1.msra.mxu0 0.0
        %3491 = vmatprep.subr.mxu0 0.0
        %3492 = vmatpush1.msra.mxu0 0.0
        %3493 = vmatprep.subr.mxu0 0.0
        %3494 = vmatpush1.msra.mxu0 0.0
        %3495 = vmatprep.subr.mxu0 0.0
        %3496 = vmatpush1.msra.mxu0 0.0
        %3497 = vmatprep.subr.mxu0 0.0
        %3498 = vmatpush1.msra.mxu0 0.0
        %3499 = vmatprep.subr.mxu0 0.0
        %3500 = vmatpush1.msra.mxu0 0.0
        %3501 = vmatprep.subr.mxu0 0.0
        %3502 = vmatpush1.msra.mxu0 0.0
        %3503 = vmatprep.subr.mxu0 0.0
        %3504 = vmatpush1.msra.mxu0 0.0
        %3505 = vmatprep.subr.mxu0 0.0
        %3506 = vmatpush1.msra.mxu0 0.0
        %3507 = vmatprep.subr.mxu0 0.0
        %3508 = vmatpush1.msra.mxu0 0.0
        %3509 = vmatprep.subr.mxu0 0.0
        %3510 = vmatpush1.msra.mxu0 0.0
        %3511 = vmatprep.subr.mxu0 0.0
        %3512 = vmatpush1.msra.mxu0 0.0
        %3513 = vmatprep.mubr.f32.mxu0 0.0
        %3514 = vmatmul.mubr.f32.gmra.mrb[0].mxu0 %v3444
        %v3515 = vpop.f32.mrb[0].mxu0
        %v3516 = vadd.f32 0.0, %v3515
        %v3517 = vpop.f32.mrb[0].mxu0
        %3518 = vmatprep.mubr.f32.mxu0 0.0
        %3519 = vmatmul.mubr.f32.gmra.mrb[0].mxu0 %v3447
        %v3520 = vpop.f32.mrb[0].mxu0
        %v3521 = vadd.f32 0.0, %v3520
        %v3522 = vpop.f32.mrb[0].mxu0
        %3523 = vdwg.mxu0
        %v3524 = vadd.f32 %v522, %v3516
        %v3525 = vadd.f32 %v523, %v3521
        %v3527 = vsel %vm973, %v3437, 0
        %v3530 = vsel %vm973, %v3440, 0
        %3532 = vmatprep.subr.mxu0 0.0
        %3533 = vmatpush1.msra.mxu0 %v530
        %3534 = vmatprep.subr.mxu0 0.0
        %3535 = vmatpush1.msra.mxu0 0.0
        %3536 = vmatprep.subr.mxu0 0.0
        %3537 = vmatpush1.msra.mxu0 0.0
        %3538 = vmatprep.subr.mxu0 0.0
        %3539 = vmatpush1.msra.mxu0 0.0
        %3540 = vmatprep.subr.mxu0 0.0
        %3541 = vmatpush1.msra.mxu0 0.0
        %3542 = vmatprep.subr.mxu0 0.0
        %3543 = vmatpush1.msra.mxu0 0.0
        %3544 = vmatprep.subr.mxu0 0.0
        %3545 = vmatpush1.msra.mxu0 0.0
        %3546 = vmatprep.subr.mxu0 0.0
        %3547 = vmatpush1.msra.mxu0 0.0
        %3548 = vmatprep.subr.mxu0 0.0
        %3549 = vmatpush1.msra.mxu0 0.0
        %3550 = vmatprep.subr.mxu0 0.0
        %3551 = vmatpush1.msra.mxu0 0.0
        %3552 = vmatprep.subr.mxu0 0.0
        %3553 = vmatpush1.msra.mxu0 0.0
        %3554 = vmatprep.subr.mxu0 0.0
        %3555 = vmatpush1.msra.mxu0 0.0
        %3556 = vmatprep.subr.mxu0 0.0
        %3557 = vmatpush1.msra.mxu0 0.0
        %3558 = vmatprep.subr.mxu0 0.0
        %3559 = vmatpush1.msra.mxu0 0.0
        %3560 = vmatprep.subr.mxu0 0.0
        %3561 = vmatpush1.msra.mxu0 0.0
        %3562 = vmatprep.subr.mxu0 0.0
        %3563 = vmatpush1.msra.mxu0 0.0
        %3564 = vmatprep.subr.mxu0 0.0
        %3565 = vmatpush1.msra.mxu0 0.0
        %3566 = vmatprep.subr.mxu0 0.0
        %3567 = vmatpush1.msra.mxu0 0.0
        %3568 = vmatprep.subr.mxu0 0.0
        %3569 = vmatpush1.msra.mxu0 0.0
        %3570 = vmatprep.subr.mxu0 0.0
        %3571 = vmatpush1.msra.mxu0 0.0
        %3572 = vmatprep.subr.mxu0 0.0
        %3573 = vmatpush1.msra.mxu0 0.0
        %3574 = vmatprep.subr.mxu0 0.0
        %3575 = vmatpush1.msra.mxu0 0.0
        %3576 = vmatprep.subr.mxu0 0.0
        %3577 = vmatpush1.msra.mxu0 0.0
        %3578 = vmatprep.subr.mxu0 0.0
        %3579 = vmatpush1.msra.mxu0 0.0
        %3580 = vmatprep.subr.mxu0 0.0
        %3581 = vmatpush1.msra.mxu0 0.0
        %3582 = vmatprep.subr.mxu0 0.0
        %3583 = vmatpush1.msra.mxu0 0.0
        %3584 = vmatprep.subr.mxu0 0.0
        %3585 = vmatpush1.msra.mxu0 0.0
        %3586 = vmatprep.subr.mxu0 0.0
        %3587 = vmatpush1.msra.mxu0 0.0
        %3588 = vmatprep.subr.mxu0 0.0
        %3589 = vmatpush1.msra.mxu0 0.0
        %3590 = vmatprep.subr.mxu0 0.0
        %3591 = vmatpush1.msra.mxu0 0.0
        %3592 = vmatprep.subr.mxu0 0.0
        %3593 = vmatpush1.msra.mxu0 0.0
        %3594 = vmatprep.subr.mxu0 0.0
        %3595 = vmatpush1.msra.mxu0 0.0
        %3596 = vmatprep.mubr.f32.mxu0 0.0
        %3597 = vmatmul.mubr.f32.gmra.mrb[0].mxu0 %v3527
        %v3598 = vpop.f32.mrb[0].mxu0
        %v3599 = vadd.f32 0.0, %v3598
        %v3600 = vpop.f32.mrb[0].mxu0
        %3601 = vmatprep.mubr.f32.mxu0 0.0
        %3602 = vmatmul.mubr.f32.gmra.mrb[0].mxu0 %v3530
        %v3603 = vpop.f32.mrb[0].mxu0
        %v3604 = vadd.f32 0.0, %v3603
        %v3605 = vpop.f32.mrb[0].mxu0
        %3606 = vdwg.mxu0
        %v3607 = vadd.f32 %v3524, %v3599
        %v3608 = vadd.f32 %v3525, %v3604
        %v3611 = vcombine.high %v3607, %v3607
        %v3613 = vunpack.c.l.s4 1966171168
        %v3614 = vunpack.c.0.s8 %v3613
        %v3615 = vlaneseq
        %v3616 = vshrl.u32 %v3615, 7
        %v3617 = vsub.s32 %v3614, %v3616
        %v3618 = vrot.slane %v3607, %v3617
        %v3620 = vunpack.c.l.s4 1966171168
        %v3621 = vunpack.c.0.s8 %v3620
        %v3622 = vlaneseq
        %v3623 = vshrl.u32 %v3622, 7
        %v3624 = vsub.s32 %v3621, %v3623
        %v3625 = vrot.slane %v3611, %v3624
        %v3626 = vcombine.high %v3618, %v3618
        %v3627 = vcombine.high %v3625, %v3625
        %v3629 = vunpack.c.l.s4 1966171168
        %v3630 = vunpack.c.0.s8 %v3629
        %v3631 = vlaneseq
        %v3632 = vshrl.u32 %v3631, 7
        %v3633 = vsub.s32 %v3630, %v3632
        %v3634 = vrot.slane %v3618, %v3633
        %v3636 = vunpack.c.l.s4 1966171168
        %v3637 = vunpack.c.0.s8 %v3636
        %v3638 = vlaneseq
        %v3639 = vshrl.u32 %v3638, 7
        %v3640 = vsub.s32 %v3637, %v3639
        %v3641 = vrot.slane %v3625, %v3640
        %v3643 = vunpack.c.l.s4 1966171168
        %v3644 = vunpack.c.0.s8 %v3643
        %v3645 = vlaneseq
        %v3646 = vshrl.u32 %v3645, 7
        %v3647 = vsub.s32 %v3644, %v3646
        %v3648 = vrot.slane %v3626, %v3647
        %v3650 = vunpack.c.l.s4 1966171168
        %v3651 = vunpack.c.0.s8 %v3650
        %v3652 = vlaneseq
        %v3653 = vshrl.u32 %v3652, 7
        %v3654 = vsub.s32 %v3651, %v3653
        %v3655 = vrot.slane %v3627, %v3654
        %v3656 = vcombine.high %v3634, %v3634
        %v3657 = vcombine.high %v3641, %v3641
        %v3658 = vcombine.high %v3648, %v3648
        %v3659 = vcombine.high %v3655, %v3655
        %v3660 = vcombine.high %v3608, %v3608
        %v3662 = vunpack.c.l.s4 1966171168
        %v3663 = vunpack.c.0.s8 %v3662
        %v3664 = vlaneseq
        %v3665 = vshrl.u32 %v3664, 7
        %v3666 = vsub.s32 %v3663, %v3665
        %v3667 = vrot.slane %v3608, %v3666
        %v3669 = vunpack.c.l.s4 1966171168
        %v3670 = vunpack.c.0.s8 %v3669
        %v3671 = vlaneseq
        %v3672 = vshrl.u32 %v3671, 7
        %v3673 = vsub.s32 %v3670, %v3672
        %v3674 = vrot.slane %v3660, %v3673
        %v3675 = vcombine.high %v3667, %v3667
        %v3676 = vcombine.high %v3674, %v3674
        %v3678 = vunpack.c.l.s4 1966171168
        %v3679 = vunpack.c.0.s8 %v3678
        %v3680 = vlaneseq
        %v3681 = vshrl.u32 %v3680, 7
        %v3682 = vsub.s32 %v3679, %v3681
        %v3683 = vrot.slane %v3667, %v3682
        %v3685 = vunpack.c.l.s4 1966171168
        %v3686 = vunpack.c.0.s8 %v3685
        %v3687 = vlaneseq
        %v3688 = vshrl.u32 %v3687, 7
        %v3689 = vsub.s32 %v3686, %v3688
        %v3690 = vrot.slane %v3674, %v3689
        %v3692 = vunpack.c.l.s4 1966171168
        %v3693 = vunpack.c.0.s8 %v3692
        %v3694 = vlaneseq
        %v3695 = vshrl.u32 %v3694, 7
        %v3696 = vsub.s32 %v3693, %v3695
        %v3697 = vrot.slane %v3675, %v3696
        %v3699 = vunpack.c.l.s4 1966171168
        %v3700 = vunpack.c.0.s8 %v3699
        %v3701 = vlaneseq
        %v3702 = vshrl.u32 %v3701, 7
        %v3703 = vsub.s32 %v3700, %v3702
        %v3704 = vrot.slane %v3676, %v3703
        %v3705 = vcombine.high %v3683, %v3683
        %v3706 = vcombine.high %v3690, %v3690
        %v3707 = vcombine.high %v3697, %v3697
        %v3708 = vcombine.high %v3704, %v3704
        %3725 = vst [vmem:[%s319 + $0x4] sm:$0x1] %v3634
        %3726 = vst [vmem:[%s319 + $0xc] sm:$0x1] %v3648
        %3727 = vst [vmem:[%s319 + $0x14] sm:$0x1] %v3656
        %3728 = vst [vmem:[%s319 + $0x1c] sm:$0x1] %v3658
        %3729 = vst [vmem:[%s319 + $0x24] sm:$0x1] %v3641
        %3730 = vst [vmem:[%s319 + $0x2c] sm:$0x1] %v3655
        %3731 = vst [vmem:[%s319 + $0x34] sm:$0x1] %v3657
        %3732 = vst [vmem:[%s319 + $0x3c] sm:$0x1] %v3659
        %3733 = vst [vmem:[%s319 + $0x44] sm:$0x1] %v3683
        %3734 = vst [vmem:[%s319 + $0x4c] sm:$0x1] %v3697
        %3735 = vst [vmem:[%s319 + $0x54] sm:$0x1] %v3705
        %3736 = vst [vmem:[%s319 + $0x5c] sm:$0x1] %v3707
        %3737 = vst [vmem:[%s319 + $0x64] sm:$0x1] %v3690
        %3738 = vst [vmem:[%s319 + $0x6c] sm:$0x1] %v3704
        %3739 = vst [vmem:[%s319 + $0x74] sm:$0x1] %v3706
        %3740 = vst [vmem:[%s319 + $0x7c] sm:$0x1] %v3708
        %s3741 = scalar_lea.vmem %s325, 640
        %v3742 = vld [vmem:[%s3741] sm:$0xf]
        %v3743 = vld [vmem:[%s3741 + $0x4] sm:$0xf]
        %v3744 = vld [vmem:[%s3741 + $0x8] sm:$0xf]
        %v3745 = vld [vmem:[%s3741 + $0xc] sm:$0xf]
        %v3746 = vld [vmem:[%s3741 + $0x10] sm:$0xf]
        %v3747 = vld [vmem:[%s3741 + $0x14] sm:$0xf]
        %v3748 = vld [vmem:[%s3741 + $0x18] sm:$0xf]
        %v3749 = vld [vmem:[%s3741 + $0x1c] sm:$0xf]
        %v3750 = vld [vmem:[%s3741 + $0x20] sm:$0xf]
        %v3751 = vld [vmem:[%s3741 + $0x24] sm:$0xf]
        %v3752 = vld [vmem:[%s3741 + $0x28] sm:$0xf]
        %v3753 = vld [vmem:[%s3741 + $0x2c] sm:$0xf]
        %v3754 = vld [vmem:[%s3741 + $0x30] sm:$0xf]
        %v3755 = vld [vmem:[%s3741 + $0x34] sm:$0xf]
        %v3756 = vld [vmem:[%s3741 + $0x38] sm:$0xf]
        %v3757 = vld [vmem:[%s3741 + $0x3c] sm:$0xf]
        %v3758 = vld [vmem:[%s3741 + $0x40] sm:$0xf]
        %v3759 = vld [vmem:[%s3741 + $0x44] sm:$0xf]
        %v3760 = vld [vmem:[%s3741 + $0x48] sm:$0xf]
        %v3761 = vld [vmem:[%s3741 + $0x4c] sm:$0xf]
        %v3762 = vld [vmem:[%s3741 + $0x50] sm:$0xf]
        %v3763 = vld [vmem:[%s3741 + $0x54] sm:$0xf]
        %v3764 = vld [vmem:[%s3741 + $0x58] sm:$0xf]
        %v3765 = vld [vmem:[%s3741 + $0x5c] sm:$0xf]
        %v3766 = vld [vmem:[%s3741 + $0x60] sm:$0xf]
        %v3767 = vld [vmem:[%s3741 + $0x64] sm:$0xf]
        %v3768 = vld [vmem:[%s3741 + $0x68] sm:$0xf]
        %v3769 = vld [vmem:[%s3741 + $0x6c] sm:$0xf]
        %v3770 = vld [vmem:[%s3741 + $0x70] sm:$0xf]
        %v3771 = vld [vmem:[%s3741 + $0x74] sm:$0xf]
        %v3772 = vld [vmem:[%s3741 + $0x78] sm:$0xf]
        %v3773 = vld [vmem:[%s3741 + $0x7c] sm:$0xf]
        %v3806 = vunpack.c.l.b16 %v3742
        %v3807 = vunpack.c.l.b16 %v3743
        %v3808 = vunpack.c.l.b16 %v3744
        %v3809 = vunpack.c.l.b16 %v3745
        %v3810 = vunpack.c.l.b16 %v3746
        %v3811 = vunpack.c.l.b16 %v3747
        %v3812 = vunpack.c.l.b16 %v3748
        %v3813 = vunpack.c.l.b16 %v3749
        %v3814 = vunpack.c.l.b16 %v3750
        %v3815 = vunpack.c.l.b16 %v3751
        %v3816 = vunpack.c.l.b16 %v3752
        %v3817 = vunpack.c.l.b16 %v3753
        %v3818 = vunpack.c.l.b16 %v3754
        %v3819 = vunpack.c.l.b16 %v3755
        %v3820 = vunpack.c.l.b16 %v3756
        %v3821 = vunpack.c.l.b16 %v3757
        %v3822 = vunpack.c.l.b16 %v3758
        %v3823 = vunpack.c.l.b16 %v3759
        %v3824 = vunpack.c.l.b16 %v3760
        %v3825 = vunpack.c.l.b16 %v3761
        %v3826 = vunpack.c.l.b16 %v3762
        %v3827 = vunpack.c.l.b16 %v3763
        %v3828 = vunpack.c.l.b16 %v3764
        %v3829 = vunpack.c.l.b16 %v3765
        %v3830 = vunpack.c.l.b16 %v3766
        %v3831 = vunpack.c.l.b16 %v3767
        %v3832 = vunpack.c.l.b16 %v3768
        %v3833 = vunpack.c.l.b16 %v3769
        %v3834 = vunpack.c.l.b16 %v3770
        %v3835 = vunpack.c.l.b16 %v3771
        %v3836 = vunpack.c.l.b16 %v3772
        %v3837 = vunpack.c.l.b16 %v3773
        %v3838 = vpack.c.b16 %v3807, %v3806
        %v3839 = vpack.c.b16 %v3809, %v3808
        %v3840 = vpack.c.b16 %v3811, %v3810
        %v3841 = vpack.c.b16 %v3813, %v3812
        %v3842 = vpack.c.b16 %v3815, %v3814
        %v3843 = vpack.c.b16 %v3817, %v3816
        %v3844 = vpack.c.b16 %v3819, %v3818
        %v3845 = vpack.c.b16 %v3821, %v3820
        %v3846 = vpack.c.b16 %v3823, %v3822
        %v3847 = vpack.c.b16 %v3825, %v3824
        %v3848 = vpack.c.b16 %v3827, %v3826
        %v3849 = vpack.c.b16 %v3829, %v3828
        %v3850 = vpack.c.b16 %v3831, %v3830
        %v3851 = vpack.c.b16 %v3833, %v3832
        %v3852 = vpack.c.b16 %v3835, %v3834
        %v3853 = vpack.c.b16 %v3837, %v3836
        %3870 = vmatprep.subr.bf16.mxu0 0
        %3871 = vmatpush1.bf16.msra.mxu0 %v3838
        %3872 = vmatprep.subr.bf16.mxu0 0
        %3873 = vmatpush1.bf16.msra.mxu0 %v3839
        %3874 = vmatprep.subr.bf16.mxu0 0
        %3875 = vmatpush1.bf16.msra.mxu0 %v3840
        %3876 = vmatprep.subr.bf16.mxu0 0
        %3877 = vmatpush1.bf16.msra.mxu0 %v3841
        %3878 = vmatprep.subr.bf16.mxu0 0
        %3879 = vmatpush1.bf16.msra.mxu0 %v3842
        %3880 = vmatprep.subr.bf16.mxu0 0
        %3881 = vmatpush1.bf16.msra.mxu0 %v3843
        %3882 = vmatprep.subr.bf16.mxu0 0
        %3883 = vmatpush1.bf16.msra.mxu0 %v3844
        %3884 = vmatprep.subr.bf16.mxu0 0
        %3885 = vmatpush1.bf16.msra.mxu0 %v3845
        %3886 = vmatprep.subr.bf16.mxu0 0
        %3887 = vmatpush1.bf16.msra.mxu0 %v3846
        %3888 = vmatprep.subr.bf16.mxu0 0
        %3889 = vmatpush1.bf16.msra.mxu0 %v3847
        %3890 = vmatprep.subr.bf16.mxu0 0
        %3891 = vmatpush1.bf16.msra.mxu0 %v3848
        %3892 = vmatprep.subr.bf16.mxu0 0
        %3893 = vmatpush1.bf16.msra.mxu0 %v3849
        %3894 = vmatprep.subr.bf16.mxu0 0
        %3895 = vmatpush1.bf16.msra.mxu0 %v3850
        %3896 = vmatprep.subr.bf16.mxu0 0
        %3897 = vmatpush1.bf16.msra.mxu0 %v3851
        %3898 = vmatprep.subr.bf16.mxu0 0
        %3899 = vmatpush1.bf16.msra.mxu0 %v3852
        %3900 = vmatprep.subr.bf16.mxu0 0
        %3901 = vmatpush1.bf16.msra.mxu0 %v3853
        %3902 = vmatprep.mubr.bf16.mxu0 %v570
        %3903 = vmatmul.mubr.bf16.gmra.mrb[0].mxu0 %v569
        %v3904 = vpop.f32.mrb[0].mxu0
        %v3905 = vadd.f32 0.0, %v3904
        %v3906 = vpop.f32.mrb[0].mxu0
        %v3907 = vpop.f32.mrb[0].mxu0
        %v3908 = vadd.f32 0.0, %v3907
        %v3909 = vpop.f32.mrb[0].mxu0
        %3910 = vdwg.mxu0
        %s3911 = scalar_lea.vmem %s332, 640
        %v3912 = vld [vmem:[%s3911] sm:$0xf]
        %v3913 = vld [vmem:[%s3911 + $0x4] sm:$0xf]
        %v3914 = vld [vmem:[%s3911 + $0x8] sm:$0xf]
        %v3915 = vld [vmem:[%s3911 + $0xc] sm:$0xf]
        %v3916 = vld [vmem:[%s3911 + $0x10] sm:$0xf]
        %v3917 = vld [vmem:[%s3911 + $0x14] sm:$0xf]
        %v3918 = vld [vmem:[%s3911 + $0x18] sm:$0xf]
        %v3919 = vld [vmem:[%s3911 + $0x1c] sm:$0xf]
        %v3920 = vld [vmem:[%s3911 + $0x20] sm:$0xf]
        %v3921 = vld [vmem:[%s3911 + $0x24] sm:$0xf]
        %v3922 = vld [vmem:[%s3911 + $0x28] sm:$0xf]
        %v3923 = vld [vmem:[%s3911 + $0x2c] sm:$0xf]
        %v3924 = vld [vmem:[%s3911 + $0x30] sm:$0xf]
        %v3925 = vld [vmem:[%s3911 + $0x34] sm:$0xf]
        %v3926 = vld [vmem:[%s3911 + $0x38] sm:$0xf]
        %v3927 = vld [vmem:[%s3911 + $0x3c] sm:$0xf]
        %v3928 = vld [vmem:[%s3911 + $0x40] sm:$0xf]
        %v3929 = vld [vmem:[%s3911 + $0x44] sm:$0xf]
        %v3930 = vld [vmem:[%s3911 + $0x48] sm:$0xf]
        %v3931 = vld [vmem:[%s3911 + $0x4c] sm:$0xf]
        %v3932 = vld [vmem:[%s3911 + $0x50] sm:$0xf]
        %v3933 = vld [vmem:[%s3911 + $0x54] sm:$0xf]
        %v3934 = vld [vmem:[%s3911 + $0x58] sm:$0xf]
        %v3935 = vld [vmem:[%s3911 + $0x5c] sm:$0xf]
        %v3936 = vld [vmem:[%s3911 + $0x60] sm:$0xf]
        %v3937 = vld [vmem:[%s3911 + $0x64] sm:$0xf]
        %v3938 = vld [vmem:[%s3911 + $0x68] sm:$0xf]
        %v3939 = vld [vmem:[%s3911 + $0x6c] sm:$0xf]
        %v3940 = vld [vmem:[%s3911 + $0x70] sm:$0xf]
        %v3941 = vld [vmem:[%s3911 + $0x74] sm:$0xf]
        %v3942 = vld [vmem:[%s3911 + $0x78] sm:$0xf]
        %v3943 = vld [vmem:[%s3911 + $0x7c] sm:$0xf]
        %v3976 = vunpack.c.l.b16 %v3912
        %v3977 = vunpack.c.l.b16 %v3913
        %v3978 = vunpack.c.l.b16 %v3914
        %v3979 = vunpack.c.l.b16 %v3915
        %v3980 = vunpack.c.l.b16 %v3916
        %v3981 = vunpack.c.l.b16 %v3917
        %v3982 = vunpack.c.l.b16 %v3918
        %v3983 = vunpack.c.l.b16 %v3919
        %v3984 = vunpack.c.l.b16 %v3920
        %v3985 = vunpack.c.l.b16 %v3921
        %v3986 = vunpack.c.l.b16 %v3922
        %v3987 = vunpack.c.l.b16 %v3923
        %v3988 = vunpack.c.l.b16 %v3924
        %v3989 = vunpack.c.l.b16 %v3925
        %v3990 = vunpack.c.l.b16 %v3926
        %v3991 = vunpack.c.l.b16 %v3927
        %v3992 = vunpack.c.l.b16 %v3928
        %v3993 = vunpack.c.l.b16 %v3929
        %v3994 = vunpack.c.l.b16 %v3930
        %v3995 = vunpack.c.l.b16 %v3931
        %v3996 = vunpack.c.l.b16 %v3932
        %v3997 = vunpack.c.l.b16 %v3933
        %v3998 = vunpack.c.l.b16 %v3934
        %v3999 = vunpack.c.l.b16 %v3935
        %v4000 = vunpack.c.l.b16 %v3936
        %v4001 = vunpack.c.l.b16 %v3937
        %v4002 = vunpack.c.l.b16 %v3938
        %v4003 = vunpack.c.l.b16 %v3939
        %v4004 = vunpack.c.l.b16 %v3940
        %v4005 = vunpack.c.l.b16 %v3941
        %v4006 = vunpack.c.l.b16 %v3942
        %v4007 = vunpack.c.l.b16 %v3943
        %v4008 = vpack.c.b16 %v3977, %v3976
        %v4009 = vpack.c.b16 %v3979, %v3978
        %v4010 = vpack.c.b16 %v3981, %v3980
        %v4011 = vpack.c.b16 %v3983, %v3982
        %v4012 = vpack.c.b16 %v3985, %v3984
        %v4013 = vpack.c.b16 %v3987, %v3986
        %v4014 = vpack.c.b16 %v3989, %v3988
        %v4015 = vpack.c.b16 %v3991, %v3990
        %v4016 = vpack.c.b16 %v3993, %v3992
        %v4017 = vpack.c.b16 %v3995, %v3994
        %v4018 = vpack.c.b16 %v3997, %v3996
        %v4019 = vpack.c.b16 %v3999, %v3998
        %v4020 = vpack.c.b16 %v4001, %v4000
        %v4021 = vpack.c.b16 %v4003, %v4002
        %v4022 = vpack.c.b16 %v4005, %v4004
        %v4023 = vpack.c.b16 %v4007, %v4006
        %4040 = vmatprep.subr.bf16.mxu0 0
        %4041 = vmatpush1.bf16.msra.mxu0 %v4008
        %4042 = vmatprep.subr.bf16.mxu0 0
        %4043 = vmatpush1.bf16.msra.mxu0 %v4009
        %4044 = vmatprep.subr.bf16.mxu0 0
        %4045 = vmatpush1.bf16.msra.mxu0 %v4010
        %4046 = vmatprep.subr.bf16.mxu0 0
        %4047 = vmatpush1.bf16.msra.mxu0 %v4011
        %4048 = vmatprep.subr.bf16.mxu0 0
        %4049 = vmatpush1.bf16.msra.mxu0 %v4012
        %4050 = vmatprep.subr.bf16.mxu0 0
        %4051 = vmatpush1.bf16.msra.mxu0 %v4013
        %4052 = vmatprep.subr.bf16.mxu0 0
        %4053 = vmatpush1.bf16.msra.mxu0 %v4014
        %4054 = vmatprep.subr.bf16.mxu0 0
        %4055 = vmatpush1.bf16.msra.mxu0 %v4015
        %4056 = vmatprep.subr.bf16.mxu0 0
        %4057 = vmatpush1.bf16.msra.mxu0 %v4016
        %4058 = vmatprep.subr.bf16.mxu0 0
        %4059 = vmatpush1.bf16.msra.mxu0 %v4017
        %4060 = vmatprep.subr.bf16.mxu0 0
        %4061 = vmatpush1.bf16.msra.mxu0 %v4018
        %4062 = vmatprep.subr.bf16.mxu0 0
        %4063 = vmatpush1.bf16.msra.mxu0 %v4019
        %4064 = vmatprep.subr.bf16.mxu0 0
        %4065 = vmatpush1.bf16.msra.mxu0 %v4020
        %4066 = vmatprep.subr.bf16.mxu0 0
        %4067 = vmatpush1.bf16.msra.mxu0 %v4021
        %4068 = vmatprep.subr.bf16.mxu0 0
        %4069 = vmatpush1.bf16.msra.mxu0 %v4022
        %4070 = vmatprep.subr.bf16.mxu0 0
        %4071 = vmatpush1.bf16.msra.mxu0 %v4023
        %4072 = vmatprep.mubr.bf16.mxu0 %v749
        %4073 = vmatmul.mubr.bf16.gmra.mrb[0].mxu0 %v748
        %v4074 = vpop.f32.mrb[0].mxu0
        %v4075 = vadd.f32 0.0, %v4074
        %v4076 = vpop.f32.mrb[0].mxu0
        %v4077 = vpop.f32.mrb[0].mxu0
        %v4078 = vadd.f32 0.0, %v4077
        %v4079 = vpop.f32.mrb[0].mxu0
        %4080 = vdwg.mxu0
        %v4082 = vsel %vm889, %v3905, 0
        %v4085 = vsel %vm889, %v3908, 0
        %4087 = vmatprep.subr.mxu0 0.0
        %4088 = vmatpush1.msra.mxu0 %v528
        %4089 = vmatprep.subr.mxu0 0.0
        %4090 = vmatpush1.msra.mxu0 %v529
        %4091 = vmatprep.subr.mxu0 0.0
        %4092 = vmatpush1.msra.mxu0 0.0
        %4093 = vmatprep.subr.mxu0 0.0
        %4094 = vmatpush1.msra.mxu0 0.0
        %4095 = vmatprep.subr.mxu0 0.0
        %4096 = vmatpush1.msra.mxu0 0.0
        %4097 = vmatprep.subr.mxu0 0.0
        %4098 = vmatpush1.msra.mxu0 0.0
        %4099 = vmatprep.subr.mxu0 0.0
        %4100 = vmatpush1.msra.mxu0 0.0
        %4101 = vmatprep.subr.mxu0 0.0
        %4102 = vmatpush1.msra.mxu0 0.0
        %4103 = vmatprep.subr.mxu0 0.0
        %4104 = vmatpush1.msra.mxu0 0.0
        %4105 = vmatprep.subr.mxu0 0.0
        %4106 = vmatpush1.msra.mxu0 0.0
        %4107 = vmatprep.subr.mxu0 0.0
        %4108 = vmatpush1.msra.mxu0 0.0
        %4109 = vmatprep.subr.mxu0 0.0
        %4110 = vmatpush1.msra.mxu0 0.0
        %4111 = vmatprep.subr.mxu0 0.0
        %4112 = vmatpush1.msra.mxu0 0.0
        %4113 = vmatprep.subr.mxu0 0.0
        %4114 = vmatpush1.msra.mxu0 0.0
        %4115 = vmatprep.subr.mxu0 0.0
        %4116 = vmatpush1.msra.mxu0 0.0
        %4117 = vmatprep.subr.mxu0 0.0
        %4118 = vmatpush1.msra.mxu0 0.0
        %4119 = vmatprep.subr.mxu0 0.0
        %4120 = vmatpush1.msra.mxu0 0.0
        %4121 = vmatprep.subr.mxu0 0.0
        %4122 = vmatpush1.msra.mxu0 0.0
        %4123 = vmatprep.subr.mxu0 0.0
        %4124 = vmatpush1.msra.mxu0 0.0
        %4125 = vmatprep.subr.mxu0 0.0
        %4126 = vmatpush1.msra.mxu0 0.0
        %4127 = vmatprep.subr.mxu0 0.0
        %4128 = vmatpush1.msra.mxu0 0.0
        %4129 = vmatprep.subr.mxu0 0.0
        %4130 = vmatpush1.msra.mxu0 0.0
        %4131 = vmatprep.subr.mxu0 0.0
        %4132 = vmatpush1.msra.mxu0 0.0
        %4133 = vmatprep.subr.mxu0 0.0
        %4134 = vmatpush1.msra.mxu0 0.0
        %4135 = vmatprep.subr.mxu0 0.0
        %4136 = vmatpush1.msra.mxu0 0.0
        %4137 = vmatprep.subr.mxu0 0.0
        %4138 = vmatpush1.msra.mxu0 0.0
        %4139 = vmatprep.subr.mxu0 0.0
        %4140 = vmatpush1.msra.mxu0 0.0
        %4141 = vmatprep.subr.mxu0 0.0
        %4142 = vmatpush1.msra.mxu0 0.0
        %4143 = vmatprep.subr.mxu0 0.0
        %4144 = vmatpush1.msra.mxu0 0.0
        %4145 = vmatprep.subr.mxu0 0.0
        %4146 = vmatpush1.msra.mxu0 0.0
        %4147 = vmatprep.subr.mxu0 0.0
        %4148 = vmatpush1.msra.mxu0 0.0
        %4149 = vmatprep.subr.mxu0 0.0
        %4150 = vmatpush1.msra.mxu0 0.0
        %4151 = vmatprep.mubr.f32.mxu0 0.0
        %4152 = vmatmul.mubr.f32.gmra.mrb[0].mxu0 %v4082
        %v4153 = vpop.f32.mrb[0].mxu0
        %v4154 = vadd.f32 0.0, %v4153
        %v4155 = vpop.f32.mrb[0].mxu0
        %4156 = vmatprep.mubr.f32.mxu0 0.0
        %4157 = vmatmul.mubr.f32.gmra.mrb[0].mxu0 %v4085
        %v4158 = vpop.f32.mrb[0].mxu0
        %v4159 = vadd.f32 0.0, %v4158
        %v4160 = vpop.f32.mrb[0].mxu0
        %4161 = vdwg.mxu0
        %v4162 = vadd.f32 %v522, %v4154
        %v4163 = vadd.f32 %v523, %v4159
        %v4165 = vsel %vm973, %v4075, 0
        %v4168 = vsel %vm973, %v4078, 0
        %4170 = vmatprep.subr.mxu0 0.0
        %4171 = vmatpush1.msra.mxu0 %v530
        %4172 = vmatprep.subr.mxu0 0.0
        %4173 = vmatpush1.msra.mxu0 0.0
        %4174 = vmatprep.subr.mxu0 0.0
        %4175 = vmatpush1.msra.mxu0 0.0
        %4176 = vmatprep.subr.mxu0 0.0
        %4177 = vmatpush1.msra.mxu0 0.0
        %4178 = vmatprep.subr.mxu0 0.0
        %4179 = vmatpush1.msra.mxu0 0.0
        %4180 = vmatprep.subr.mxu0 0.0
        %4181 = vmatpush1.msra.mxu0 0.0
        %4182 = vmatprep.subr.mxu0 0.0
        %4183 = vmatpush1.msra.mxu0 0.0
        %4184 = vmatprep.subr.mxu0 0.0
        %4185 = vmatpush1.msra.mxu0 0.0
        %4186 = vmatprep.subr.mxu0 0.0
        %4187 = vmatpush1.msra.mxu0 0.0
        %4188 = vmatprep.subr.mxu0 0.0
        %4189 = vmatpush1.msra.mxu0 0.0
        %4190 = vmatprep.subr.mxu0 0.0
        %4191 = vmatpush1.msra.mxu0 0.0
        %4192 = vmatprep.subr.mxu0 0.0
        %4193 = vmatpush1.msra.mxu0 0.0
        %4194 = vmatprep.subr.mxu0 0.0
        %4195 = vmatpush1.msra.mxu0 0.0
        %4196 = vmatprep.subr.mxu0 0.0
        %4197 = vmatpush1.msra.mxu0 0.0
        %4198 = vmatprep.subr.mxu0 0.0
        %4199 = vmatpush1.msra.mxu0 0.0
        %4200 = vmatprep.subr.mxu0 0.0
        %4201 = vmatpush1.msra.mxu0 0.0
        %4202 = vmatprep.subr.mxu0 0.0
        %4203 = vmatpush1.msra.mxu0 0.0
        %4204 = vmatprep.subr.mxu0 0.0
        %4205 = vmatpush1.msra.mxu0 0.0
        %4206 = vmatprep.subr.mxu0 0.0
        %4207 = vmatpush1.msra.mxu0 0.0
        %4208 = vmatprep.subr.mxu0 0.0
        %4209 = vmatpush1.msra.mxu0 0.0
        %4210 = vmatprep.subr.mxu0 0.0
        %4211 = vmatpush1.msra.mxu0 0.0
        %4212 = vmatprep.subr.mxu0 0.0
        %4213 = vmatpush1.msra.mxu0 0.0
        %4214 = vmatprep.subr.mxu0 0.0
        %4215 = vmatpush1.msra.mxu0 0.0
        %4216 = vmatprep.subr.mxu0 0.0
        %4217 = vmatpush1.msra.mxu0 0.0
        %4218 = vmatprep.subr.mxu0 0.0
        %4219 = vmatpush1.msra.mxu0 0.0
        %4220 = vmatprep.subr.mxu0 0.0
        %4221 = vmatpush1.msra.mxu0 0.0
        %4222 = vmatprep.subr.mxu0 0.0
        %4223 = vmatpush1.msra.mxu0 0.0
        %4224 = vmatprep.subr.mxu0 0.0
        %4225 = vmatpush1.msra.mxu0 0.0
        %4226 = vmatprep.subr.mxu0 0.0
        %4227 = vmatpush1.msra.mxu0 0.0
        %4228 = vmatprep.subr.mxu0 0.0
        %4229 = vmatpush1.msra.mxu0 0.0
        %4230 = vmatprep.subr.mxu0 0.0
        %4231 = vmatpush1.msra.mxu0 0.0
        %4232 = vmatprep.subr.mxu0 0.0
        %4233 = vmatpush1.msra.mxu0 0.0
        %4234 = vmatprep.mubr.f32.mxu0 0.0
        %4235 = vmatmul.mubr.f32.gmra.mrb[0].mxu0 %v4165
        %v4236 = vpop.f32.mrb[0].mxu0
        %v4237 = vadd.f32 0.0, %v4236
        %v4238 = vpop.f32.mrb[0].mxu0
        %4239 = vmatprep.mubr.f32.mxu0 0.0
        %4240 = vmatmul.mubr.f32.gmra.mrb[0].mxu0 %v4168
        %v4241 = vpop.f32.mrb[0].mxu0
        %v4242 = vadd.f32 0.0, %v4241
        %v4243 = vpop.f32.mrb[0].mxu0
        %4244 = vdwg.mxu0
        %v4245 = vadd.f32 %v4162, %v4237
        %v4246 = vadd.f32 %v4163, %v4242
        %v4249 = vcombine.high %v4245, %v4245
        %v4251 = vunpack.c.l.s4 1966171168
        %v4252 = vunpack.c.0.s8 %v4251
        %v4253 = vlaneseq
        %v4254 = vshrl.u32 %v4253, 7
        %v4255 = vsub.s32 %v4252, %v4254
        %v4256 = vrot.slane %v4245, %v4255
        %v4258 = vunpack.c.l.s4 1966171168
        %v4259 = vunpack.c.0.s8 %v4258
        %v4260 = vlaneseq
        %v4261 = vshrl.u32 %v4260, 7
        %v4262 = vsub.s32 %v4259, %v4261
        %v4263 = vrot.slane %v4249, %v4262
        %v4264 = vcombine.high %v4256, %v4256
        %v4265 = vcombine.high %v4263, %v4263
        %v4267 = vunpack.c.l.s4 1966171168
        %v4268 = vunpack.c.0.s8 %v4267
        %v4269 = vlaneseq
        %v4270 = vshrl.u32 %v4269, 7
        %v4271 = vsub.s32 %v4268, %v4270
        %v4272 = vrot.slane %v4256, %v4271
        %v4274 = vunpack.c.l.s4 1966171168
        %v4275 = vunpack.c.0.s8 %v4274
        %v4276 = vlaneseq
        %v4277 = vshrl.u32 %v4276, 7
        %v4278 = vsub.s32 %v4275, %v4277
        %v4279 = vrot.slane %v4263, %v4278
        %v4281 = vunpack.c.l.s4 1966171168
        %v4282 = vunpack.c.0.s8 %v4281
        %v4283 = vlaneseq
        %v4284 = vshrl.u32 %v4283, 7
        %v4285 = vsub.s32 %v4282, %v4284
        %v4286 = vrot.slane %v4264, %v4285
        %v4288 = vunpack.c.l.s4 1966171168
        %v4289 = vunpack.c.0.s8 %v4288
        %v4290 = vlaneseq
        %v4291 = vshrl.u32 %v4290, 7
        %v4292 = vsub.s32 %v4289, %v4291
        %v4293 = vrot.slane %v4265, %v4292
        %v4294 = vcombine.high %v4272, %v4272
        %v4295 = vcombine.high %v4279, %v4279
        %v4296 = vcombine.high %v4286, %v4286
        %v4297 = vcombine.high %v4293, %v4293
        %v4298 = vcombine.high %v4246, %v4246
        %v4300 = vunpack.c.l.s4 1966171168
        %v4301 = vunpack.c.0.s8 %v4300
        %v4302 = vlaneseq
        %v4303 = vshrl.u32 %v4302, 7
        %v4304 = vsub.s32 %v4301, %v4303
        %v4305 = vrot.slane %v4246, %v4304
        %v4307 = vunpack.c.l.s4 1966171168
        %v4308 = vunpack.c.0.s8 %v4307
        %v4309 = vlaneseq
        %v4310 = vshrl.u32 %v4309, 7
        %v4311 = vsub.s32 %v4308, %v4310
        %v4312 = vrot.slane %v4298, %v4311
        %v4313 = vcombine.high %v4305, %v4305
        %v4314 = vcombine.high %v4312, %v4312
        %v4316 = vunpack.c.l.s4 1966171168
        %v4317 = vunpack.c.0.s8 %v4316
        %v4318 = vlaneseq
        %v4319 = vshrl.u32 %v4318, 7
        %v4320 = vsub.s32 %v4317, %v4319
        %v4321 = vrot.slane %v4305, %v4320
        %v4323 = vunpack.c.l.s4 1966171168
        %v4324 = vunpack.c.0.s8 %v4323
        %v4325 = vlaneseq
        %v4326 = vshrl.u32 %v4325, 7
        %v4327 = vsub.s32 %v4324, %v4326
        %v4328 = vrot.slane %v4312, %v4327
        %v4330 = vunpack.c.l.s4 1966171168
        %v4331 = vunpack.c.0.s8 %v4330
        %v4332 = vlaneseq
        %v4333 = vshrl.u32 %v4332, 7
        %v4334 = vsub.s32 %v4331, %v4333
        %v4335 = vrot.slane %v4313, %v4334
        %v4337 = vunpack.c.l.s4 1966171168
        %v4338 = vunpack.c.0.s8 %v4337
        %v4339 = vlaneseq
        %v4340 = vshrl.u32 %v4339, 7
        %v4341 = vsub.s32 %v4338, %v4340
        %v4342 = vrot.slane %v4314, %v4341
        %v4343 = vcombine.high %v4321, %v4321
        %v4344 = vcombine.high %v4328, %v4328
        %v4345 = vcombine.high %v4335, %v4335
        %v4346 = vcombine.high %v4342, %v4342
        %4363 = vst [vmem:[%s319 + $0x5] sm:$0x1] %v4272
        %4364 = vst [vmem:[%s319 + $0xd] sm:$0x1] %v4286
        %4365 = vst [vmem:[%s319 + $0x15] sm:$0x1] %v4294
        %4366 = vst [vmem:[%s319 + $0x1d] sm:$0x1] %v4296
        %4367 = vst [vmem:[%s319 + $0x25] sm:$0x1] %v4279
        %4368 = vst [vmem:[%s319 + $0x2d] sm:$0x1] %v4293
        %4369 = vst [vmem:[%s319 + $0x35] sm:$0x1] %v4295
        %4370 = vst [vmem:[%s319 + $0x3d] sm:$0x1] %v4297
        %4371 = vst [vmem:[%s319 + $0x45] sm:$0x1] %v4321
        %4372 = vst [vmem:[%s319 + $0x4d] sm:$0x1] %v4335
        %4373 = vst [vmem:[%s319 + $0x55] sm:$0x1] %v4343
        %4374 = vst [vmem:[%s319 + $0x5d] sm:$0x1] %v4345
        %4375 = vst [vmem:[%s319 + $0x65] sm:$0x1] %v4328
        %4376 = vst [vmem:[%s319 + $0x6d] sm:$0x1] %v4342
        %4377 = vst [vmem:[%s319 + $0x75] sm:$0x1] %v4344
        %4378 = vst [vmem:[%s319 + $0x7d] sm:$0x1] %v4346
        %s4379 = scalar_lea.vmem %s325, 768
        %v4380 = vld [vmem:[%s4379] sm:$0xf]
        %v4381 = vld [vmem:[%s4379 + $0x4] sm:$0xf]
        %v4382 = vld [vmem:[%s4379 + $0x8] sm:$0xf]
        %v4383 = vld [vmem:[%s4379 + $0xc] sm:$0xf]
        %v4384 = vld [vmem:[%s4379 + $0x10] sm:$0xf]
        %v4385 = vld [vmem:[%s4379 + $0x14] sm:$0xf]
        %v4386 = vld [vmem:[%s4379 + $0x18] sm:$0xf]
        %v4387 = vld [vmem:[%s4379 + $0x1c] sm:$0xf]
        %v4388 = vld [vmem:[%s4379 + $0x20] sm:$0xf]
        %v4389 = vld [vmem:[%s4379 + $0x24] sm:$0xf]
        %v4390 = vld [vmem:[%s4379 + $0x28] sm:$0xf]
        %v4391 = vld [vmem:[%s4379 + $0x2c] sm:$0xf]
        %v4392 = vld [vmem:[%s4379 + $0x30] sm:$0xf]
        %v4393 = vld [vmem:[%s4379 + $0x34] sm:$0xf]
        %v4394 = vld [vmem:[%s4379 + $0x38] sm:$0xf]
        %v4395 = vld [vmem:[%s4379 + $0x3c] sm:$0xf]
        %v4396 = vld [vmem:[%s4379 + $0x40] sm:$0xf]
        %v4397 = vld [vmem:[%s4379 + $0x44] sm:$0xf]
        %v4398 = vld [vmem:[%s4379 + $0x48] sm:$0xf]
        %v4399 = vld [vmem:[%s4379 + $0x4c] sm:$0xf]
        %v4400 = vld [vmem:[%s4379 + $0x50] sm:$0xf]
        %v4401 = vld [vmem:[%s4379 + $0x54] sm:$0xf]
        %v4402 = vld [vmem:[%s4379 + $0x58] sm:$0xf]
        %v4403 = vld [vmem:[%s4379 + $0x5c] sm:$0xf]
        %v4404 = vld [vmem:[%s4379 + $0x60] sm:$0xf]
        %v4405 = vld [vmem:[%s4379 + $0x64] sm:$0xf]
        %v4406 = vld [vmem:[%s4379 + $0x68] sm:$0xf]
        %v4407 = vld [vmem:[%s4379 + $0x6c] sm:$0xf]
        %v4408 = vld [vmem:[%s4379 + $0x70] sm:$0xf]
        %v4409 = vld [vmem:[%s4379 + $0x74] sm:$0xf]
        %v4410 = vld [vmem:[%s4379 + $0x78] sm:$0xf]
        %v4411 = vld [vmem:[%s4379 + $0x7c] sm:$0xf]
        %v4444 = vunpack.c.l.b16 %v4380
        %v4445 = vunpack.c.l.b16 %v4381
        %v4446 = vunpack.c.l.b16 %v4382
        %v4447 = vunpack.c.l.b16 %v4383
        %v4448 = vunpack.c.l.b16 %v4384
        %v4449 = vunpack.c.l.b16 %v4385
        %v4450 = vunpack.c.l.b16 %v4386
        %v4451 = vunpack.c.l.b16 %v4387
        %v4452 = vunpack.c.l.b16 %v4388
        %v4453 = vunpack.c.l.b16 %v4389
        %v4454 = vunpack.c.l.b16 %v4390
        %v4455 = vunpack.c.l.b16 %v4391
        %v4456 = vunpack.c.l.b16 %v4392
        %v4457 = vunpack.c.l.b16 %v4393
        %v4458 = vunpack.c.l.b16 %v4394
        %v4459 = vunpack.c.l.b16 %v4395
        %v4460 = vunpack.c.l.b16 %v4396
        %v4461 = vunpack.c.l.b16 %v4397
        %v4462 = vunpack.c.l.b16 %v4398
        %v4463 = vunpack.c.l.b16 %v4399
        %v4464 = vunpack.c.l.b16 %v4400
        %v4465 = vunpack.c.l.b16 %v4401
        %v4466 = vunpack.c.l.b16 %v4402
        %v4467 = vunpack.c.l.b16 %v4403
        %v4468 = vunpack.c.l.b16 %v4404
        %v4469 = vunpack.c.l.b16 %v4405
        %v4470 = vunpack.c.l.b16 %v4406
        %v4471 = vunpack.c.l.b16 %v4407
        %v4472 = vunpack.c.l.b16 %v4408
        %v4473 = vunpack.c.l.b16 %v4409
        %v4474 = vunpack.c.l.b16 %v4410
        %v4475 = vunpack.c.l.b16 %v4411
        %v4476 = vpack.c.b16 %v4445, %v4444
        %v4477 = vpack.c.b16 %v4447, %v4446
        %v4478 = vpack.c.b16 %v4449, %v4448
        %v4479 = vpack.c.b16 %v4451, %v4450
        %v4480 = vpack.c.b16 %v4453, %v4452
        %v4481 = vpack.c.b16 %v4455, %v4454
        %v4482 = vpack.c.b16 %v4457, %v4456
        %v4483 = vpack.c.b16 %v4459, %v4458
        %v4484 = vpack.c.b16 %v4461, %v4460
        %v4485 = vpack.c.b16 %v4463, %v4462
        %v4486 = vpack.c.b16 %v4465, %v4464
        %v4487 = vpack.c.b16 %v4467, %v4466
        %v4488 = vpack.c.b16 %v4469, %v4468
        %v4489 = vpack.c.b16 %v4471, %v4470
        %v4490 = vpack.c.b16 %v4473, %v4472
        %v4491 = vpack.c.b16 %v4475, %v4474
        %4508 = vmatprep.subr.bf16.mxu0 0
        %4509 = vmatpush1.bf16.msra.mxu0 %v4476
        %4510 = vmatprep.subr.bf16.mxu0 0
        %4511 = vmatpush1.bf16.msra.mxu0 %v4477
        %4512 = vmatprep.subr.bf16.mxu0 0
        %4513 = vmatpush1.bf16.msra.mxu0 %v4478
        %4514 = vmatprep.subr.bf16.mxu0 0
        %4515 = vmatpush1.bf16.msra.mxu0 %v4479
        %4516 = vmatprep.subr.bf16.mxu0 0
        %4517 = vmatpush1.bf16.msra.mxu0 %v4480
        %4518 = vmatprep.subr.bf16.mxu0 0
        %4519 = vmatpush1.bf16.msra.mxu0 %v4481
        %4520 = vmatprep.subr.bf16.mxu0 0
        %4521 = vmatpush1.bf16.msra.mxu0 %v4482
        %4522 = vmatprep.subr.bf16.mxu0 0
        %4523 = vmatpush1.bf16.msra.mxu0 %v4483
        %4524 = vmatprep.subr.bf16.mxu0 0
        %4525 = vmatpush1.bf16.msra.mxu0 %v4484
        %4526 = vmatprep.subr.bf16.mxu0 0
        %4527 = vmatpush1.bf16.msra.mxu0 %v4485
        %4528 = vmatprep.subr.bf16.mxu0 0
        %4529 = vmatpush1.bf16.msra.mxu0 %v4486
        %4530 = vmatprep.subr.bf16.mxu0 0
        %4531 = vmatpush1.bf16.msra.mxu0 %v4487
        %4532 = vmatprep.subr.bf16.mxu0 0
        %4533 = vmatpush1.bf16.msra.mxu0 %v4488
        %4534 = vmatprep.subr.bf16.mxu0 0
        %4535 = vmatpush1.bf16.msra.mxu0 %v4489
        %4536 = vmatprep.subr.bf16.mxu0 0
        %4537 = vmatpush1.bf16.msra.mxu0 %v4490
        %4538 = vmatprep.subr.bf16.mxu0 0
        %4539 = vmatpush1.bf16.msra.mxu0 %v4491
        %4540 = vmatprep.mubr.bf16.mxu0 %v570
        %4541 = vmatmul.mubr.bf16.gmra.mrb[0].mxu0 %v569
        %v4542 = vpop.f32.mrb[0].mxu0
        %v4543 = vadd.f32 0.0, %v4542
        %v4544 = vpop.f32.mrb[0].mxu0
        %v4545 = vpop.f32.mrb[0].mxu0
        %v4546 = vadd.f32 0.0, %v4545
        %v4547 = vpop.f32.mrb[0].mxu0
        %4548 = vdwg.mxu0
        %s4549 = scalar_lea.vmem %s332, 768
        %v4550 = vld [vmem:[%s4549] sm:$0xf]
        %v4551 = vld [vmem:[%s4549 + $0x4] sm:$0xf]
        %v4552 = vld [vmem:[%s4549 + $0x8] sm:$0xf]
        %v4553 = vld [vmem:[%s4549 + $0xc] sm:$0xf]
        %v4554 = vld [vmem:[%s4549 + $0x10] sm:$0xf]
        %v4555 = vld [vmem:[%s4549 + $0x14] sm:$0xf]
        %v4556 = vld [vmem:[%s4549 + $0x18] sm:$0xf]
        %v4557 = vld [vmem:[%s4549 + $0x1c] sm:$0xf]
        %v4558 = vld [vmem:[%s4549 + $0x20] sm:$0xf]
        %v4559 = vld [vmem:[%s4549 + $0x24] sm:$0xf]
        %v4560 = vld [vmem:[%s4549 + $0x28] sm:$0xf]
        %v4561 = vld [vmem:[%s4549 + $0x2c] sm:$0xf]
        %v4562 = vld [vmem:[%s4549 + $0x30] sm:$0xf]
        %v4563 = vld [vmem:[%s4549 + $0x34] sm:$0xf]
        %v4564 = vld [vmem:[%s4549 + $0x38] sm:$0xf]
        %v4565 = vld [vmem:[%s4549 + $0x3c] sm:$0xf]
        %v4566 = vld [vmem:[%s4549 + $0x40] sm:$0xf]
        %v4567 = vld [vmem:[%s4549 + $0x44] sm:$0xf]
        %v4568 = vld [vmem:[%s4549 + $0x48] sm:$0xf]
        %v4569 = vld [vmem:[%s4549 + $0x4c] sm:$0xf]
        %v4570 = vld [vmem:[%s4549 + $0x50] sm:$0xf]
        %v4571 = vld [vmem:[%s4549 + $0x54] sm:$0xf]
        %v4572 = vld [vmem:[%s4549 + $0x58] sm:$0xf]
        %v4573 = vld [vmem:[%s4549 + $0x5c] sm:$0xf]
        %v4574 = vld [vmem:[%s4549 + $0x60] sm:$0xf]
        %v4575 = vld [vmem:[%s4549 + $0x64] sm:$0xf]
        %v4576 = vld [vmem:[%s4549 + $0x68] sm:$0xf]
        %v4577 = vld [vmem:[%s4549 + $0x6c] sm:$0xf]
        %v4578 = vld [vmem:[%s4549 + $0x70] sm:$0xf]
        %v4579 = vld [vmem:[%s4549 + $0x74] sm:$0xf]
        %v4580 = vld [vmem:[%s4549 + $0x78] sm:$0xf]
        %v4581 = vld [vmem:[%s4549 + $0x7c] sm:$0xf]
        %v4614 = vunpack.c.l.b16 %v4550
        %v4615 = vunpack.c.l.b16 %v4551
        %v4616 = vunpack.c.l.b16 %v4552
        %v4617 = vunpack.c.l.b16 %v4553
        %v4618 = vunpack.c.l.b16 %v4554
        %v4619 = vunpack.c.l.b16 %v4555
        %v4620 = vunpack.c.l.b16 %v4556
        %v4621 = vunpack.c.l.b16 %v4557
        %v4622 = vunpack.c.l.b16 %v4558
        %v4623 = vunpack.c.l.b16 %v4559
        %v4624 = vunpack.c.l.b16 %v4560
        %v4625 = vunpack.c.l.b16 %v4561
        %v4626 = vunpack.c.l.b16 %v4562
        %v4627 = vunpack.c.l.b16 %v4563
        %v4628 = vunpack.c.l.b16 %v4564
        %v4629 = vunpack.c.l.b16 %v4565
        %v4630 = vunpack.c.l.b16 %v4566
        %v4631 = vunpack.c.l.b16 %v4567
        %v4632 = vunpack.c.l.b16 %v4568
        %v4633 = vunpack.c.l.b16 %v4569
        %v4634 = vunpack.c.l.b16 %v4570
        %v4635 = vunpack.c.l.b16 %v4571
        %v4636 = vunpack.c.l.b16 %v4572
        %v4637 = vunpack.c.l.b16 %v4573
        %v4638 = vunpack.c.l.b16 %v4574
        %v4639 = vunpack.c.l.b16 %v4575
        %v4640 = vunpack.c.l.b16 %v4576
        %v4641 = vunpack.c.l.b16 %v4577
        %v4642 = vunpack.c.l.b16 %v4578
        %v4643 = vunpack.c.l.b16 %v4579
        %v4644 = vunpack.c.l.b16 %v4580
        %v4645 = vunpack.c.l.b16 %v4581
        %v4646 = vpack.c.b16 %v4615, %v4614
        %v4647 = vpack.c.b16 %v4617, %v4616
        %v4648 = vpack.c.b16 %v4619, %v4618
        %v4649 = vpack.c.b16 %v4621, %v4620
        %v4650 = vpack.c.b16 %v4623, %v4622
        %v4651 = vpack.c.b16 %v4625, %v4624
        %v4652 = vpack.c.b16 %v4627, %v4626
        %v4653 = vpack.c.b16 %v4629, %v4628
        %v4654 = vpack.c.b16 %v4631, %v4630
        %v4655 = vpack.c.b16 %v4633, %v4632
        %v4656 = vpack.c.b16 %v4635, %v4634
        %v4657 = vpack.c.b16 %v4637, %v4636
        %v4658 = vpack.c.b16 %v4639, %v4638
        %v4659 = vpack.c.b16 %v4641, %v4640
        %v4660 = vpack.c.b16 %v4643, %v4642
        %v4661 = vpack.c.b16 %v4645, %v4644
        %4678 = vmatprep.subr.bf16.mxu0 0
        %4679 = vmatpush1.bf16.msra.mxu0 %v4646
        %4680 = vmatprep.subr.bf16.mxu0 0
        %4681 = vmatpush1.bf16.msra.mxu0 %v4647
        %4682 = vmatprep.subr.bf16.mxu0 0
        %4683 = vmatpush1.bf16.msra.mxu0 %v4648
        %4684 = vmatprep.subr.bf16.mxu0 0
        %4685 = vmatpush1.bf16.msra.mxu0 %v4649
        %4686 = vmatprep.subr.bf16.mxu0 0
        %4687 = vmatpush1.bf16.msra.mxu0 %v4650
        %4688 = vmatprep.subr.bf16.mxu0 0
        %4689 = vmatpush1.bf16.msra.mxu0 %v4651
        %4690 = vmatprep.subr.bf16.mxu0 0
        %4691 = vmatpush1.bf16.msra.mxu0 %v4652
        %4692 = vmatprep.subr.bf16.mxu0 0
        %4693 = vmatpush1.bf16.msra.mxu0 %v4653
        %4694 = vmatprep.subr.bf16.mxu0 0
        %4695 = vmatpush1.bf16.msra.mxu0 %v4654
        %4696 = vmatprep.subr.bf16.mxu0 0
        %4697 = vmatpush1.bf16.msra.mxu0 %v4655
        %4698 = vmatprep.subr.bf16.mxu0 0
        %4699 = vmatpush1.bf16.msra.mxu0 %v4656
        %4700 = vmatprep.subr.bf16.mxu0 0
        %4701 = vmatpush1.bf16.msra.mxu0 %v4657
        %4702 = vmatprep.subr.bf16.mxu0 0
        %4703 = vmatpush1.bf16.msra.mxu0 %v4658
        %4704 = vmatprep.subr.bf16.mxu0 0
        %4705 = vmatpush1.bf16.msra.mxu0 %v4659
        %4706 = vmatprep.subr.bf16.mxu0 0
        %4707 = vmatpush1.bf16.msra.mxu0 %v4660
        %4708 = vmatprep.subr.bf16.mxu0 0
        %4709 = vmatpush1.bf16.msra.mxu0 %v4661
        %4710 = vmatprep.mubr.bf16.mxu0 %v749
        %4711 = vmatmul.mubr.bf16.gmra.mrb[0].mxu0 %v748
        %v4712 = vpop.f32.mrb[0].mxu0
        %v4713 = vadd.f32 0.0, %v4712
        %v4714 = vpop.f32.mrb[0].mxu0
        %v4715 = vpop.f32.mrb[0].mxu0
        %v4716 = vadd.f32 0.0, %v4715
        %v4717 = vpop.f32.mrb[0].mxu0
        %4718 = vdwg.mxu0
        %v4720 = vsel %vm889, %v4543, 0
        %v4723 = vsel %vm889, %v4546, 0
        %4725 = vmatprep.subr.mxu0 0.0
        %4726 = vmatpush1.msra.mxu0 %v528
        %4727 = vmatprep.subr.mxu0 0.0
        %4728 = vmatpush1.msra.mxu0 %v529
        %4729 = vmatprep.subr.mxu0 0.0
        %4730 = vmatpush1.msra.mxu0 0.0
        %4731 = vmatprep.subr.mxu0 0.0
        %4732 = vmatpush1.msra.mxu0 0.0
        %4733 = vmatprep.subr.mxu0 0.0
        %4734 = vmatpush1.msra.mxu0 0.0
        %4735 = vmatprep.subr.mxu0 0.0
        %4736 = vmatpush1.msra.mxu0 0.0
        %4737 = vmatprep.subr.mxu0 0.0
        %4738 = vmatpush1.msra.mxu0 0.0
        %4739 = vmatprep.subr.mxu0 0.0
        %4740 = vmatpush1.msra.mxu0 0.0
        %4741 = vmatprep.subr.mxu0 0.0
        %4742 = vmatpush1.msra.mxu0 0.0
        %4743 = vmatprep.subr.mxu0 0.0
        %4744 = vmatpush1.msra.mxu0 0.0
        %4745 = vmatprep.subr.mxu0 0.0
        %4746 = vmatpush1.msra.mxu0 0.0
        %4747 = vmatprep.subr.mxu0 0.0
        %4748 = vmatpush1.msra.mxu0 0.0
        %4749 = vmatprep.subr.mxu0 0.0
        %4750 = vmatpush1.msra.mxu0 0.0
        %4751 = vmatprep.subr.mxu0 0.0
        %4752 = vmatpush1.msra.mxu0 0.0
        %4753 = vmatprep.subr.mxu0 0.0
        %4754 = vmatpush1.msra.mxu0 0.0
        %4755 = vmatprep.subr.mxu0 0.0
        %4756 = vmatpush1.msra.mxu0 0.0
        %4757 = vmatprep.subr.mxu0 0.0
        %4758 = vmatpush1.msra.mxu0 0.0
        %4759 = vmatprep.subr.mxu0 0.0
        %4760 = vmatpush1.msra.mxu0 0.0
        %4761 = vmatprep.subr.mxu0 0.0
        %4762 = vmatpush1.msra.mxu0 0.0
        %4763 = vmatprep.subr.mxu0 0.0
        %4764 = vmatpush1.msra.mxu0 0.0
        %4765 = vmatprep.subr.mxu0 0.0
        %4766 = vmatpush1.msra.mxu0 0.0
        %4767 = vmatprep.subr.mxu0 0.0
        %4768 = vmatpush1.msra.mxu0 0.0
        %4769 = vmatprep.subr.mxu0 0.0
        %4770 = vmatpush1.msra.mxu0 0.0
        %4771 = vmatprep.subr.mxu0 0.0
        %4772 = vmatpush1.msra.mxu0 0.0
        %4773 = vmatprep.subr.mxu0 0.0
        %4774 = vmatpush1.msra.mxu0 0.0
        %4775 = vmatprep.subr.mxu0 0.0
        %4776 = vmatpush1.msra.mxu0 0.0
        %4777 = vmatprep.subr.mxu0 0.0
        %4778 = vmatpush1.msra.mxu0 0.0
        %4779 = vmatprep.subr.mxu0 0.0
        %4780 = vmatpush1.msra.mxu0 0.0
        %4781 = vmatprep.subr.mxu0 0.0
        %4782 = vmatpush1.msra.mxu0 0.0
        %4783 = vmatprep.subr.mxu0 0.0
        %4784 = vmatpush1.msra.mxu0 0.0
        %4785 = vmatprep.subr.mxu0 0.0
        %4786 = vmatpush1.msra.mxu0 0.0
        %4787 = vmatprep.subr.mxu0 0.0
        %4788 = vmatpush1.msra.mxu0 0.0
        %4789 = vmatprep.mubr.f32.mxu0 0.0
        %4790 = vmatmul.mubr.f32.gmra.mrb[0].mxu0 %v4720
        %v4791 = vpop.f32.mrb[0].mxu0
        %v4792 = vadd.f32 0.0, %v4791
        %v4793 = vpop.f32.mrb[0].mxu0
        %4794 = vmatprep.mubr.f32.mxu0 0.0
        %4795 = vmatmul.mubr.f32.gmra.mrb[0].mxu0 %v4723
        %v4796 = vpop.f32.mrb[0].mxu0
        %v4797 = vadd.f32 0.0, %v4796
        %v4798 = vpop.f32.mrb[0].mxu0
        %4799 = vdwg.mxu0
        %v4800 = vadd.f32 %v522, %v4792
        %v4801 = vadd.f32 %v523, %v4797
        %v4803 = vsel %vm973, %v4713, 0
        %v4806 = vsel %vm973, %v4716, 0
        %4808 = vmatprep.subr.mxu0 0.0
        %4809 = vmatpush1.msra.mxu0 %v530
        %4810 = vmatprep.subr.mxu0 0.0
        %4811 = vmatpush1.msra.mxu0 0.0
        %4812 = vmatprep.subr.mxu0 0.0
        %4813 = vmatpush1.msra.mxu0 0.0
        %4814 = vmatprep.subr.mxu0 0.0
        %4815 = vmatpush1.msra.mxu0 0.0
        %4816 = vmatprep.subr.mxu0 0.0
        %4817 = vmatpush1.msra.mxu0 0.0
        %4818 = vmatprep.subr.mxu0 0.0
        %4819 = vmatpush1.msra.mxu0 0.0
        %4820 = vmatprep.subr.mxu0 0.0
        %4821 = vmatpush1.msra.mxu0 0.0
        %4822 = vmatprep.subr.mxu0 0.0
        %4823 = vmatpush1.msra.mxu0 0.0
        %4824 = vmatprep.subr.mxu0 0.0
        %4825 = vmatpush1.msra.mxu0 0.0
        %4826 = vmatprep.subr.mxu0 0.0
        %4827 = vmatpush1.msra.mxu0 0.0
        %4828 = vmatprep.subr.mxu0 0.0
        %4829 = vmatpush1.msra.mxu0 0.0
        %4830 = vmatprep.subr.mxu0 0.0
        %4831 = vmatpush1.msra.mxu0 0.0
        %4832 = vmatprep.subr.mxu0 0.0
        %4833 = vmatpush1.msra.mxu0 0.0
        %4834 = vmatprep.subr.mxu0 0.0
        %4835 = vmatpush1.msra.mxu0 0.0
        %4836 = vmatprep.subr.mxu0 0.0
        %4837 = vmatpush1.msra.mxu0 0.0
        %4838 = vmatprep.subr.mxu0 0.0
        %4839 = vmatpush1.msra.mxu0 0.0
        %4840 = vmatprep.subr.mxu0 0.0
        %4841 = vmatpush1.msra.mxu0 0.0
        %4842 = vmatprep.subr.mxu0 0.0
        %4843 = vmatpush1.msra.mxu0 0.0
        %4844 = vmatprep.subr.mxu0 0.0
        %4845 = vmatpush1.msra.mxu0 0.0
        %4846 = vmatprep.subr.mxu0 0.0
        %4847 = vmatpush1.msra.mxu0 0.0
        %4848 = vmatprep.subr.mxu0 0.0
        %4849 = vmatpush1.msra.mxu0 0.0
        %4850 = vmatprep.subr.mxu0 0.0
        %4851 = vmatpush1.msra.mxu0 0.0
        %4852 = vmatprep.subr.mxu0 0.0
        %4853 = vmatpush1.msra.mxu0 0.0
        %4854 = vmatprep.subr.mxu0 0.0
        %4855 = vmatpush1.msra.mxu0 0.0
        %4856 = vmatprep.subr.mxu0 0.0
        %4857 = vmatpush1.msra.mxu0 0.0
        %4858 = vmatprep.subr.mxu0 0.0
        %4859 = vmatpush1.msra.mxu0 0.0
        %4860 = vmatprep.subr.mxu0 0.0
        %4861 = vmatpush1.msra.mxu0 0.0
        %4862 = vmatprep.subr.mxu0 0.0
        %4863 = vmatpush1.msra.mxu0 0.0
        %4864 = vmatprep.subr.mxu0 0.0
        %4865 = vmatpush1.msra.mxu0 0.0
        %4866 = vmatprep.subr.mxu0 0.0
        %4867 = vmatpush1.msra.mxu0 0.0
        %4868 = vmatprep.subr.mxu0 0.0
        %4869 = vmatpush1.msra.mxu0 0.0
        %4870 = vmatprep.subr.mxu0 0.0
        %4871 = vmatpush1.msra.mxu0 0.0
        %4872 = vmatprep.mubr.f32.mxu0 0.0
        %4873 = vmatmul.mubr.f32.gmra.mrb[0].mxu0 %v4803
        %v4874 = vpop.f32.mrb[0].mxu0
        %v4875 = vadd.f32 0.0, %v4874
        %v4876 = vpop.f32.mrb[0].mxu0
        %4877 = vmatprep.mubr.f32.mxu0 0.0
        %4878 = vmatmul.mubr.f32.gmra.mrb[0].mxu0 %v4806
        %v4879 = vpop.f32.mrb[0].mxu0
        %v4880 = vadd.f32 0.0, %v4879
        %v4881 = vpop.f32.mrb[0].mxu0
        %4882 = vdwg.mxu0
        %v4883 = vadd.f32 %v4800, %v4875
        %v4884 = vadd.f32 %v4801, %v4880
        %v4887 = vcombine.high %v4883, %v4883
        %v4889 = vunpack.c.l.s4 1966171168
        %v4890 = vunpack.c.0.s8 %v4889
        %v4891 = vlaneseq
        %v4892 = vshrl.u32 %v4891, 7
        %v4893 = vsub.s32 %v4890, %v4892
        %v4894 = vrot.slane %v4883, %v4893
        %v4896 = vunpack.c.l.s4 1966171168
        %v4897 = vunpack.c.0.s8 %v4896
        %v4898 = vlaneseq
        %v4899 = vshrl.u32 %v4898, 7
        %v4900 = vsub.s32 %v4897, %v4899
        %v4901 = vrot.slane %v4887, %v4900
        %v4902 = vcombine.high %v4894, %v4894
        %v4903 = vcombine.high %v4901, %v4901
        %v4905 = vunpack.c.l.s4 1966171168
        %v4906 = vunpack.c.0.s8 %v4905
        %v4907 = vlaneseq
        %v4908 = vshrl.u32 %v4907, 7
        %v4909 = vsub.s32 %v4906, %v4908
        %v4910 = vrot.slane %v4894, %v4909
        %v4912 = vunpack.c.l.s4 1966171168
        %v4913 = vunpack.c.0.s8 %v4912
        %v4914 = vlaneseq
        %v4915 = vshrl.u32 %v4914, 7
        %v4916 = vsub.s32 %v4913, %v4915
        %v4917 = vrot.slane %v4901, %v4916
        %v4919 = vunpack.c.l.s4 1966171168
        %v4920 = vunpack.c.0.s8 %v4919
        %v4921 = vlaneseq
        %v4922 = vshrl.u32 %v4921, 7
        %v4923 = vsub.s32 %v4920, %v4922
        %v4924 = vrot.slane %v4902, %v4923
        %v4926 = vunpack.c.l.s4 1966171168
        %v4927 = vunpack.c.0.s8 %v4926
        %v4928 = vlaneseq
        %v4929 = vshrl.u32 %v4928, 7
        %v4930 = vsub.s32 %v4927, %v4929
        %v4931 = vrot.slane %v4903, %v4930
        %v4932 = vcombine.high %v4910, %v4910
        %v4933 = vcombine.high %v4917, %v4917
        %v4934 = vcombine.high %v4924, %v4924
        %v4935 = vcombine.high %v4931, %v4931
        %v4936 = vcombine.high %v4884, %v4884
        %v4938 = vunpack.c.l.s4 1966171168
        %v4939 = vunpack.c.0.s8 %v4938
        %v4940 = vlaneseq
        %v4941 = vshrl.u32 %v4940, 7
        %v4942 = vsub.s32 %v4939, %v4941
        %v4943 = vrot.slane %v4884, %v4942
        %v4945 = vunpack.c.l.s4 1966171168
        %v4946 = vunpack.c.0.s8 %v4945
        %v4947 = vlaneseq
        %v4948 = vshrl.u32 %v4947, 7
        %v4949 = vsub.s32 %v4946, %v4948
        %v4950 = vrot.slane %v4936, %v4949
        %v4951 = vcombine.high %v4943, %v4943
        %v4952 = vcombine.high %v4950, %v4950
        %v4954 = vunpack.c.l.s4 1966171168
        %v4955 = vunpack.c.0.s8 %v4954
        %v4956 = vlaneseq
        %v4957 = vshrl.u32 %v4956, 7
        %v4958 = vsub.s32 %v4955, %v4957
        %v4959 = vrot.slane %v4943, %v4958
        %v4961 = vunpack.c.l.s4 1966171168
        %v4962 = vunpack.c.0.s8 %v4961
        %v4963 = vlaneseq
        %v4964 = vshrl.u32 %v4963, 7
        %v4965 = vsub.s32 %v4962, %v4964
        %v4966 = vrot.slane %v4950, %v4965
        %v4968 = vunpack.c.l.s4 1966171168
        %v4969 = vunpack.c.0.s8 %v4968
        %v4970 = vlaneseq
        %v4971 = vshrl.u32 %v4970, 7
        %v4972 = vsub.s32 %v4969, %v4971
        %v4973 = vrot.slane %v4951, %v4972
        %v4975 = vunpack.c.l.s4 1966171168
        %v4976 = vunpack.c.0.s8 %v4975
        %v4977 = vlaneseq
        %v4978 = vshrl.u32 %v4977, 7
        %v4979 = vsub.s32 %v4976, %v4978
        %v4980 = vrot.slane %v4952, %v4979
        %v4981 = vcombine.high %v4959, %v4959
        %v4982 = vcombine.high %v4966, %v4966
        %v4983 = vcombine.high %v4973, %v4973
        %v4984 = vcombine.high %v4980, %v4980
        %5001 = vst [vmem:[%s319 + $0x6] sm:$0x1] %v4910
        %5002 = vst [vmem:[%s319 + $0xe] sm:$0x1] %v4924
        %5003 = vst [vmem:[%s319 + $0x16] sm:$0x1] %v4932
        %5004 = vst [vmem:[%s319 + $0x1e] sm:$0x1] %v4934
        %5005 = vst [vmem:[%s319 + $0x26] sm:$0x1] %v4917
        %5006 = vst [vmem:[%s319 + $0x2e] sm:$0x1] %v4931
        %5007 = vst [vmem:[%s319 + $0x36] sm:$0x1] %v4933
        %5008 = vst [vmem:[%s319 + $0x3e] sm:$0x1] %v4935
        %5009 = vst [vmem:[%s319 + $0x46] sm:$0x1] %v4959
        %5010 = vst [vmem:[%s319 + $0x4e] sm:$0x1] %v4973
        %5011 = vst [vmem:[%s319 + $0x56] sm:$0x1] %v4981
        %5012 = vst [vmem:[%s319 + $0x5e] sm:$0x1] %v4983
        %5013 = vst [vmem:[%s319 + $0x66] sm:$0x1] %v4966
        %5014 = vst [vmem:[%s319 + $0x6e] sm:$0x1] %v4980
        %5015 = vst [vmem:[%s319 + $0x76] sm:$0x1] %v4982
        %5016 = vst [vmem:[%s319 + $0x7e] sm:$0x1] %v4984
        %s5017 = scalar_lea.vmem %s325, 896
        %v5018 = vld [vmem:[%s5017] sm:$0xf]
        %v5019 = vld [vmem:[%s5017 + $0x4] sm:$0xf]
        %v5020 = vld [vmem:[%s5017 + $0x8] sm:$0xf]
        %v5021 = vld [vmem:[%s5017 + $0xc] sm:$0xf]
        %v5022 = vld [vmem:[%s5017 + $0x10] sm:$0xf]
        %v5023 = vld [vmem:[%s5017 + $0x14] sm:$0xf]
        %v5024 = vld [vmem:[%s5017 + $0x18] sm:$0xf]
        %v5025 = vld [vmem:[%s5017 + $0x1c] sm:$0xf]
        %v5026 = vld [vmem:[%s5017 + $0x20] sm:$0xf]
        %v5027 = vld [vmem:[%s5017 + $0x24] sm:$0xf]
        %v5028 = vld [vmem:[%s5017 + $0x28] sm:$0xf]
        %v5029 = vld [vmem:[%s5017 + $0x2c] sm:$0xf]
        %v5030 = vld [vmem:[%s5017 + $0x30] sm:$0xf]
        %v5031 = vld [vmem:[%s5017 + $0x34] sm:$0xf]
        %v5032 = vld [vmem:[%s5017 + $0x38] sm:$0xf]
        %v5033 = vld [vmem:[%s5017 + $0x3c] sm:$0xf]
        %v5034 = vld [vmem:[%s5017 + $0x40] sm:$0xf]
        %v5035 = vld [vmem:[%s5017 + $0x44] sm:$0xf]
        %v5036 = vld [vmem:[%s5017 + $0x48] sm:$0xf]
        %v5037 = vld [vmem:[%s5017 + $0x4c] sm:$0xf]
        %v5038 = vld [vmem:[%s5017 + $0x50] sm:$0xf]
        %v5039 = vld [vmem:[%s5017 + $0x54] sm:$0xf]
        %v5040 = vld [vmem:[%s5017 + $0x58] sm:$0xf]
        %v5041 = vld [vmem:[%s5017 + $0x5c] sm:$0xf]
        %v5042 = vld [vmem:[%s5017 + $0x60] sm:$0xf]
        %v5043 = vld [vmem:[%s5017 + $0x64] sm:$0xf]
        %v5044 = vld [vmem:[%s5017 + $0x68] sm:$0xf]
        %v5045 = vld [vmem:[%s5017 + $0x6c] sm:$0xf]
        %v5046 = vld [vmem:[%s5017 + $0x70] sm:$0xf]
        %v5047 = vld [vmem:[%s5017 + $0x74] sm:$0xf]
        %v5048 = vld [vmem:[%s5017 + $0x78] sm:$0xf]
        %v5049 = vld [vmem:[%s5017 + $0x7c] sm:$0xf]
        %v5082 = vunpack.c.l.b16 %v5018
        %v5083 = vunpack.c.l.b16 %v5019
        %v5084 = vunpack.c.l.b16 %v5020
        %v5085 = vunpack.c.l.b16 %v5021
        %v5086 = vunpack.c.l.b16 %v5022
        %v5087 = vunpack.c.l.b16 %v5023
        %v5088 = vunpack.c.l.b16 %v5024
        %v5089 = vunpack.c.l.b16 %v5025
        %v5090 = vunpack.c.l.b16 %v5026
        %v5091 = vunpack.c.l.b16 %v5027
        %v5092 = vunpack.c.l.b16 %v5028
        %v5093 = vunpack.c.l.b16 %v5029
        %v5094 = vunpack.c.l.b16 %v5030
        %v5095 = vunpack.c.l.b16 %v5031
        %v5096 = vunpack.c.l.b16 %v5032
        %v5097 = vunpack.c.l.b16 %v5033
        %v5098 = vunpack.c.l.b16 %v5034
        %v5099 = vunpack.c.l.b16 %v5035
        %v5100 = vunpack.c.l.b16 %v5036
        %v5101 = vunpack.c.l.b16 %v5037
        %v5102 = vunpack.c.l.b16 %v5038
        %v5103 = vunpack.c.l.b16 %v5039
        %v5104 = vunpack.c.l.b16 %v5040
        %v5105 = vunpack.c.l.b16 %v5041
        %v5106 = vunpack.c.l.b16 %v5042
        %v5107 = vunpack.c.l.b16 %v5043
        %v5108 = vunpack.c.l.b16 %v5044
        %v5109 = vunpack.c.l.b16 %v5045
        %v5110 = vunpack.c.l.b16 %v5046
        %v5111 = vunpack.c.l.b16 %v5047
        %v5112 = vunpack.c.l.b16 %v5048
        %v5113 = vunpack.c.l.b16 %v5049
        %v5114 = vpack.c.b16 %v5083, %v5082
        %v5115 = vpack.c.b16 %v5085, %v5084
        %v5116 = vpack.c.b16 %v5087, %v5086
        %v5117 = vpack.c.b16 %v5089, %v5088
        %v5118 = vpack.c.b16 %v5091, %v5090
        %v5119 = vpack.c.b16 %v5093, %v5092
        %v5120 = vpack.c.b16 %v5095, %v5094
        %v5121 = vpack.c.b16 %v5097, %v5096
        %v5122 = vpack.c.b16 %v5099, %v5098
        %v5123 = vpack.c.b16 %v5101, %v5100
        %v5124 = vpack.c.b16 %v5103, %v5102
        %v5125 = vpack.c.b16 %v5105, %v5104
        %v5126 = vpack.c.b16 %v5107, %v5106
        %v5127 = vpack.c.b16 %v5109, %v5108
        %v5128 = vpack.c.b16 %v5111, %v5110
        %v5129 = vpack.c.b16 %v5113, %v5112
        %5146 = vmatprep.subr.bf16.mxu0 0
        %5147 = vmatpush1.bf16.msra.mxu0 %v5114
        %5148 = vmatprep.subr.bf16.mxu0 0
        %5149 = vmatpush1.bf16.msra.mxu0 %v5115
        %5150 = vmatprep.subr.bf16.mxu0 0
        %5151 = vmatpush1.bf16.msra.mxu0 %v5116
        %5152 = vmatprep.subr.bf16.mxu0 0
        %5153 = vmatpush1.bf16.msra.mxu0 %v5117
        %5154 = vmatprep.subr.bf16.mxu0 0
        %5155 = vmatpush1.bf16.msra.mxu0 %v5118
        %5156 = vmatprep.subr.bf16.mxu0 0
        %5157 = vmatpush1.bf16.msra.mxu0 %v5119
        %5158 = vmatprep.subr.bf16.mxu0 0
        %5159 = vmatpush1.bf16.msra.mxu0 %v5120
        %5160 = vmatprep.subr.bf16.mxu0 0
        %5161 = vmatpush1.bf16.msra.mxu0 %v5121
        %5162 = vmatprep.subr.bf16.mxu0 0
        %5163 = vmatpush1.bf16.msra.mxu0 %v5122
        %5164 = vmatprep.subr.bf16.mxu0 0
        %5165 = vmatpush1.bf16.msra.mxu0 %v5123
        %5166 = vmatprep.subr.bf16.mxu0 0
        %5167 = vmatpush1.bf16.msra.mxu0 %v5124
        %5168 = vmatprep.subr.bf16.mxu0 0
        %5169 = vmatpush1.bf16.msra.mxu0 %v5125
        %5170 = vmatprep.subr.bf16.mxu0 0
        %5171 = vmatpush1.bf16.msra.mxu0 %v5126
        %5172 = vmatprep.subr.bf16.mxu0 0
        %5173 = vmatpush1.bf16.msra.mxu0 %v5127
        %5174 = vmatprep.subr.bf16.mxu0 0
        %5175 = vmatpush1.bf16.msra.mxu0 %v5128
        %5176 = vmatprep.subr.bf16.mxu0 0
        %5177 = vmatpush1.bf16.msra.mxu0 %v5129
        %5178 = vmatprep.mubr.bf16.mxu0 %v570
        %5179 = vmatmul.mubr.bf16.gmra.mrb[0].mxu0 %v569
        %v5180 = vpop.f32.mrb[0].mxu0
        %v5181 = vadd.f32 0.0, %v5180
        %v5182 = vpop.f32.mrb[0].mxu0
        %v5183 = vpop.f32.mrb[0].mxu0
        %v5184 = vadd.f32 0.0, %v5183
        %v5185 = vpop.f32.mrb[0].mxu0
        %5186 = vdwg.mxu0
        %s5187 = scalar_lea.vmem %s332, 896
        %v5188 = vld [vmem:[%s5187] sm:$0xf]
        %v5189 = vld [vmem:[%s5187 + $0x4] sm:$0xf]
        %v5190 = vld [vmem:[%s5187 + $0x8] sm:$0xf]
        %v5191 = vld [vmem:[%s5187 + $0xc] sm:$0xf]
        %v5192 = vld [vmem:[%s5187 + $0x10] sm:$0xf]
        %v5193 = vld [vmem:[%s5187 + $0x14] sm:$0xf]
        %v5194 = vld [vmem:[%s5187 + $0x18] sm:$0xf]
        %v5195 = vld [vmem:[%s5187 + $0x1c] sm:$0xf]
        %v5196 = vld [vmem:[%s5187 + $0x20] sm:$0xf]
        %v5197 = vld [vmem:[%s5187 + $0x24] sm:$0xf]
        %v5198 = vld [vmem:[%s5187 + $0x28] sm:$0xf]
        %v5199 = vld [vmem:[%s5187 + $0x2c] sm:$0xf]
        %v5200 = vld [vmem:[%s5187 + $0x30] sm:$0xf]
        %v5201 = vld [vmem:[%s5187 + $0x34] sm:$0xf]
        %v5202 = vld [vmem:[%s5187 + $0x38] sm:$0xf]
        %v5203 = vld [vmem:[%s5187 + $0x3c] sm:$0xf]
        %v5204 = vld [vmem:[%s5187 + $0x40] sm:$0xf]
        %v5205 = vld [vmem:[%s5187 + $0x44] sm:$0xf]
        %v5206 = vld [vmem:[%s5187 + $0x48] sm:$0xf]
        %v5207 = vld [vmem:[%s5187 + $0x4c] sm:$0xf]
        %v5208 = vld [vmem:[%s5187 + $0x50] sm:$0xf]
        %v5209 = vld [vmem:[%s5187 + $0x54] sm:$0xf]
        %v5210 = vld [vmem:[%s5187 + $0x58] sm:$0xf]
        %v5211 = vld [vmem:[%s5187 + $0x5c] sm:$0xf]
        %v5212 = vld [vmem:[%s5187 + $0x60] sm:$0xf]
        %v5213 = vld [vmem:[%s5187 + $0x64] sm:$0xf]
        %v5214 = vld [vmem:[%s5187 + $0x68] sm:$0xf]
        %v5215 = vld [vmem:[%s5187 + $0x6c] sm:$0xf]
        %v5216 = vld [vmem:[%s5187 + $0x70] sm:$0xf]
        %v5217 = vld [vmem:[%s5187 + $0x74] sm:$0xf]
        %v5218 = vld [vmem:[%s5187 + $0x78] sm:$0xf]
        %v5219 = vld [vmem:[%s5187 + $0x7c] sm:$0xf]
        %v5252 = vunpack.c.l.b16 %v5188
        %v5253 = vunpack.c.l.b16 %v5189
        %v5254 = vunpack.c.l.b16 %v5190
        %v5255 = vunpack.c.l.b16 %v5191
        %v5256 = vunpack.c.l.b16 %v5192
        %v5257 = vunpack.c.l.b16 %v5193
        %v5258 = vunpack.c.l.b16 %v5194
        %v5259 = vunpack.c.l.b16 %v5195
        %v5260 = vunpack.c.l.b16 %v5196
        %v5261 = vunpack.c.l.b16 %v5197
        %v5262 = vunpack.c.l.b16 %v5198
        %v5263 = vunpack.c.l.b16 %v5199
        %v5264 = vunpack.c.l.b16 %v5200
        %v5265 = vunpack.c.l.b16 %v5201
        %v5266 = vunpack.c.l.b16 %v5202
        %v5267 = vunpack.c.l.b16 %v5203
        %v5268 = vunpack.c.l.b16 %v5204
        %v5269 = vunpack.c.l.b16 %v5205
        %v5270 = vunpack.c.l.b16 %v5206
        %v5271 = vunpack.c.l.b16 %v5207
        %v5272 = vunpack.c.l.b16 %v5208
        %v5273 = vunpack.c.l.b16 %v5209
        %v5274 = vunpack.c.l.b16 %v5210
        %v5275 = vunpack.c.l.b16 %v5211
        %v5276 = vunpack.c.l.b16 %v5212
        %v5277 = vunpack.c.l.b16 %v5213
        %v5278 = vunpack.c.l.b16 %v5214
        %v5279 = vunpack.c.l.b16 %v5215
        %v5280 = vunpack.c.l.b16 %v5216
        %v5281 = vunpack.c.l.b16 %v5217
        %v5282 = vunpack.c.l.b16 %v5218
        %v5283 = vunpack.c.l.b16 %v5219
        %v5284 = vpack.c.b16 %v5253, %v5252
        %v5285 = vpack.c.b16 %v5255, %v5254
        %v5286 = vpack.c.b16 %v5257, %v5256
        %v5287 = vpack.c.b16 %v5259, %v5258
        %v5288 = vpack.c.b16 %v5261, %v5260
        %v5289 = vpack.c.b16 %v5263, %v5262
        %v5290 = vpack.c.b16 %v5265, %v5264
        %v5291 = vpack.c.b16 %v5267, %v5266
        %v5292 = vpack.c.b16 %v5269, %v5268
        %v5293 = vpack.c.b16 %v5271, %v5270
        %v5294 = vpack.c.b16 %v5273, %v5272
        %v5295 = vpack.c.b16 %v5275, %v5274
        %v5296 = vpack.c.b16 %v5277, %v5276
        %v5297 = vpack.c.b16 %v5279, %v5278
        %v5298 = vpack.c.b16 %v5281, %v5280
        %v5299 = vpack.c.b16 %v5283, %v5282
        %5316 = vmatprep.subr.bf16.mxu0 0
        %5317 = vmatpush1.bf16.msra.mxu0 %v5284
        %5318 = vmatprep.subr.bf16.mxu0 0
        %5319 = vmatpush1.bf16.msra.mxu0 %v5285
        %5320 = vmatprep.subr.bf16.mxu0 0
        %5321 = vmatpush1.bf16.msra.mxu0 %v5286
        %5322 = vmatprep.subr.bf16.mxu0 0
        %5323 = vmatpush1.bf16.msra.mxu0 %v5287
        %5324 = vmatprep.subr.bf16.mxu0 0
        %5325 = vmatpush1.bf16.msra.mxu0 %v5288
        %5326 = vmatprep.subr.bf16.mxu0 0
        %5327 = vmatpush1.bf16.msra.mxu0 %v5289
        %5328 = vmatprep.subr.bf16.mxu0 0
        %5329 = vmatpush1.bf16.msra.mxu0 %v5290
        %5330 = vmatprep.subr.bf16.mxu0 0
        %5331 = vmatpush1.bf16.msra.mxu0 %v5291
        %5332 = vmatprep.subr.bf16.mxu0 0
        %5333 = vmatpush1.bf16.msra.mxu0 %v5292
        %5334 = vmatprep.subr.bf16.mxu0 0
        %5335 = vmatpush1.bf16.msra.mxu0 %v5293
        %5336 = vmatprep.subr.bf16.mxu0 0
        %5337 = vmatpush1.bf16.msra.mxu0 %v5294
        %5338 = vmatprep.subr.bf16.mxu0 0
        %5339 = vmatpush1.bf16.msra.mxu0 %v5295
        %5340 = vmatprep.subr.bf16.mxu0 0
        %5341 = vmatpush1.bf16.msra.mxu0 %v5296
        %5342 = vmatprep.subr.bf16.mxu0 0
        %5343 = vmatpush1.bf16.msra.mxu0 %v5297
        %5344 = vmatprep.subr.bf16.mxu0 0
        %5345 = vmatpush1.bf16.msra.mxu0 %v5298
        %5346 = vmatprep.subr.bf16.mxu0 0
        %5347 = vmatpush1.bf16.msra.mxu0 %v5299
        %5348 = vmatprep.mubr.bf16.mxu0 %v749
        %5349 = vmatmul.mubr.bf16.gmra.mrb[0].mxu0 %v748
        %v5350 = vpop.f32.mrb[0].mxu0
        %v5351 = vadd.f32 0.0, %v5350
        %v5352 = vpop.f32.mrb[0].mxu0
        %v5353 = vpop.f32.mrb[0].mxu0
        %v5354 = vadd.f32 0.0, %v5353
        %v5355 = vpop.f32.mrb[0].mxu0
        %5356 = vdwg.mxu0
        %v5358 = vsel %vm889, %v5181, 0
        %v5361 = vsel %vm889, %v5184, 0
        %5363 = vmatprep.subr.mxu0 0.0
        %5364 = vmatpush1.msra.mxu0 %v528
        %5365 = vmatprep.subr.mxu0 0.0
        %5366 = vmatpush1.msra.mxu0 %v529
        %5367 = vmatprep.subr.mxu0 0.0
        %5368 = vmatpush1.msra.mxu0 0.0
        %5369 = vmatprep.subr.mxu0 0.0
        %5370 = vmatpush1.msra.mxu0 0.0
        %5371 = vmatprep.subr.mxu0 0.0
        %5372 = vmatpush1.msra.mxu0 0.0
        %5373 = vmatprep.subr.mxu0 0.0
        %5374 = vmatpush1.msra.mxu0 0.0
        %5375 = vmatprep.subr.mxu0 0.0
        %5376 = vmatpush1.msra.mxu0 0.0
        %5377 = vmatprep.subr.mxu0 0.0
        %5378 = vmatpush1.msra.mxu0 0.0
        %5379 = vmatprep.subr.mxu0 0.0
        %5380 = vmatpush1.msra.mxu0 0.0
        %5381 = vmatprep.subr.mxu0 0.0
        %5382 = vmatpush1.msra.mxu0 0.0
        %5383 = vmatprep.subr.mxu0 0.0
        %5384 = vmatpush1.msra.mxu0 0.0
        %5385 = vmatprep.subr.mxu0 0.0
        %5386 = vmatpush1.msra.mxu0 0.0
        %5387 = vmatprep.subr.mxu0 0.0
        %5388 = vmatpush1.msra.mxu0 0.0
        %5389 = vmatprep.subr.mxu0 0.0
        %5390 = vmatpush1.msra.mxu0 0.0
        %5391 = vmatprep.subr.mxu0 0.0
        %5392 = vmatpush1.msra.mxu0 0.0
        %5393 = vmatprep.subr.mxu0 0.0
        %5394 = vmatpush1.msra.mxu0 0.0
        %5395 = vmatprep.subr.mxu0 0.0
        %5396 = vmatpush1.msra.mxu0 0.0
        %5397 = vmatprep.subr.mxu0 0.0
        %5398 = vmatpush1.msra.mxu0 0.0
        %5399 = vmatprep.subr.mxu0 0.0
        %5400 = vmatpush1.msra.mxu0 0.0
        %5401 = vmatprep.subr.mxu0 0.0
        %5402 = vmatpush1.msra.mxu0 0.0
        %5403 = vmatprep.subr.mxu0 0.0
        %5404 = vmatpush1.msra.mxu0 0.0
        %5405 = vmatprep.subr.mxu0 0.0
        %5406 = vmatpush1.msra.mxu0 0.0
        %5407 = vmatprep.subr.mxu0 0.0
        %5408 = vmatpush1.msra.mxu0 0.0
        %5409 = vmatprep.subr.mxu0 0.0
        %5410 = vmatpush1.msra.mxu0 0.0
        %5411 = vmatprep.subr.mxu0 0.0
        %5412 = vmatpush1.msra.mxu0 0.0
        %5413 = vmatprep.subr.mxu0 0.0
        %5414 = vmatpush1.msra.mxu0 0.0
        %5415 = vmatprep.subr.mxu0 0.0
        %5416 = vmatpush1.msra.mxu0 0.0
        %5417 = vmatprep.subr.mxu0 0.0
        %5418 = vmatpush1.msra.mxu0 0.0
        %5419 = vmatprep.subr.mxu0 0.0
        %5420 = vmatpush1.msra.mxu0 0.0
        %5421 = vmatprep.subr.mxu0 0.0
        %5422 = vmatpush1.msra.mxu0 0.0
        %5423 = vmatprep.subr.mxu0 0.0
        %5424 = vmatpush1.msra.mxu0 0.0
        %5425 = vmatprep.subr.mxu0 0.0
        %5426 = vmatpush1.msra.mxu0 0.0
        %5427 = vmatprep.mubr.f32.mxu0 0.0
        %5428 = vmatmul.mubr.f32.gmra.mrb[0].mxu0 %v5358
        %v5429 = vpop.f32.mrb[0].mxu0
        %v5430 = vadd.f32 0.0, %v5429
        %v5431 = vpop.f32.mrb[0].mxu0
        %5432 = vmatprep.mubr.f32.mxu0 0.0
        %5433 = vmatmul.mubr.f32.gmra.mrb[0].mxu0 %v5361
        %v5434 = vpop.f32.mrb[0].mxu0
        %v5435 = vadd.f32 0.0, %v5434
        %v5436 = vpop.f32.mrb[0].mxu0
        %5437 = vdwg.mxu0
        %v5438 = vadd.f32 %v522, %v5430
        %v5439 = vadd.f32 %v523, %v5435
        %v5441 = vsel %vm973, %v5351, 0
        %v5444 = vsel %vm973, %v5354, 0
        %5446 = vmatprep.subr.mxu0 0.0
        %5447 = vmatpush1.msra.mxu0 %v530
        %5448 = vmatprep.subr.mxu0 0.0
        %5449 = vmatpush1.msra.mxu0 0.0
        %5450 = vmatprep.subr.mxu0 0.0
        %5451 = vmatpush1.msra.mxu0 0.0
        %5452 = vmatprep.subr.mxu0 0.0
        %5453 = vmatpush1.msra.mxu0 0.0
        %5454 = vmatprep.subr.mxu0 0.0
        %5455 = vmatpush1.msra.mxu0 0.0
        %5456 = vmatprep.subr.mxu0 0.0
        %5457 = vmatpush1.msra.mxu0 0.0
        %5458 = vmatprep.subr.mxu0 0.0
        %5459 = vmatpush1.msra.mxu0 0.0
        %5460 = vmatprep.subr.mxu0 0.0
        %5461 = vmatpush1.msra.mxu0 0.0
        %5462 = vmatprep.subr.mxu0 0.0
        %5463 = vmatpush1.msra.mxu0 0.0
        %5464 = vmatprep.subr.mxu0 0.0
        %5465 = vmatpush1.msra.mxu0 0.0
        %5466 = vmatprep.subr.mxu0 0.0
        %5467 = vmatpush1.msra.mxu0 0.0
        %5468 = vmatprep.subr.mxu0 0.0
        %5469 = vmatpush1.msra.mxu0 0.0
        %5470 = vmatprep.subr.mxu0 0.0
        %5471 = vmatpush1.msra.mxu0 0.0
        %5472 = vmatprep.subr.mxu0 0.0
        %5473 = vmatpush1.msra.mxu0 0.0
        %5474 = vmatprep.subr.mxu0 0.0
        %5475 = vmatpush1.msra.mxu0 0.0
        %5476 = vmatprep.subr.mxu0 0.0
        %5477 = vmatpush1.msra.mxu0 0.0
        %5478 = vmatprep.subr.mxu0 0.0
        %5479 = vmatpush1.msra.mxu0 0.0
        %5480 = vmatprep.subr.mxu0 0.0
        %5481 = vmatpush1.msra.mxu0 0.0
        %5482 = vmatprep.subr.mxu0 0.0
        %5483 = vmatpush1.msra.mxu0 0.0
        %5484 = vmatprep.subr.mxu0 0.0
        %5485 = vmatpush1.msra.mxu0 0.0
        %5486 = vmatprep.subr.mxu0 0.0
        %5487 = vmatpush1.msra.mxu0 0.0
        %5488 = vmatprep.subr.mxu0 0.0
        %5489 = vmatpush1.msra.mxu0 0.0
        %5490 = vmatprep.subr.mxu0 0.0
        %5491 = vmatpush1.msra.mxu0 0.0
        %5492 = vmatprep.subr.mxu0 0.0
        %5493 = vmatpush1.msra.mxu0 0.0
        %5494 = vmatprep.subr.mxu0 0.0
        %5495 = vmatpush1.msra.mxu0 0.0
        %5496 = vmatprep.subr.mxu0 0.0
        %5497 = vmatpush1.msra.mxu0 0.0
        %5498 = vmatprep.subr.mxu0 0.0
        %5499 = vmatpush1.msra.mxu0 0.0
        %5500 = vmatprep.subr.mxu0 0.0
        %5501 = vmatpush1.msra.mxu0 0.0
        %5502 = vmatprep.subr.mxu0 0.0
        %5503 = vmatpush1.msra.mxu0 0.0
        %5504 = vmatprep.subr.mxu0 0.0
        %5505 = vmatpush1.msra.mxu0 0.0
        %5506 = vmatprep.subr.mxu0 0.0
        %5507 = vmatpush1.msra.mxu0 0.0
        %5508 = vmatprep.subr.mxu0 0.0
        %5509 = vmatpush1.msra.mxu0 0.0
        %5510 = vmatprep.mubr.f32.mxu0 0.0
        %5511 = vmatmul.mubr.f32.gmra.mrb[0].mxu0 %v5441
        %v5512 = vpop.f32.mrb[0].mxu0
        %v5513 = vadd.f32 0.0, %v5512
        %v5514 = vpop.f32.mrb[0].mxu0
        %5515 = vmatprep.mubr.f32.mxu0 0.0
        %5516 = vmatmul.mubr.f32.gmra.mrb[0].mxu0 %v5444
        %v5517 = vpop.f32.mrb[0].mxu0
        %v5518 = vadd.f32 0.0, %v5517
        %v5519 = vpop.f32.mrb[0].mxu0
        %5520 = vdwg.mxu0
        %v5521 = vadd.f32 %v5438, %v5513
        %v5522 = vadd.f32 %v5439, %v5518
        %v5525 = vcombine.high %v5521, %v5521
        %v5527 = vunpack.c.l.s4 1966171168
        %v5528 = vunpack.c.0.s8 %v5527
        %v5529 = vlaneseq
        %v5530 = vshrl.u32 %v5529, 7
        %v5531 = vsub.s32 %v5528, %v5530
        %v5532 = vrot.slane %v5521, %v5531
        %v5534 = vunpack.c.l.s4 1966171168
        %v5535 = vunpack.c.0.s8 %v5534
        %v5536 = vlaneseq
        %v5537 = vshrl.u32 %v5536, 7
        %v5538 = vsub.s32 %v5535, %v5537
        %v5539 = vrot.slane %v5525, %v5538
        %v5540 = vcombine.high %v5532, %v5532
        %v5541 = vcombine.high %v5539, %v5539
        %v5543 = vunpack.c.l.s4 1966171168
        %v5544 = vunpack.c.0.s8 %v5543
        %v5545 = vlaneseq
        %v5546 = vshrl.u32 %v5545, 7
        %v5547 = vsub.s32 %v5544, %v5546
        %v5548 = vrot.slane %v5532, %v5547
        %v5550 = vunpack.c.l.s4 1966171168
        %v5551 = vunpack.c.0.s8 %v5550
        %v5552 = vlaneseq
        %v5553 = vshrl.u32 %v5552, 7
        %v5554 = vsub.s32 %v5551, %v5553
        %v5555 = vrot.slane %v5539, %v5554
        %v5557 = vunpack.c.l.s4 1966171168
        %v5558 = vunpack.c.0.s8 %v5557
        %v5559 = vlaneseq
        %v5560 = vshrl.u32 %v5559, 7
        %v5561 = vsub.s32 %v5558, %v5560
        %v5562 = vrot.slane %v5540, %v5561
        %v5564 = vunpack.c.l.s4 1966171168
        %v5565 = vunpack.c.0.s8 %v5564
        %v5566 = vlaneseq
        %v5567 = vshrl.u32 %v5566, 7
        %v5568 = vsub.s32 %v5565, %v5567
        %v5569 = vrot.slane %v5541, %v5568
        %v5570 = vcombine.high %v5548, %v5548
        %v5571 = vcombine.high %v5555, %v5555
        %v5572 = vcombine.high %v5562, %v5562
        %v5573 = vcombine.high %v5569, %v5569
        %v5574 = vcombine.high %v5522, %v5522
        %v5576 = vunpack.c.l.s4 1966171168
        %v5577 = vunpack.c.0.s8 %v5576
        %v5578 = vlaneseq
        %v5579 = vshrl.u32 %v5578, 7
        %v5580 = vsub.s32 %v5577, %v5579
        %v5581 = vrot.slane %v5522, %v5580
        %v5583 = vunpack.c.l.s4 1966171168
        %v5584 = vunpack.c.0.s8 %v5583
        %v5585 = vlaneseq
        %v5586 = vshrl.u32 %v5585, 7
        %v5587 = vsub.s32 %v5584, %v5586
        %v5588 = vrot.slane %v5574, %v5587
        %v5589 = vcombine.high %v5581, %v5581
        %v5590 = vcombine.high %v5588, %v5588
        %v5592 = vunpack.c.l.s4 1966171168
        %v5593 = vunpack.c.0.s8 %v5592
        %v5594 = vlaneseq
        %v5595 = vshrl.u32 %v5594, 7
        %v5596 = vsub.s32 %v5593, %v5595
        %v5597 = vrot.slane %v5581, %v5596
        %v5599 = vunpack.c.l.s4 1966171168
        %v5600 = vunpack.c.0.s8 %v5599
        %v5601 = vlaneseq
        %v5602 = vshrl.u32 %v5601, 7
        %v5603 = vsub.s32 %v5600, %v5602
        %v5604 = vrot.slane %v5588, %v5603
        %v5606 = vunpack.c.l.s4 1966171168
        %v5607 = vunpack.c.0.s8 %v5606
        %v5608 = vlaneseq
        %v5609 = vshrl.u32 %v5608, 7
        %v5610 = vsub.s32 %v5607, %v5609
        %v5611 = vrot.slane %v5589, %v5610
        %v5613 = vunpack.c.l.s4 1966171168
        %v5614 = vunpack.c.0.s8 %v5613
        %v5615 = vlaneseq
        %v5616 = vshrl.u32 %v5615, 7
        %v5617 = vsub.s32 %v5614, %v5616
        %v5618 = vrot.slane %v5590, %v5617
        %v5619 = vcombine.high %v5597, %v5597
        %v5620 = vcombine.high %v5604, %v5604
        %v5621 = vcombine.high %v5611, %v5611
        %v5622 = vcombine.high %v5618, %v5618
        %5639 = vst [vmem:[%s319 + $0x7] sm:$0x1] %v5548
        %5640 = vst [vmem:[%s319 + $0xf] sm:$0x1] %v5562
        %5641 = vst [vmem:[%s319 + $0x17] sm:$0x1] %v5570
        %5642 = vst [vmem:[%s319 + $0x1f] sm:$0x1] %v5572
        %5643 = vst [vmem:[%s319 + $0x27] sm:$0x1] %v5555
        %5644 = vst [vmem:[%s319 + $0x2f] sm:$0x1] %v5569
        %5645 = vst [vmem:[%s319 + $0x37] sm:$0x1] %v5571
        %5646 = vst [vmem:[%s319 + $0x3f] sm:$0x1] %v5573
        %5647 = vst [vmem:[%s319 + $0x47] sm:$0x1] %v5597
        %5648 = vst [vmem:[%s319 + $0x4f] sm:$0x1] %v5611
        %5649 = vst [vmem:[%s319 + $0x57] sm:$0x1] %v5619
        %5650 = vst [vmem:[%s319 + $0x5f] sm:$0x1] %v5621
        %5651 = vst [vmem:[%s319 + $0x67] sm:$0x1] %v5604
        %5652 = vst [vmem:[%s319 + $0x6f] sm:$0x1] %v5618
        %5653 = vst [vmem:[%s319 + $0x77] sm:$0x1] %v5620
        %5654 = vst [vmem:[%s319 + $0x7f] sm:$0x1] %v5622
        %s5655 = sand.u32 %s208, 1
        %s5656 = scalar_lea.sflag [#allocation4], %s5655
        %s5657 = sand.u32 %s208, 1
        %s5658 = smul.addr %s5657, 128
        %s5659 = scalar_lea.vmem [#allocation3], %s5658
        // Predicated region
        $region57: #{tpu_custom_call.1} parent=51 // pred_check
          %p5660 = pneg %p218
        $region58: #{tpu_custom_call.1} parent=51 // pred_check_branch
          %5662 = sbr.rel (%p5660) target = $region60
        $region59: #{tpu_custom_call.1} parent=51 // pred_region
          %s5664 = ssub.s32 2048, 2048
          %5665 = vsyncadd %s5656, %s5664
          %s5666 = smul.addr %s22, 128
          %s5667 = scalar_lea.hbm %s8, %s5666
          %s5668 = sshll.u32 %s5659, 4
          %s5669 = int_to_ptr.vmem [resolvable:$true] %s5668
          %5674 = dma.vmem_to_hbm [thread:$0]  %s5669, 2048, %s5667, %s5656, 128, 256, 8
        $region60: #{tpu_custom_call.1} parent=51 // pred_fallthru
          _
      $region52: #{tpu_custom_call.1} parent=5 // pred_fallthru
        _
      %p5675 = scmp.le.s32.totalorder 2, %s17
      // Predicated region
      $region61: #{tpu_custom_call.1} parent=5 // pred_check
        %p5676 = pneg %p5675
      $region62: #{tpu_custom_call.1} parent=5 // pred_check_branch
        %5678 = sbr.rel (%p5676) target = $region64
      $region63: #{tpu_custom_call.1} parent=5 // pred_region
        %s5679 = ssub.s32 %s17, 2
        // Predicated region
        $region65: #{tpu_custom_call.1} parent=63 // pred_check
          %p5680 = pneg %p224
        $region66: #{tpu_custom_call.1} parent=63 // pred_check_branch
          %5682 = sbr.rel (%p5680) target = $region68
        $region67: #{tpu_custom_call.1} parent=63 // pred_region
          %s5683 = sand.u32 %s209, 1
          %s5684 = scalar_lea.sflag [#allocation4], %s5683
          %s5685 = sand.u32 %s209, 1
          %s5686 = smul.addr %s5685, 128
          %s5687 = scalar_lea.vmem [#allocation3], %s5686
          %5688 = dma.done %s5684, 2048
        $region68: #{tpu_custom_call.1} parent=63 // pred_fallthru
          _
      $region64: #{tpu_custom_call.1} parent=5 // pred_fallthru
        _
    $region6: #{tpu_custom_call.1} parent=1 // loop_footer
      %s21 = sadd.s32 1, %s17
    $region7: #{tpu_custom_call.1} parent=1 // loop_footer_branch
      %16 = sbr.rel target = $region3
    $region8: #{tpu_custom_call.1} parent=1 // loop_exit
      _
    %5689 = vsyncpa [#allocation4], 1
    %s5690 = scalar_lea.sflag [#allocation4], 1
    %5691 = vsyncpa %s5690, 1

</llo_original>
